<compile_context>
chip_gen: v7x
topology: tpu7x:2x2x1
jax: 0.10.0
libtpu: 0.0.40
codegen_flags: <defaults>
</compile_context>

<pallas_src>
import functools

import jax
import jax.numpy as jnp
from jax.experimental import pallas as pl
from jax.experimental.pallas import tpu as pltpu


# ----------------------------------------------------------------------------
# Kernel 1: fc1..fc4 fused head.  ~1.5 MiB of bf16 weights, ~1.4 MFLOP.
# Single invocation (no grid), all operands resident in VMEM.  Runs ONCE per
# forward -- hoisted out of the fc5 streaming grid.
# ----------------------------------------------------------------------------
def _head_kernel(x_ref,
                 w1_ref, b1_ref, w2_ref, b2_ref,
                 w3_ref, b3_ref, w4_ref, b4_ref,
                 h_ref):
    h = x_ref[...].astype(jnp.bfloat16)
    for w_ref, b_ref in ((w1_ref, b1_ref), (w2_ref, b2_ref),
                         (w3_ref, b3_ref), (w4_ref, b4_ref)):
        h = jnp.dot(h, w_ref[...], preferred_element_type=jnp.float32) + b_ref[...]
        h = jnp.maximum(h, 0.0).astype(jnp.bfloat16)        # ReLU
    h_ref[...] = h


# ----------------------------------------------------------------------------
# Kernel 2: fc5 + tanh.  w5 is streamed tile-by-tile over the output dimension;
# each tile is a fully contiguous (1024, TN) bf16 slab (w5 pre-reshaped to
# (num_tiles, 1024, TN)).  Output stores are lane-dense (TN % 128 == 0).
# ----------------------------------------------------------------------------
def _fc5_kernel(h_ref, w5_ref, b5_ref, o_ref):
    y = jnp.dot(h_ref[...], w5_ref[0], preferred_element_type=jnp.float32)
    o_ref[...] = jnp.tanh(y + b5_ref[...])


def _choose_tile_n(out_dim, max_tile=2048):
    """Pick the fc5 output tile TN and the padded output width.

    Preference: zero padding first (padding adds real HBM bytes to the dominant
    w5 stream), then 512-multiple > 256 > 128 alignment (full MXU passes on
    v6e/v7x), then >=3 tiles (pipelining), then >=4 even tiles (v7x megacore
    balance), then the largest tile (amortize per-step overhead on v5e/v6e).
    For out_dim=6144 (num_points=2048) this picks TN=1536 -> 4 tiles.
    """
    if out_dim <= 128:
        return 128, 128
    best = None
    for tn in range(128, min(out_dim, max_tile) + 1, 128):
        padded = pl.cdiv(out_dim, tn) * tn
        nt = padded // tn
        align = 2 if tn % 512 == 0 else (1 if tn % 256 == 0 else 0)
        score = (-(padded - out_dim), align, nt >= 3, nt >= 4 and nt % 2 == 0, tn)
        if best is None or score > best[0]:
            best = (score, tn, padded)
    return best[1], best[2]


def prepare_params(params, num_points, tile_n=None):
    """ONE-TIME weight preparation.

    bf16 casts, fc5 padding, and the tile-major (num_tiles, 1024, TN) reshape of
    w5 happen here, so forward calls only stream already-prepared bytes.
    """
    out_dim = num_points * 3
    if tile_n is None:
        tile_n, padded_out = _choose_tile_n(out_dim)
    else:
        assert tile_n % 128 == 0
        padded_out = pl.cdiv(out_dim, tile_n) * tile_n
    num_tiles = padded_out // tile_n

    head_w = tuple(w.astype(jnp.bfloat16) for (w, _) in params[:4])
    head_b = tuple(b.astype(jnp.float32).reshape(1, -1) for (_, b) in params[:4])

    w5, b5 = params[4]
    w5 = w5.astype(jnp.bfloat16)
    b5 = b5.astype(jnp.float32).reshape(1, -1)
    if padded_out != out_dim:
        w5 = jnp.pad(w5, ((0, 0), (0, padded_out - out_dim)))
        b5 = jnp.pad(b5, ((0, 0), (0, padded_out - out_dim)))
    # (1024, padded_out) -> (num_tiles, 1024, TN): each grid step's tile is one
    # contiguous slab in HBM (peak-BW DMA on all generations).
    w5_tiles = jnp.transpose(w5.reshape(w5.shape[0], num_tiles, tile_n), (1, 0, 2))

    return {
        "head_w": head_w, "head_b": head_b,
        "w5_tiles": w5_tiles, "b5": b5,
        "out_dim": out_dim, "num_points": num_points,
    }


@functools.partial(jax.jit, static_argnames=("out_dim", "num_points"))
def point_decoder_forward(x, head_w, head_b, w5_tiles, b5, *, out_dim, num_points):
    """x: (B, 100) f32 -> (B, 3, num_points) f32 (matches torch .view semantics)."""
    B = x.shape[0]
    num_tiles, hidden, tile_n = w5_tiles.shape
    padded_out = num_tiles * tile_n

    # ---- stage 1: fc1..fc4 (single invocation, everything in VMEM) ----------
    head_ops = [x]
    for w, b in zip(head_w, head_b):
        head_ops += [w, b]
    h = pl.pallas_call(
        _head_kernel,
        out_shape=jax.ShapeDtypeStruct((B, hidden), jnp.bfloat16),
    )(*head_ops)

    # ---- stage 2: fc5 + tanh, streaming contiguous w5 tiles ------------------
    flops = 2 * B * hidden * padded_out
    bytes_accessed = (int(w5_tiles.size) * 2 + int(b5.size) * 4 +
                      int(h.size) * 2 + B * padded_out * 4)
    cost = pl.CostEstimate(flops=flops,
                           transcendentals=B * padded_out,
                           bytes_accessed=bytes_accessed)

    flat = pl.pallas_call(
        _fc5_kernel,
        out_shape=jax.ShapeDtypeStruct((B, padded_out), jnp.float32),
        grid=(num_tiles,),
        in_specs=[
            pl.BlockSpec((B, hidden), lambda j: (0, 0)),            # h: resident
            pl.BlockSpec((1, hidden, tile_n), lambda j: (j, 0, 0)),  # w5 tile stream
            pl.BlockSpec((1, tile_n), lambda j: (0, j)),             # b5 tile
        ],
        out_specs=pl.BlockSpec((B, tile_n), lambda j: (0, j)),       # lane-dense
        compiler_params=pltpu.CompilerParams(
            dimension_semantics=("parallel",)),   # shard w5 stream across TCs (v7x)
        cost_estimate=cost,
    )(h, w5_tiles, b5)

    if padded_out != out_dim:
        flat = flat[:, :out_dim]
    # torch: x.view(batchsize, 3, num_points) on row-major data
    return flat.reshape(B, 3, num_points)


# ----------------------------------------------------------------------------
# Parameters / references
# ----------------------------------------------------------------------------
def init_params(key, num_points):
    """Deterministic synthetic parameters. Weights stored as (in, out), f32."""
    dims = [100, 128, 256, 512, 1024, num_points * 3]
    params = []
    for i in range(5):
        key, kw, kb = jax.random.split(key, 3)
        fan_in, fan_out = dims[i], dims[i + 1]
        bound = 1.0 / (fan_in ** 0.5)  # torch.nn.Linear default init scale
        w = jax.random.uniform(kw, (fan_in, fan_out), jnp.float32, -bound, bound)
        b = jax.random.uniform(kb, (1, fan_out), jnp.float32, -bound, bound)
        params.append((w, b))
    return params


def reference_forward_f32(x, params, num_points):
    """Pure-f32 reference matching the PyTorch module."""
    h = x
    for i, (w, b) in enumerate(params):
        h = h @ w + b
        h = jnp.maximum(h, 0.0) if i < 4 else jnp.tanh(h)
    return h.reshape(x.shape[0], 3, num_points)


def reference_forward_bf16(x, params, num_points):
    """Mirror of the kernel numerics: bf16 weights/activations, f32 accumulation."""
    h = x
    for i, (w, b) in enumerate(params):
        h = jnp.dot(h.astype(jnp.bfloat16), w.astype(jnp.bfloat16),
                    preferred_element_type=jnp.float32) + b
        h = jnp.maximum(h, 0.0) if i < 4 else jnp.tanh(h)
    return h.reshape(x.shape[0], 3, num_points)


if __name__ == "__main__":
    NUM_POINTS = 256   # small stand-in for the default 2048
    BATCH = 2

    key = jax.random.PRNGKey(0)
    key, kx = jax.random.split(key)
    x = jax.random.normal(kx, (BATCH, 100), jnp.float32)
    params = init_params(key, NUM_POINTS)

    # One-time weight preparation (bf16 cast, padding, tile-major w5).
    prepared = prepare_params(params, NUM_POINTS)   # out_dim=768 -> TN=256, 3 tiles

    out = point_decoder_forward(
        x, prepared["head_w"], prepared["head_b"],
        prepared["w5_tiles"], prepared["b5"],
        out_dim=prepared["out_dim"], num_points=NUM_POINTS)
    out = jax.block_until_ready(out)
    assert out.shape == (BATCH, 3, NUM_POINTS)

    ref_bf16 = jax.block_until_ready(reference_forward_bf16(x, params, NUM_POINTS))
    ref_f32 = jax.block_until_ready(reference_forward_f32(x, params, NUM_POINTS))
    # tight check against identical-numerics reference, loose check against the
    # original f32 PyTorch semantics (bf16 weight quantization error only).
    assert jnp.allclose(out, ref_bf16, atol=1e-4, rtol=1e-4)
    assert jnp.allclose(out, ref_f32, atol=5e-2, rtol=0)

    print("KERNEL_OK")
</pallas_src>

<mosaic_0001>
module attributes {stable_mosaic.version = 11 : i64} {
  func.func @_fc5_kernel(%arg0: i32, %arg1: memref<2x1024xbf16, #tpu.memory_space<vmem>>, %arg2: memref<1x1024x256xbf16, #tpu.memory_space<vmem>>, %arg3: memref<1x256xf32, #tpu.memory_space<vmem>>, %arg4: memref<2x256xf32, #tpu.memory_space<vmem>>) attributes {dimension_semantics = [#tpu.dimension_semantics<parallel>], iteration_bounds = array<i64: 3>, scalar_prefetch = 0 : i64, scratch_operands = 0 : i64, tpu.core_type = #tpu.core_type<tc>, window_params = [{pipeline_mode = #tpu.pipeline_mode<synchronous>, transform_indices = @transform_0, window_bounds = array<i64: 2, 1024>}, {transform_indices = @transform_1, window_bounds = array<i64: 1, 1024, 256>}, {transform_indices = @transform_2, window_bounds = array<i64: 1, 256>}, {transform_indices = @transform_3, window_bounds = array<i64: 2, 256>}]} {
    %c0 = arith.constant 0 : index
    %c0_0 = arith.constant 0 : index
    %0 = vector.load %arg1[%c0, %c0_0] : memref<2x1024xbf16, #tpu.memory_space<vmem>>, vector<2x1024xbf16>
    %c0_1 = arith.constant 0 : index
    %c0_2 = arith.constant 0 : index
    %c0_3 = arith.constant 0 : index
    %1 = vector.load %arg2[%c0_1, %c0_2, %c0_3] : memref<1x1024x256xbf16, #tpu.memory_space<vmem>>, vector<1x1024x256xbf16>
    %2 = vector.shape_cast %1 : vector<1x1024x256xbf16> to vector<1024x256xbf16>
    %cst = arith.constant dense<0.000000e+00> : vector<2x256xf32>
    %3 = tpu.matmul %0, %2, %cst {dimension_numbers = #tpu.dot_dimension_numbers<[1], [0], [0], [1], [0, 0, 1, 1], [], []>} : vector<2x1024xbf16>, vector<1024x256xbf16>, vector<2x256xf32> -> vector<2x256xf32>
    %c0_4 = arith.constant 0 : index
    %c0_5 = arith.constant 0 : index
    %4 = vector.load %arg3[%c0_4, %c0_5] : memref<1x256xf32, #tpu.memory_space<vmem>>, vector<1x256xf32>
    %5 = vector.broadcast %4 : vector<1x256xf32> to vector<2x256xf32>
    %6 = arith.addf %3, %5 : vector<2x256xf32>
    %7 = math.tanh %6 : vector<2x256xf32>
    %c0_6 = arith.constant 0 : index
    %c0_7 = arith.constant 0 : index
    %8 = vector.load %arg4[%c0_6, %c0_7] : memref<2x256xf32, #tpu.memory_space<vmem>>, vector<2x256xf32>
    tpu.vector_store %arg4[%c0_6, %c0_7], %7 {strides = array<i32>} : memref<2x256xf32, #tpu.memory_space<vmem>>, vector<2x256xf32>,
    return
  }
  func.func @transform_0(%arg0: i32) -> (i32, i32) {
    %c0_i32 = arith.constant 0 : i32
    %c0_i32_0 = arith.constant 0 : i32
    %c0_i32_1 = arith.constant 0 : i32
    return %c0_i32, %c0_i32_0 : i32, i32
  }
  func.func @transform_1(%arg0: i32) -> (i32, i32, i32) {
    %c0_i32 = arith.constant 0 : i32
    %c0_i32_0 = arith.constant 0 : i32
    %c0_i32_1 = arith.constant 0 : i32
    return %arg0, %c0_i32, %c0_i32_0 : i32, i32, i32
  }
  func.func @transform_2(%arg0: i32) -> (i32, i32) {
    %c0_i32 = arith.constant 0 : i32
    %c0_i32_0 = arith.constant 0 : i32
    return %c0_i32, %arg0 : i32, i32
  }
  func.func @transform_3(%arg0: i32) -> (i32, i32) {
    %c0_i32 = arith.constant 0 : i32
    %c0_i32_0 = arith.constant 0 : i32
    return %c0_i32, %arg0 : i32, i32
  }
}

module attributes {stable_mosaic.version = 11 : i64} {
  func.func @_head_kernel(%arg0: memref<2x100xf32, #tpu.memory_space<vmem>>, %arg1: memref<100x128xbf16, #tpu.memory_space<vmem>>, %arg2: memref<1x128xf32, #tpu.memory_space<vmem>>, %arg3: memref<128x256xbf16, #tpu.memory_space<vmem>>, %arg4: memref<1x256xf32, #tpu.memory_space<vmem>>, %arg5: memref<256x512xbf16, #tpu.memory_space<vmem>>, %arg6: memref<1x512xf32, #tpu.memory_space<vmem>>, %arg7: memref<512x1024xbf16, #tpu.memory_space<vmem>>, %arg8: memref<1x1024xf32, #tpu.memory_space<vmem>>, %arg9: memref<2x1024xbf16, #tpu.memory_space<vmem>>) attributes {dimension_semantics = [], scalar_prefetch = 0 : i64, scratch_operands = 0 : i64, tpu.core_type = #tpu.core_type<tc>} {
    %c0 = arith.constant 0 : index
    %c0_0 = arith.constant 0 : index
    %0 = vector.load %arg0[%c0, %c0_0] : memref<2x100xf32, #tpu.memory_space<vmem>>, vector<2x100xf32>
    %1 = arith.truncf %0 : vector<2x100xf32> to vector<2x100xbf16>
    %c0_1 = arith.constant 0 : index
    %c0_2 = arith.constant 0 : index
    %2 = vector.load %arg1[%c0_1, %c0_2] : memref<100x128xbf16, #tpu.memory_space<vmem>>, vector<100x128xbf16>
    %cst = arith.constant dense<0.000000e+00> : vector<2x128xf32>
    %3 = tpu.matmul %1, %2, %cst {dimension_numbers = #tpu.dot_dimension_numbers<[1], [0], [0], [1], [0, 0, 1, 1], [], []>} : vector<2x100xbf16>, vector<100x128xbf16>, vector<2x128xf32> -> vector<2x128xf32>
    %c0_3 = arith.constant 0 : index
    %c0_4 = arith.constant 0 : index
    %4 = vector.load %arg2[%c0_3, %c0_4] : memref<1x128xf32, #tpu.memory_space<vmem>>, vector<1x128xf32>
    %5 = vector.broadcast %4 : vector<1x128xf32> to vector<2x128xf32>
    %6 = arith.addf %3, %5 : vector<2x128xf32>
    %cst_5 = arith.constant 0.000000e+00 : f32
    %7 = vector.broadcast %cst_5 : f32 to vector<2x128xf32>
    %8 = arith.maximumf %6, %7 : vector<2x128xf32>
    %9 = arith.truncf %8 : vector<2x128xf32> to vector<2x128xbf16>
    %c0_6 = arith.constant 0 : index
    %c0_7 = arith.constant 0 : index
    %10 = vector.load %arg3[%c0_6, %c0_7] : memref<128x256xbf16, #tpu.memory_space<vmem>>, vector<128x256xbf16>
    %cst_8 = arith.constant dense<0.000000e+00> : vector<2x256xf32>
    %11 = tpu.matmul %9, %10, %cst_8 {dimension_numbers = #tpu.dot_dimension_numbers<[1], [0], [0], [1], [0, 0, 1, 1], [], []>} : vector<2x128xbf16>, vector<128x256xbf16>, vector<2x256xf32> -> vector<2x256xf32>
    %c0_9 = arith.constant 0 : index
    %c0_10 = arith.constant 0 : index
    %12 = vector.load %arg4[%c0_9, %c0_10] : memref<1x256xf32, #tpu.memory_space<vmem>>, vector<1x256xf32>
    %13 = vector.broadcast %12 : vector<1x256xf32> to vector<2x256xf32>
    %14 = arith.addf %11, %13 : vector<2x256xf32>
    %cst_11 = arith.constant 0.000000e+00 : f32
    %15 = vector.broadcast %cst_11 : f32 to vector<2x256xf32>
    %16 = arith.maximumf %14, %15 : vector<2x256xf32>
    %17 = arith.truncf %16 : vector<2x256xf32> to vector<2x256xbf16>
    %c0_12 = arith.constant 0 : index
    %c0_13 = arith.constant 0 : index
    %18 = vector.load %arg5[%c0_12, %c0_13] : memref<256x512xbf16, #tpu.memory_space<vmem>>, vector<256x512xbf16>
    %cst_14 = arith.constant dense<0.000000e+00> : vector<2x512xf32>
    %19 = tpu.matmul %17, %18, %cst_14 {dimension_numbers = #tpu.dot_dimension_numbers<[1], [0], [0], [1], [0, 0, 1, 1], [], []>} : vector<2x256xbf16>, vector<256x512xbf16>, vector<2x512xf32> -> vector<2x512xf32>
    %c0_15 = arith.constant 0 : index
    %c0_16 = arith.constant 0 : index
    %20 = vector.load %arg6[%c0_15, %c0_16] : memref<1x512xf32, #tpu.memory_space<vmem>>, vector<1x512xf32>
    %21 = vector.broadcast %20 : vector<1x512xf32> to vector<2x512xf32>
    %22 = arith.addf %19, %21 : vector<2x512xf32>
    %cst_17 = arith.constant 0.000000e+00 : f32
    %23 = vector.broadcast %cst_17 : f32 to vector<2x512xf32>
    %24 = arith.maximumf %22, %23 : vector<2x512xf32>
    %25 = arith.truncf %24 : vector<2x512xf32> to vector<2x512xbf16>
    %c0_18 = arith.constant 0 : index
    %c0_19 = arith.constant 0 : index
    %26 = vector.load %arg7[%c0_18, %c0_19] : memref<512x1024xbf16, #tpu.memory_space<vmem>>, vector<512x1024xbf16>
    %cst_20 = arith.constant dense<0.000000e+00> : vector<2x1024xf32>
    %27 = tpu.matmul %25, %26, %cst_20 {dimension_numbers = #tpu.dot_dimension_numbers<[1], [0], [0], [1], [0, 0, 1, 1], [], []>} : vector<2x512xbf16>, vector<512x1024xbf16>, vector<2x1024xf32> -> vector<2x1024xf32>
    %c0_21 = arith.constant 0 : index
    %c0_22 = arith.constant 0 : index
    %28 = vector.load %arg8[%c0_21, %c0_22] : memref<1x1024xf32, #tpu.memory_space<vmem>>, vector<1x1024xf32>
    %29 = vector.broadcast %28 : vector<1x1024xf32> to vector<2x1024xf32>
    %30 = arith.addf %27, %29 : vector<2x1024xf32>
    %cst_23 = arith.constant 0.000000e+00 : f32
    %31 = vector.broadcast %cst_23 : f32 to vector<2x1024xf32>
    %32 = arith.maximumf %30, %31 : vector<2x1024xf32>
    %33 = arith.truncf %32 : vector<2x1024xf32> to vector<2x1024xbf16>
    %c0_24 = arith.constant 0 : index
    %c0_25 = arith.constant 0 : index
    %34 = vector.load %arg9[%c0_24, %c0_25] : memref<2x1024xbf16, #tpu.memory_space<vmem>>, vector<2x1024xbf16>
    tpu.vector_store %arg9[%c0_24, %c0_25], %33 {strides = array<i32>} : memref<2x1024xbf16, #tpu.memory_space<vmem>>, vector<2x1024xbf16>,
    return
  }
}

</mosaic_0001>

<llo_original>
// kernel: point_decoder_forward.3
$region0: #{point_decoder_forward.3}
  #allocation0 [shape = 'u32[]', space=smem, size = 0x4, offset = 0x4, fixed_abs, tag = 'smem constant byte address 0x4 - core index']
  #allocation1 [shape = 'u32[144,128]{1,0:T(1,128)}', space=vmem, size = 0x12000, scoped, tag = 'internal scratch']
  %s0 = inlined_call_operand.vmem [shape: bf16[2,1024], index: 0, kind: input, shape index: {}]
  %s1 = inlined_call_operand.hbm [shape: bf16[3,1024,256], index: 1, kind: input, shape index: {}]
  %s2 = inlined_call_operand.hbm [shape: f32[1,768], index: 2, kind: input, shape index: {}]
  %s3 = inlined_call_operand.hbm [shape: f32[2,768], index: 3, kind: output, shape index: {}]
  %s4 = sld [smem:[#allocation0]]
  $region53: #{point_decoder_forward.3} parent=0
    _
  %s6 = ssub.s32 1, %s4
  %s7 = scalar_select 0, %s6, %s4
  $region1: #{point_decoder_forward.3} parent=0
    #allocation2 [shape = 'u8[1048576]{0}', space=vmem, size = 0x100000, scoped, tag = 'input window, operand 1']
    #allocation3 [shape = 's32[2]{0}', space=sflag, size = 0x8, scoped, tag = 'scoped memory for point_decoder_forward.3']
    #allocation4 [shape = 's32[2]{0}', space=sflag, size = 0x8, scoped, tag = 'scoped memory for point_decoder_forward.3']
    #allocation5 [shape = 'u8[2048]{0}', space=vmem, size = 0x800, scoped, tag = 'input window, operand 2']
    #allocation6 [shape = 's32[2]{0}', space=sflag, size = 0x8, scoped, tag = 'scoped memory for point_decoder_forward.3']
    #allocation7 [shape = 'u8[4096]{0}', space=vmem, size = 0x1000, scoped, tag = 'output window, operand 0']
    %8 = vsyncpa [#allocation3], 0
    %s9 = scalar_lea.sflag [#allocation3], 1
    %10 = vsyncpa %s9, 0
    %11 = vsyncpa [#allocation6], 0
    %s12 = scalar_lea.sflag [#allocation6], 1
    %13 = vsyncpa %s12, 0
    %14 = vsyncpa [#allocation4], 0
    %s15 = scalar_lea.sflag [#allocation4], 1
    %16 = vsyncpa %s15, 0
    loop: start=0, step=1, limit=5
    $region2: #{point_decoder_forward.3} parent=1 // loop_pre_header
      _
    $region3: #{point_decoder_forward.3} parent=1 // loop_header
      %s18 = sphi 0, %s22
      %p19 = scmp.ge.s32.totalorder %s18, 5
      %s26 = sphi 0, %s26
      %s28 = sphi 0, %s26
      %s29 = sphi 0, %s28
      %s43 = sphi 0, %s29
      %s49 = sphi 0, %s51
      %s52 = sphi 0, %s49
      %s53 = sphi 0, %s52
      %s69 = sphi 0, %s53
      %s75 = sphi 0, %s77
      %s78 = sphi 0, %s75
      %s79 = sphi 0, %s78
      %s95 = sphi 0, %s79
      %s101 = sphi 0, %s103
      %s104 = sphi 0, %s101
      %s105 = sphi 0, %s104
      %s121 = sphi 0, %s105
    $region4: #{point_decoder_forward.3} parent=1 // loop_header_branch
      %21 = sbr.rel (%p19) target = $region8
    $region5: #{point_decoder_forward.3} parent=1 // loop_body
      %s23 = ssub.s32 %s18, 1
      %s24 = ssub.s32 %s18, 2
      %s25 = sadd.s32 %s18, 1
      %s27 = sadd.s32 %s26, 1
      %p30 = scmp.eq.s32.totalorder %s18, 2
      %p31 = scmp.ne.s32.totalorder %s26, %s28
      %p32 = scmp.eq.s32.totalorder %s18, 0
      %p33 = por %p31, %p32
      %p34 = scmp.ne.s32.totalorder %s26, %s28
      %p35 = scmp.eq.s32.totalorder %s23, 2
      %p36 = por %p34, %p35
      %p37 = scmp.ne.s32.totalorder %s28, %s29
      %p38 = scmp.eq.s32.totalorder %s23, 0
      %p39 = por %p37, %p38
      %p40 = scmp.ne.s32.totalorder %s28, %s29
      %p41 = scmp.eq.s32.totalorder %s24, 2
      %p42 = por %p40, %p41
      %p44 = scmp.ne.s32.totalorder %s29, %s43
      %p45 = scmp.eq.s32.totalorder %s24, 0
      %p46 = por %p44, %p45
      %s47 = ssub.s32 %s18, %s25
      %p48 = scmp.eq.s32.totalorder %s47, 0
      %s50 = sadd.s32 %s49, 1
      %s51 = scalar_select %p48, %s49, %s50
      %p54 = pneg %p48
      %p55 = scmp.eq.s32.totalorder %s18, 2
      %p56 = por %p54, %p55
      %p57 = scmp.ne.s32.totalorder %s49, %s52
      %p58 = scmp.eq.s32.totalorder %s18, 0
      %p59 = por %p57, %p58
      %p60 = scmp.ne.s32.totalorder %s49, %s52
      %p61 = scmp.eq.s32.totalorder %s23, 2
      %p62 = por %p60, %p61
      %p63 = scmp.ne.s32.totalorder %s52, %s53
      %p64 = scmp.eq.s32.totalorder %s23, 0
      %p65 = por %p63, %p64
      %p66 = scmp.ne.s32.totalorder %s52, %s53
      %p67 = scmp.eq.s32.totalorder %s24, 2
      %p68 = por %p66, %p67
      %p70 = scmp.ne.s32.totalorder %s53, %s69
      %p71 = scmp.eq.s32.totalorder %s24, 0
      %p72 = por %p70, %p71
      %s73 = ssub.s32 %s18, %s25
      %p74 = scmp.eq.s32.totalorder %s73, 0
      %s76 = sadd.s32 %s75, 1
      %s77 = scalar_select %p74, %s75, %s76
      %p80 = pneg %p74
      %p81 = scmp.eq.s32.totalorder %s18, 2
      %p82 = por %p80, %p81
      %p83 = scmp.ne.s32.totalorder %s75, %s78
      %p84 = scmp.eq.s32.totalorder %s18, 0
      %p85 = por %p83, %p84
      %p86 = scmp.ne.s32.totalorder %s75, %s78
      %p87 = scmp.eq.s32.totalorder %s23, 2
      %p88 = por %p86, %p87
      %p89 = scmp.ne.s32.totalorder %s78, %s79
      %p90 = scmp.eq.s32.totalorder %s23, 0
      %p91 = por %p89, %p90
      %p92 = scmp.ne.s32.totalorder %s78, %s79
      %p93 = scmp.eq.s32.totalorder %s24, 2
      %p94 = por %p92, %p93
      %p96 = scmp.ne.s32.totalorder %s79, %s95
      %p97 = scmp.eq.s32.totalorder %s24, 0
      %p98 = por %p96, %p97
      %s99 = ssub.s32 %s18, %s25
      %p100 = scmp.eq.s32.totalorder %s99, 0
      %s102 = sadd.s32 %s101, 1
      %s103 = scalar_select %p100, %s101, %s102
      %p106 = pneg %p100
      %p107 = scmp.eq.s32.totalorder %s18, 2
      %p108 = por %p106, %p107
      %p109 = scmp.ne.s32.totalorder %s101, %s104
      %p110 = scmp.eq.s32.totalorder %s18, 0
      %p111 = por %p109, %p110
      %p112 = scmp.ne.s32.totalorder %s101, %s104
      %p113 = scmp.eq.s32.totalorder %s23, 2
      %p114 = por %p112, %p113
      %p115 = scmp.ne.s32.totalorder %s104, %s105
      %p116 = scmp.eq.s32.totalorder %s23, 0
      %p117 = por %p115, %p116
      %p118 = scmp.ne.s32.totalorder %s104, %s105
      %p119 = scmp.eq.s32.totalorder %s24, 2
      %p120 = por %p118, %p119
      %p122 = scmp.ne.s32.totalorder %s105, %s121
      %p123 = scmp.eq.s32.totalorder %s24, 0
      %p124 = por %p122, %p123
      %p125 = scmp.le.s32.totalorder 1, %s18
      %p126 = scmp.lt.s32.totalorder %s18, 4
      %p127 = pnand %p125, %p126
      %p128 = pneg %p127
      // Predicated region
      $region9: #{point_decoder_forward.3} parent=5 // pred_check
        _
      $region10: #{point_decoder_forward.3} parent=5 // pred_check_branch
        %130 = sbr.rel (%p127) target = $region12
      $region11: #{point_decoder_forward.3} parent=5 // pred_region
        %s131 = ssub.s32 %s18, 1
        // Predicated region
        $region13: #{point_decoder_forward.3} parent=11 // pred_check
          %p132 = pneg %p39
        $region14: #{point_decoder_forward.3} parent=11 // pred_check_branch
          %134 = sbr.rel (%p132) target = $region16
        $region15: #{point_decoder_forward.3} parent=11 // pred_region
          _
        $region16: #{point_decoder_forward.3} parent=11 // pred_fallthru
          _
      $region12: #{point_decoder_forward.3} parent=5 // pred_fallthru
        _
      %p135 = scmp.lt.s32.totalorder %s18, 3
      // Predicated region
      $region17: #{point_decoder_forward.3} parent=5 // pred_check
        %p136 = pneg %p135
      $region18: #{point_decoder_forward.3} parent=5 // pred_check_branch
        %138 = sbr.rel (%p136) target = $region20
      $region19: #{point_decoder_forward.3} parent=5 // pred_region
        // Predicated region
        $region21: #{point_decoder_forward.3} parent=19 // pred_check
          %p139 = pneg %p59
        $region22: #{point_decoder_forward.3} parent=19 // pred_check_branch
          %141 = sbr.rel (%p139) target = $region24
        $region23: #{point_decoder_forward.3} parent=19 // pred_region
          %s142 = sand.u32 %s49, 1
          %s143 = scalar_lea.sflag [#allocation3], %s142
          %s144 = sand.u32 %s49, 1
          %s145 = smul.addr %s144, 1024
          %s146 = scalar_lea.vmem [#allocation2], %s145
          %s148 = ssub.s32 16384, 16384
          %149 = vsyncadd %s143, %s148
          %s150 = smul.addr %s18, 256
          %s151 = smul.addr %s150, 64
          %s152 = scalar_lea.hbm %s1, %s151
          %s153 = sshll.u32 %s146, 4
          %s154 = int_to_ptr.vmem [resolvable:$true] %s153
          %159 = dma.hbm_to_vmem [thread:$0]  %s152, 16384, %s154, %s143, 128, 128, 8
        $region24: #{point_decoder_forward.3} parent=19 // pred_fallthru
          _
        // Predicated region
        $region25: #{point_decoder_forward.3} parent=19 // pred_check
          %p160 = pneg %p85
        $region26: #{point_decoder_forward.3} parent=19 // pred_check_branch
          %162 = sbr.rel (%p160) target = $region28
        $region27: #{point_decoder_forward.3} parent=19 // pred_region
          %s163 = sand.u32 %s75, 1
          %s164 = scalar_lea.sflag [#allocation6], %s163
          %s165 = sand.u32 %s75, 1
          %s166 = smul.addr %s165, 2
          %s167 = scalar_lea.vmem [#allocation5], %s166
          %s168 = smul.u32 2, %s18
          %s170 = ssub.s32 32, 32
          %171 = vsyncadd %s164, %s170
          %s172 = smul.addr %s168, 16
          %s173 = scalar_lea.hbm %s2, %s172
          %s175 = sshll.u32 %s167, 4
          %s176 = int_to_ptr.vmem [resolvable:$true] %s175
          %178 = dma.hbm_to_vmem [thread:$0]  %s173, 32, %s176, %s164
        $region28: #{point_decoder_forward.3} parent=19 // pred_fallthru
          _
      $region20: #{point_decoder_forward.3} parent=5 // pred_fallthru
        _
      %p179 = scmp.le.s32.totalorder 1, %s18
      %p180 = scmp.lt.s32.totalorder %s18, 4
      %p181 = pnand %p179, %p180
      %p182 = pneg %p181
      // Predicated region
      $region29: #{point_decoder_forward.3} parent=5 // pred_check
        _
      $region30: #{point_decoder_forward.3} parent=5 // pred_check_branch
        %184 = sbr.rel (%p181) target = $region32
      $region31: #{point_decoder_forward.3} parent=5 // pred_region
        %s185 = ssub.s32 %s18, 1
        %s186 = sand.u32 %s52, 1
        %s187 = scalar_lea.sflag [#allocation3], %s186
        %s188 = sand.u32 %s52, 1
        %s189 = smul.addr %s188, 1024
        %s190 = scalar_lea.vmem [#allocation2], %s189
        // Predicated region
        $region33: #{point_decoder_forward.3} parent=31 // pred_check
          %p191 = pneg %p65
        $region34: #{point_decoder_forward.3} parent=31 // pred_check_branch
          %193 = sbr.rel (%p191) target = $region36
        $region35: #{point_decoder_forward.3} parent=31 // pred_region
          %194 = dma.done %s187, 16384
        $region36: #{point_decoder_forward.3} parent=31 // pred_fallthru
          _
        %s195 = sand.u32 %s78, 1
        %s196 = scalar_lea.sflag [#allocation6], %s195
        %s197 = sand.u32 %s78, 1
        %s198 = smul.addr %s197, 2
        %s199 = scalar_lea.vmem [#allocation5], %s198
        // Predicated region
        $region37: #{point_decoder_forward.3} parent=31 // pred_check
          %p200 = pneg %p91
        $region38: #{point_decoder_forward.3} parent=31 // pred_check_branch
          %202 = sbr.rel (%p200) target = $region40
        $region39: #{point_decoder_forward.3} parent=31 // pred_region
          %203 = dma.done %s196, 32
        $region40: #{point_decoder_forward.3} parent=31 // pred_fallthru
          _
        %p204 = pneg %p39
        %p205 = pneg %p36
        %s206 = sand.u32 %s52, 1
        %s207 = scalar_lea.sflag [#allocation3], %s206
        %s208 = sand.u32 %s52, 1
        %s209 = smul.addr %s208, 1024
        %s210 = scalar_lea.vmem [#allocation2], %s209
        %p211 = pneg %p65
        %p212 = pneg %p62
        %s213 = sand.u32 %s78, 1
        %s214 = scalar_lea.sflag [#allocation6], %s213
        %s215 = sand.u32 %s78, 1
        %s216 = smul.addr %s215, 2
        %s217 = scalar_lea.vmem [#allocation5], %s216
        %p218 = pneg %p91
        %p219 = pneg %p88
        %p220 = pneg %p117
        %p221 = pneg %p114
        %s222 = sand.u32 %s104, 1
        %s223 = scalar_lea.sflag [#allocation4], %s222
        %s224 = sand.u32 %s104, 1
        %s225 = smul.addr %s224, 4
        %s226 = scalar_lea.vmem [#allocation7], %s225
        %s227 = smul.u32 2, %s23
        %s228 = smul.u32 2, %s23
        %v229 = vld [vmem:[%s0] sm:$0xff]
        %v230 = vld [vmem:[%s190] sm:$0xff]
        %v231 = vld [vmem:[%s190 + $0x8] sm:$0xff]
        %v232 = vld [vmem:[%s190 + $0x10] sm:$0xff]
        %v233 = vld [vmem:[%s190 + $0x18] sm:$0xff]
        %v234 = vld [vmem:[%s190 + $0x20] sm:$0xff]
        %v235 = vld [vmem:[%s190 + $0x28] sm:$0xff]
        %v236 = vld [vmem:[%s190 + $0x30] sm:$0xff]
        %v237 = vld [vmem:[%s190 + $0x38] sm:$0xff]
        %v238 = vld [vmem:[%s190 + $0x40] sm:$0xff]
        %v239 = vld [vmem:[%s190 + $0x48] sm:$0xff]
        %v240 = vld [vmem:[%s190 + $0x50] sm:$0xff]
        %v241 = vld [vmem:[%s190 + $0x58] sm:$0xff]
        %v242 = vld [vmem:[%s190 + $0x60] sm:$0xff]
        %v243 = vld [vmem:[%s190 + $0x68] sm:$0xff]
        %v244 = vld [vmem:[%s190 + $0x70] sm:$0xff]
        %v245 = vld [vmem:[%s190 + $0x78] sm:$0xff]
        %v246 = vld [vmem:[%s190 + $0x80] sm:$0xff]
        %v247 = vld [vmem:[%s190 + $0x88] sm:$0xff]
        %v248 = vld [vmem:[%s190 + $0x90] sm:$0xff]
        %v249 = vld [vmem:[%s190 + $0x98] sm:$0xff]
        %v250 = vld [vmem:[%s190 + $0xa0] sm:$0xff]
        %v251 = vld [vmem:[%s190 + $0xa8] sm:$0xff]
        %v252 = vld [vmem:[%s190 + $0xb0] sm:$0xff]
        %v253 = vld [vmem:[%s190 + $0xb8] sm:$0xff]
        %v254 = vld [vmem:[%s190 + $0xc0] sm:$0xff]
        %v255 = vld [vmem:[%s190 + $0xc8] sm:$0xff]
        %v256 = vld [vmem:[%s190 + $0xd0] sm:$0xff]
        %v257 = vld [vmem:[%s190 + $0xd8] sm:$0xff]
        %v258 = vld [vmem:[%s190 + $0xe0] sm:$0xff]
        %v259 = vld [vmem:[%s190 + $0xe8] sm:$0xff]
        %v260 = vld [vmem:[%s190 + $0xf0] sm:$0xff]
        %v261 = vld [vmem:[%s190 + $0xf8] sm:$0xff]
        %v262 = vld [vmem:[%s190 + $0x100] sm:$0xff]
        %v263 = vld [vmem:[%s190 + $0x108] sm:$0xff]
        %v264 = vld [vmem:[%s190 + $0x110] sm:$0xff]
        %v265 = vld [vmem:[%s190 + $0x118] sm:$0xff]
        %v266 = vld [vmem:[%s190 + $0x120] sm:$0xff]
        %v267 = vld [vmem:[%s190 + $0x128] sm:$0xff]
        %v268 = vld [vmem:[%s190 + $0x130] sm:$0xff]
        %v269 = vld [vmem:[%s190 + $0x138] sm:$0xff]
        %v270 = vld [vmem:[%s190 + $0x140] sm:$0xff]
        %v271 = vld [vmem:[%s190 + $0x148] sm:$0xff]
        %v272 = vld [vmem:[%s190 + $0x150] sm:$0xff]
        %v273 = vld [vmem:[%s190 + $0x158] sm:$0xff]
        %v274 = vld [vmem:[%s190 + $0x160] sm:$0xff]
        %v275 = vld [vmem:[%s190 + $0x168] sm:$0xff]
        %v276 = vld [vmem:[%s190 + $0x170] sm:$0xff]
        %v277 = vld [vmem:[%s190 + $0x178] sm:$0xff]
        %v278 = vld [vmem:[%s190 + $0x180] sm:$0xff]
        %v279 = vld [vmem:[%s190 + $0x188] sm:$0xff]
        %v280 = vld [vmem:[%s190 + $0x190] sm:$0xff]
        %v281 = vld [vmem:[%s190 + $0x198] sm:$0xff]
        %v282 = vld [vmem:[%s190 + $0x1a0] sm:$0xff]
        %v283 = vld [vmem:[%s190 + $0x1a8] sm:$0xff]
        %v284 = vld [vmem:[%s190 + $0x1b0] sm:$0xff]
        %v285 = vld [vmem:[%s190 + $0x1b8] sm:$0xff]
        %v286 = vld [vmem:[%s190 + $0x1c0] sm:$0xff]
        %v287 = vld [vmem:[%s190 + $0x1c8] sm:$0xff]
        %v288 = vld [vmem:[%s190 + $0x1d0] sm:$0xff]
        %v289 = vld [vmem:[%s190 + $0x1d8] sm:$0xff]
        %v290 = vld [vmem:[%s190 + $0x1e0] sm:$0xff]
        %v291 = vld [vmem:[%s190 + $0x1e8] sm:$0xff]
        %v292 = vld [vmem:[%s190 + $0x1f0] sm:$0xff]
        %v293 = vld [vmem:[%s190 + $0x1f8] sm:$0xff]
        %v294 = vld [vmem:[%s190 + $0x200] sm:$0xff]
        %v295 = vld [vmem:[%s190 + $0x208] sm:$0xff]
        %v296 = vld [vmem:[%s190 + $0x210] sm:$0xff]
        %v297 = vld [vmem:[%s190 + $0x218] sm:$0xff]
        %v298 = vld [vmem:[%s190 + $0x220] sm:$0xff]
        %v299 = vld [vmem:[%s190 + $0x228] sm:$0xff]
        %v300 = vld [vmem:[%s190 + $0x230] sm:$0xff]
        %v301 = vld [vmem:[%s190 + $0x238] sm:$0xff]
        %v302 = vld [vmem:[%s190 + $0x240] sm:$0xff]
        %v303 = vld [vmem:[%s190 + $0x248] sm:$0xff]
        %v304 = vld [vmem:[%s190 + $0x250] sm:$0xff]
        %v305 = vld [vmem:[%s190 + $0x258] sm:$0xff]
        %v306 = vld [vmem:[%s190 + $0x260] sm:$0xff]
        %v307 = vld [vmem:[%s190 + $0x268] sm:$0xff]
        %v308 = vld [vmem:[%s190 + $0x270] sm:$0xff]
        %v309 = vld [vmem:[%s190 + $0x278] sm:$0xff]
        %v310 = vld [vmem:[%s190 + $0x280] sm:$0xff]
        %v311 = vld [vmem:[%s190 + $0x288] sm:$0xff]
        %v312 = vld [vmem:[%s190 + $0x290] sm:$0xff]
        %v313 = vld [vmem:[%s190 + $0x298] sm:$0xff]
        %v314 = vld [vmem:[%s190 + $0x2a0] sm:$0xff]
        %v315 = vld [vmem:[%s190 + $0x2a8] sm:$0xff]
        %v316 = vld [vmem:[%s190 + $0x2b0] sm:$0xff]
        %v317 = vld [vmem:[%s190 + $0x2b8] sm:$0xff]
        %v318 = vld [vmem:[%s190 + $0x2c0] sm:$0xff]
        %v319 = vld [vmem:[%s190 + $0x2c8] sm:$0xff]
        %v320 = vld [vmem:[%s190 + $0x2d0] sm:$0xff]
        %v321 = vld [vmem:[%s190 + $0x2d8] sm:$0xff]
        %v322 = vld [vmem:[%s190 + $0x2e0] sm:$0xff]
        %v323 = vld [vmem:[%s190 + $0x2e8] sm:$0xff]
        %v324 = vld [vmem:[%s190 + $0x2f0] sm:$0xff]
        %v325 = vld [vmem:[%s190 + $0x2f8] sm:$0xff]
        %v326 = vld [vmem:[%s190 + $0x300] sm:$0xff]
        %v327 = vld [vmem:[%s190 + $0x308] sm:$0xff]
        %v328 = vld [vmem:[%s190 + $0x310] sm:$0xff]
        %v329 = vld [vmem:[%s190 + $0x318] sm:$0xff]
        %v330 = vld [vmem:[%s190 + $0x320] sm:$0xff]
        %v331 = vld [vmem:[%s190 + $0x328] sm:$0xff]
        %v332 = vld [vmem:[%s190 + $0x330] sm:$0xff]
        %v333 = vld [vmem:[%s190 + $0x338] sm:$0xff]
        %v334 = vld [vmem:[%s190 + $0x340] sm:$0xff]
        %v335 = vld [vmem:[%s190 + $0x348] sm:$0xff]
        %v336 = vld [vmem:[%s190 + $0x350] sm:$0xff]
        %v337 = vld [vmem:[%s190 + $0x358] sm:$0xff]
        %v338 = vld [vmem:[%s190 + $0x360] sm:$0xff]
        %v339 = vld [vmem:[%s190 + $0x368] sm:$0xff]
        %v340 = vld [vmem:[%s190 + $0x370] sm:$0xff]
        %v341 = vld [vmem:[%s190 + $0x378] sm:$0xff]
        %v342 = vld [vmem:[%s190 + $0x380] sm:$0xff]
        %v343 = vld [vmem:[%s190 + $0x388] sm:$0xff]
        %v344 = vld [vmem:[%s190 + $0x390] sm:$0xff]
        %v345 = vld [vmem:[%s190 + $0x398] sm:$0xff]
        %v346 = vld [vmem:[%s190 + $0x3a0] sm:$0xff]
        %v347 = vld [vmem:[%s190 + $0x3a8] sm:$0xff]
        %v348 = vld [vmem:[%s190 + $0x3b0] sm:$0xff]
        %v349 = vld [vmem:[%s190 + $0x3b8] sm:$0xff]
        %v350 = vld [vmem:[%s190 + $0x3c0] sm:$0xff]
        %v351 = vld [vmem:[%s190 + $0x3c8] sm:$0xff]
        %v352 = vld [vmem:[%s190 + $0x3d0] sm:$0xff]
        %v353 = vld [vmem:[%s190 + $0x3d8] sm:$0xff]
        %v354 = vld [vmem:[%s190 + $0x3e0] sm:$0xff]
        %v355 = vld [vmem:[%s190 + $0x3e8] sm:$0xff]
        %v356 = vld [vmem:[%s190 + $0x3f0] sm:$0xff]
        %v357 = vld [vmem:[%s190 + $0x3f8] sm:$0xff]
        %v358 = vld [vmem:[%s199] sm:$0x3]
        %v360 = vlaneseq
        %v361 = vshrl.u32 %v360, 7
        %v362 = vsub.s32 0, %v361
        %v363 = vrot.slane %v358, %v362
        %v364 = vlaneseq
        %v365 = vshrl.u32 %v364, 7
        %v366 = vsub.s32 1, %v365
        %v367 = vrot.slane %v358, %v366
        %v371 = vcombine.high %v229, %v229
        %v373 = vunpack.c.l.s4 1966171168
        %v374 = vunpack.c.0.s8 %v373
        %v375 = vlaneseq
        %v376 = vshrl.u32 %v375, 7
        %v377 = vsub.s32 %v374, %v376
        %v378 = vrot.slane %v229, %v377
        %v380 = vunpack.c.l.s4 1966171168
        %v381 = vunpack.c.0.s8 %v380
        %v382 = vlaneseq
        %v383 = vshrl.u32 %v382, 7
        %v384 = vsub.s32 %v381, %v383
        %v385 = vrot.slane %v371, %v384
        %v386 = vcombine.high %v378, %v378
        %v387 = vcombine.high %v385, %v385
        %v389 = vunpack.c.l.s4 1966171168
        %v390 = vunpack.c.0.s8 %v389
        %v391 = vlaneseq
        %v392 = vshrl.u32 %v391, 7
        %v393 = vsub.s32 %v390, %v392
        %v394 = vrot.slane %v378, %v393
        %v396 = vunpack.c.l.s4 1966171168
        %v397 = vunpack.c.0.s8 %v396
        %v398 = vlaneseq
        %v399 = vshrl.u32 %v398, 7
        %v400 = vsub.s32 %v397, %v399
        %v401 = vrot.slane %v385, %v400
        %v403 = vunpack.c.l.s4 1966171168
        %v404 = vunpack.c.0.s8 %v403
        %v405 = vlaneseq
        %v406 = vshrl.u32 %v405, 7
        %v407 = vsub.s32 %v404, %v406
        %v408 = vrot.slane %v386, %v407
        %v410 = vunpack.c.l.s4 1966171168
        %v411 = vunpack.c.0.s8 %v410
        %v412 = vlaneseq
        %v413 = vshrl.u32 %v412, 7
        %v414 = vsub.s32 %v411, %v413
        %v415 = vrot.slane %v387, %v414
        %v416 = vcombine.high %v394, %v394
        %v417 = vcombine.high %v401, %v401
        %v418 = vcombine.high %v408, %v408
        %v419 = vcombine.high %v415, %v415
        %v556 = vunpack.c.l.b16 %v230
        %v557 = vunpack.c.h.b16 %v230
        %v558 = vunpack.c.l.b16 %v231
        %v559 = vunpack.c.h.b16 %v231
        %v560 = vunpack.c.l.b16 %v232
        %v561 = vunpack.c.h.b16 %v232
        %v562 = vunpack.c.l.b16 %v233
        %v563 = vunpack.c.h.b16 %v233
        %v564 = vunpack.c.l.b16 %v234
        %v565 = vunpack.c.h.b16 %v234
        %v566 = vunpack.c.l.b16 %v235
        %v567 = vunpack.c.h.b16 %v235
        %v568 = vunpack.c.l.b16 %v236
        %v569 = vunpack.c.h.b16 %v236
        %v570 = vunpack.c.l.b16 %v237
        %v571 = vunpack.c.h.b16 %v237
        %v572 = vunpack.c.l.b16 %v238
        %v573 = vunpack.c.h.b16 %v238
        %v574 = vunpack.c.l.b16 %v239
        %v575 = vunpack.c.h.b16 %v239
        %v576 = vunpack.c.l.b16 %v240
        %v577 = vunpack.c.h.b16 %v240
        %v578 = vunpack.c.l.b16 %v241
        %v579 = vunpack.c.h.b16 %v241
        %v580 = vunpack.c.l.b16 %v242
        %v581 = vunpack.c.h.b16 %v242
        %v582 = vunpack.c.l.b16 %v243
        %v583 = vunpack.c.h.b16 %v243
        %v584 = vunpack.c.l.b16 %v244
        %v585 = vunpack.c.h.b16 %v244
        %v586 = vunpack.c.l.b16 %v245
        %v587 = vunpack.c.h.b16 %v245
        %v588 = vunpack.c.l.b16 %v246
        %v589 = vunpack.c.h.b16 %v246
        %v590 = vunpack.c.l.b16 %v247
        %v591 = vunpack.c.h.b16 %v247
        %v592 = vunpack.c.l.b16 %v248
        %v593 = vunpack.c.h.b16 %v248
        %v594 = vunpack.c.l.b16 %v249
        %v595 = vunpack.c.h.b16 %v249
        %v596 = vunpack.c.l.b16 %v250
        %v597 = vunpack.c.h.b16 %v250
        %v598 = vunpack.c.l.b16 %v251
        %v599 = vunpack.c.h.b16 %v251
        %v600 = vunpack.c.l.b16 %v252
        %v601 = vunpack.c.h.b16 %v252
        %v602 = vunpack.c.l.b16 %v253
        %v603 = vunpack.c.h.b16 %v253
        %v604 = vunpack.c.l.b16 %v254
        %v605 = vunpack.c.h.b16 %v254
        %v606 = vunpack.c.l.b16 %v255
        %v607 = vunpack.c.h.b16 %v255
        %v608 = vunpack.c.l.b16 %v256
        %v609 = vunpack.c.h.b16 %v256
        %v610 = vunpack.c.l.b16 %v257
        %v611 = vunpack.c.h.b16 %v257
        %v612 = vunpack.c.l.b16 %v258
        %v613 = vunpack.c.h.b16 %v258
        %v614 = vunpack.c.l.b16 %v259
        %v615 = vunpack.c.h.b16 %v259
        %v616 = vunpack.c.l.b16 %v260
        %v617 = vunpack.c.h.b16 %v260
        %v618 = vunpack.c.l.b16 %v261
        %v619 = vunpack.c.h.b16 %v261
        %v620 = vunpack.c.l.b16 %v262
        %v621 = vunpack.c.h.b16 %v262
        %v622 = vunpack.c.l.b16 %v263
        %v623 = vunpack.c.h.b16 %v263
        %v624 = vunpack.c.l.b16 %v264
        %v625 = vunpack.c.h.b16 %v264
        %v626 = vunpack.c.l.b16 %v265
        %v627 = vunpack.c.h.b16 %v265
        %v628 = vunpack.c.l.b16 %v266
        %v629 = vunpack.c.h.b16 %v266
        %v630 = vunpack.c.l.b16 %v267
        %v631 = vunpack.c.h.b16 %v267
        %v632 = vunpack.c.l.b16 %v268
        %v633 = vunpack.c.h.b16 %v268
        %v634 = vunpack.c.l.b16 %v269
        %v635 = vunpack.c.h.b16 %v269
        %v636 = vunpack.c.l.b16 %v270
        %v637 = vunpack.c.h.b16 %v270
        %v638 = vunpack.c.l.b16 %v271
        %v639 = vunpack.c.h.b16 %v271
        %v640 = vunpack.c.l.b16 %v272
        %v641 = vunpack.c.h.b16 %v272
        %v642 = vunpack.c.l.b16 %v273
        %v643 = vunpack.c.h.b16 %v273
        %v644 = vunpack.c.l.b16 %v274
        %v645 = vunpack.c.h.b16 %v274
        %v646 = vunpack.c.l.b16 %v275
        %v647 = vunpack.c.h.b16 %v275
        %v648 = vunpack.c.l.b16 %v276
        %v649 = vunpack.c.h.b16 %v276
        %v650 = vunpack.c.l.b16 %v277
        %v651 = vunpack.c.h.b16 %v277
        %v652 = vunpack.c.l.b16 %v278
        %v653 = vunpack.c.h.b16 %v278
        %v654 = vunpack.c.l.b16 %v279
        %v655 = vunpack.c.h.b16 %v279
        %v656 = vunpack.c.l.b16 %v280
        %v657 = vunpack.c.h.b16 %v280
        %v658 = vunpack.c.l.b16 %v281
        %v659 = vunpack.c.h.b16 %v281
        %v660 = vunpack.c.l.b16 %v282
        %v661 = vunpack.c.h.b16 %v282
        %v662 = vunpack.c.l.b16 %v283
        %v663 = vunpack.c.h.b16 %v283
        %v664 = vunpack.c.l.b16 %v284
        %v665 = vunpack.c.h.b16 %v284
        %v666 = vunpack.c.l.b16 %v285
        %v667 = vunpack.c.h.b16 %v285
        %v668 = vunpack.c.l.b16 %v286
        %v669 = vunpack.c.h.b16 %v286
        %v670 = vunpack.c.l.b16 %v287
        %v671 = vunpack.c.h.b16 %v287
        %v672 = vunpack.c.l.b16 %v288
        %v673 = vunpack.c.h.b16 %v288
        %v674 = vunpack.c.l.b16 %v289
        %v675 = vunpack.c.h.b16 %v289
        %v676 = vunpack.c.l.b16 %v290
        %v677 = vunpack.c.h.b16 %v290
        %v678 = vunpack.c.l.b16 %v291
        %v679 = vunpack.c.h.b16 %v291
        %v680 = vunpack.c.l.b16 %v292
        %v681 = vunpack.c.h.b16 %v292
        %v682 = vunpack.c.l.b16 %v293
        %v683 = vunpack.c.h.b16 %v293
        %v684 = vunpack.c.l.b16 %v294
        %v685 = vunpack.c.h.b16 %v294
        %v686 = vunpack.c.l.b16 %v295
        %v687 = vunpack.c.h.b16 %v295
        %v688 = vunpack.c.l.b16 %v296
        %v689 = vunpack.c.h.b16 %v296
        %v690 = vunpack.c.l.b16 %v297
        %v691 = vunpack.c.h.b16 %v297
        %v692 = vunpack.c.l.b16 %v298
        %v693 = vunpack.c.h.b16 %v298
        %v694 = vunpack.c.l.b16 %v299
        %v695 = vunpack.c.h.b16 %v299
        %v696 = vunpack.c.l.b16 %v300
        %v697 = vunpack.c.h.b16 %v300
        %v698 = vunpack.c.l.b16 %v301
        %v699 = vunpack.c.h.b16 %v301
        %v700 = vunpack.c.l.b16 %v302
        %v701 = vunpack.c.h.b16 %v302
        %v702 = vunpack.c.l.b16 %v303
        %v703 = vunpack.c.h.b16 %v303
        %v704 = vunpack.c.l.b16 %v304
        %v705 = vunpack.c.h.b16 %v304
        %v706 = vunpack.c.l.b16 %v305
        %v707 = vunpack.c.h.b16 %v305
        %v708 = vunpack.c.l.b16 %v306
        %v709 = vunpack.c.h.b16 %v306
        %v710 = vunpack.c.l.b16 %v307
        %v711 = vunpack.c.h.b16 %v307
        %v712 = vunpack.c.l.b16 %v308
        %v713 = vunpack.c.h.b16 %v308
        %v714 = vunpack.c.l.b16 %v309
        %v715 = vunpack.c.h.b16 %v309
        %v716 = vunpack.c.l.b16 %v310
        %v717 = vunpack.c.h.b16 %v310
        %v718 = vunpack.c.l.b16 %v311
        %v719 = vunpack.c.h.b16 %v311
        %v720 = vunpack.c.l.b16 %v312
        %v721 = vunpack.c.h.b16 %v312
        %v722 = vunpack.c.l.b16 %v313
        %v723 = vunpack.c.h.b16 %v313
        %v724 = vunpack.c.l.b16 %v314
        %v725 = vunpack.c.h.b16 %v314
        %v726 = vunpack.c.l.b16 %v315
        %v727 = vunpack.c.h.b16 %v315
        %v728 = vunpack.c.l.b16 %v316
        %v729 = vunpack.c.h.b16 %v316
        %v730 = vunpack.c.l.b16 %v317
        %v731 = vunpack.c.h.b16 %v317
        %v732 = vunpack.c.l.b16 %v318
        %v733 = vunpack.c.h.b16 %v318
        %v734 = vunpack.c.l.b16 %v319
        %v735 = vunpack.c.h.b16 %v319
        %v736 = vunpack.c.l.b16 %v320
        %v737 = vunpack.c.h.b16 %v320
        %v738 = vunpack.c.l.b16 %v321
        %v739 = vunpack.c.h.b16 %v321
        %v740 = vunpack.c.l.b16 %v322
        %v741 = vunpack.c.h.b16 %v322
        %v742 = vunpack.c.l.b16 %v323
        %v743 = vunpack.c.h.b16 %v323
        %v744 = vunpack.c.l.b16 %v324
        %v745 = vunpack.c.h.b16 %v324
        %v746 = vunpack.c.l.b16 %v325
        %v747 = vunpack.c.h.b16 %v325
        %v748 = vunpack.c.l.b16 %v326
        %v749 = vunpack.c.h.b16 %v326
        %v750 = vunpack.c.l.b16 %v327
        %v751 = vunpack.c.h.b16 %v327
        %v752 = vunpack.c.l.b16 %v328
        %v753 = vunpack.c.h.b16 %v328
        %v754 = vunpack.c.l.b16 %v329
        %v755 = vunpack.c.h.b16 %v329
        %v756 = vunpack.c.l.b16 %v330
        %v757 = vunpack.c.h.b16 %v330
        %v758 = vunpack.c.l.b16 %v331
        %v759 = vunpack.c.h.b16 %v331
        %v760 = vunpack.c.l.b16 %v332
        %v761 = vunpack.c.h.b16 %v332
        %v762 = vunpack.c.l.b16 %v333
        %v763 = vunpack.c.h.b16 %v333
        %v764 = vunpack.c.l.b16 %v334
        %v765 = vunpack.c.h.b16 %v334
        %v766 = vunpack.c.l.b16 %v335
        %v767 = vunpack.c.h.b16 %v335
        %v768 = vunpack.c.l.b16 %v336
        %v769 = vunpack.c.h.b16 %v336
        %v770 = vunpack.c.l.b16 %v337
        %v771 = vunpack.c.h.b16 %v337
        %v772 = vunpack.c.l.b16 %v338
        %v773 = vunpack.c.h.b16 %v338
        %v774 = vunpack.c.l.b16 %v339
        %v775 = vunpack.c.h.b16 %v339
        %v776 = vunpack.c.l.b16 %v340
        %v777 = vunpack.c.h.b16 %v340
        %v778 = vunpack.c.l.b16 %v341
        %v779 = vunpack.c.h.b16 %v341
        %v780 = vunpack.c.l.b16 %v342
        %v781 = vunpack.c.h.b16 %v342
        %v782 = vunpack.c.l.b16 %v343
        %v783 = vunpack.c.h.b16 %v343
        %v784 = vunpack.c.l.b16 %v344
        %v785 = vunpack.c.h.b16 %v344
        %v786 = vunpack.c.l.b16 %v345
        %v787 = vunpack.c.h.b16 %v345
        %v788 = vunpack.c.l.b16 %v346
        %v789 = vunpack.c.h.b16 %v346
        %v790 = vunpack.c.l.b16 %v347
        %v791 = vunpack.c.h.b16 %v347
        %v792 = vunpack.c.l.b16 %v348
        %v793 = vunpack.c.h.b16 %v348
        %v794 = vunpack.c.l.b16 %v349
        %v795 = vunpack.c.h.b16 %v349
        %v796 = vunpack.c.l.b16 %v350
        %v797 = vunpack.c.h.b16 %v350
        %v798 = vunpack.c.l.b16 %v351
        %v799 = vunpack.c.h.b16 %v351
        %v800 = vunpack.c.l.b16 %v352
        %v801 = vunpack.c.h.b16 %v352
        %v802 = vunpack.c.l.b16 %v353
        %v803 = vunpack.c.h.b16 %v353
        %v804 = vunpack.c.l.b16 %v354
        %v805 = vunpack.c.h.b16 %v354
        %v806 = vunpack.c.l.b16 %v355
        %v807 = vunpack.c.h.b16 %v355
        %v808 = vunpack.c.l.b16 %v356
        %v809 = vunpack.c.h.b16 %v356
        %v810 = vunpack.c.l.b16 %v357
        %v811 = vunpack.c.h.b16 %v357
        %v812 = vpack.c.b16 %v558, %v556
        %v813 = vpack.c.b16 %v559, %v557
        %v814 = vpack.c.b16 %v562, %v560
        %v815 = vpack.c.b16 %v563, %v561
        %v816 = vpack.c.b16 %v566, %v564
        %v817 = vpack.c.b16 %v567, %v565
        %v818 = vpack.c.b16 %v570, %v568
        %v819 = vpack.c.b16 %v571, %v569
        %v820 = vpack.c.b16 %v574, %v572
        %v821 = vpack.c.b16 %v575, %v573
        %v822 = vpack.c.b16 %v578, %v576
        %v823 = vpack.c.b16 %v579, %v577
        %v824 = vpack.c.b16 %v582, %v580
        %v825 = vpack.c.b16 %v583, %v581
        %v826 = vpack.c.b16 %v586, %v584
        %v827 = vpack.c.b16 %v587, %v585
        %v828 = vpack.c.b16 %v590, %v588
        %v829 = vpack.c.b16 %v591, %v589
        %v830 = vpack.c.b16 %v594, %v592
        %v831 = vpack.c.b16 %v595, %v593
        %v832 = vpack.c.b16 %v598, %v596
        %v833 = vpack.c.b16 %v599, %v597
        %v834 = vpack.c.b16 %v602, %v600
        %v835 = vpack.c.b16 %v603, %v601
        %v836 = vpack.c.b16 %v606, %v604
        %v837 = vpack.c.b16 %v607, %v605
        %v838 = vpack.c.b16 %v610, %v608
        %v839 = vpack.c.b16 %v611, %v609
        %v840 = vpack.c.b16 %v614, %v612
        %v841 = vpack.c.b16 %v615, %v613
        %v842 = vpack.c.b16 %v618, %v616
        %v843 = vpack.c.b16 %v619, %v617
        %v844 = vpack.c.b16 %v622, %v620
        %v845 = vpack.c.b16 %v623, %v621
        %v846 = vpack.c.b16 %v626, %v624
        %v847 = vpack.c.b16 %v627, %v625
        %v848 = vpack.c.b16 %v630, %v628
        %v849 = vpack.c.b16 %v631, %v629
        %v850 = vpack.c.b16 %v634, %v632
        %v851 = vpack.c.b16 %v635, %v633
        %v852 = vpack.c.b16 %v638, %v636
        %v853 = vpack.c.b16 %v639, %v637
        %v854 = vpack.c.b16 %v642, %v640
        %v855 = vpack.c.b16 %v643, %v641
        %v856 = vpack.c.b16 %v646, %v644
        %v857 = vpack.c.b16 %v647, %v645
        %v858 = vpack.c.b16 %v650, %v648
        %v859 = vpack.c.b16 %v651, %v649
        %v860 = vpack.c.b16 %v654, %v652
        %v861 = vpack.c.b16 %v655, %v653
        %v862 = vpack.c.b16 %v658, %v656
        %v863 = vpack.c.b16 %v659, %v657
        %v864 = vpack.c.b16 %v662, %v660
        %v865 = vpack.c.b16 %v663, %v661
        %v866 = vpack.c.b16 %v666, %v664
        %v867 = vpack.c.b16 %v667, %v665
        %v868 = vpack.c.b16 %v670, %v668
        %v869 = vpack.c.b16 %v671, %v669
        %v870 = vpack.c.b16 %v674, %v672
        %v871 = vpack.c.b16 %v675, %v673
        %v872 = vpack.c.b16 %v678, %v676
        %v873 = vpack.c.b16 %v679, %v677
        %v874 = vpack.c.b16 %v682, %v680
        %v875 = vpack.c.b16 %v683, %v681
        %v876 = vpack.c.b16 %v686, %v684
        %v877 = vpack.c.b16 %v687, %v685
        %v878 = vpack.c.b16 %v690, %v688
        %v879 = vpack.c.b16 %v691, %v689
        %v880 = vpack.c.b16 %v694, %v692
        %v881 = vpack.c.b16 %v695, %v693
        %v882 = vpack.c.b16 %v698, %v696
        %v883 = vpack.c.b16 %v699, %v697
        %v884 = vpack.c.b16 %v702, %v700
        %v885 = vpack.c.b16 %v703, %v701
        %v886 = vpack.c.b16 %v706, %v704
        %v887 = vpack.c.b16 %v707, %v705
        %v888 = vpack.c.b16 %v710, %v708
        %v889 = vpack.c.b16 %v711, %v709
        %v890 = vpack.c.b16 %v714, %v712
        %v891 = vpack.c.b16 %v715, %v713
        %v892 = vpack.c.b16 %v718, %v716
        %v893 = vpack.c.b16 %v719, %v717
        %v894 = vpack.c.b16 %v722, %v720
        %v895 = vpack.c.b16 %v723, %v721
        %v896 = vpack.c.b16 %v726, %v724
        %v897 = vpack.c.b16 %v727, %v725
        %v898 = vpack.c.b16 %v730, %v728
        %v899 = vpack.c.b16 %v731, %v729
        %v900 = vpack.c.b16 %v734, %v732
        %v901 = vpack.c.b16 %v735, %v733
        %v902 = vpack.c.b16 %v738, %v736
        %v903 = vpack.c.b16 %v739, %v737
        %v904 = vpack.c.b16 %v742, %v740
        %v905 = vpack.c.b16 %v743, %v741
        %v906 = vpack.c.b16 %v746, %v744
        %v907 = vpack.c.b16 %v747, %v745
        %v908 = vpack.c.b16 %v750, %v748
        %v909 = vpack.c.b16 %v751, %v749
        %v910 = vpack.c.b16 %v754, %v752
        %v911 = vpack.c.b16 %v755, %v753
        %v912 = vpack.c.b16 %v758, %v756
        %v913 = vpack.c.b16 %v759, %v757
        %v914 = vpack.c.b16 %v762, %v760
        %v915 = vpack.c.b16 %v763, %v761
        %v916 = vpack.c.b16 %v766, %v764
        %v917 = vpack.c.b16 %v767, %v765
        %v918 = vpack.c.b16 %v770, %v768
        %v919 = vpack.c.b16 %v771, %v769
        %v920 = vpack.c.b16 %v774, %v772
        %v921 = vpack.c.b16 %v775, %v773
        %v922 = vpack.c.b16 %v778, %v776
        %v923 = vpack.c.b16 %v779, %v777
        %v924 = vpack.c.b16 %v782, %v780
        %v925 = vpack.c.b16 %v783, %v781
        %v926 = vpack.c.b16 %v786, %v784
        %v927 = vpack.c.b16 %v787, %v785
        %v928 = vpack.c.b16 %v790, %v788
        %v929 = vpack.c.b16 %v791, %v789
        %v930 = vpack.c.b16 %v794, %v792
        %v931 = vpack.c.b16 %v795, %v793
        %v932 = vpack.c.b16 %v798, %v796
        %v933 = vpack.c.b16 %v799, %v797
        %v934 = vpack.c.b16 %v802, %v800
        %v935 = vpack.c.b16 %v803, %v801
        %v936 = vpack.c.b16 %v806, %v804
        %v937 = vpack.c.b16 %v807, %v805
        %v938 = vpack.c.b16 %v810, %v808
        %v939 = vpack.c.b16 %v811, %v809
        %1068 = vmatprep.subr.bf16.mxu0 %v813
        %1069 = vmatpush1.bf16.msra.mxu0 %v812
        %1070 = vmatprep.subr.bf16.mxu0 %v815
        %1071 = vmatpush1.bf16.msra.mxu0 %v814
        %1072 = vmatprep.subr.bf16.mxu0 %v817
        %1073 = vmatpush1.bf16.msra.mxu0 %v816
        %1074 = vmatprep.subr.bf16.mxu0 %v819
        %1075 = vmatpush1.bf16.msra.mxu0 %v818
        %1076 = vmatprep.subr.bf16.mxu0 %v821
        %1077 = vmatpush1.bf16.msra.mxu0 %v820
        %1078 = vmatprep.subr.bf16.mxu0 %v823
        %1079 = vmatpush1.bf16.msra.mxu0 %v822
        %1080 = vmatprep.subr.bf16.mxu0 %v825
        %1081 = vmatpush1.bf16.msra.mxu0 %v824
        %1082 = vmatprep.subr.bf16.mxu0 %v827
        %1083 = vmatpush1.bf16.msra.mxu0 %v826
        %1084 = vmatprep.subr.bf16.mxu0 %v829
        %1085 = vmatpush1.bf16.msra.mxu0 %v828
        %1086 = vmatprep.subr.bf16.mxu0 %v831
        %1087 = vmatpush1.bf16.msra.mxu0 %v830
        %1088 = vmatprep.subr.bf16.mxu0 %v833
        %1089 = vmatpush1.bf16.msra.mxu0 %v832
        %1090 = vmatprep.subr.bf16.mxu0 %v835
        %1091 = vmatpush1.bf16.msra.mxu0 %v834
        %1092 = vmatprep.subr.bf16.mxu0 %v837
        %1093 = vmatpush1.bf16.msra.mxu0 %v836
        %1094 = vmatprep.subr.bf16.mxu0 %v839
        %1095 = vmatpush1.bf16.msra.mxu0 %v838
        %1096 = vmatprep.subr.bf16.mxu0 %v841
        %1097 = vmatpush1.bf16.msra.mxu0 %v840
        %1098 = vmatprep.subr.bf16.mxu0 %v843
        %1099 = vmatpush1.bf16.msra.mxu0 %v842
        %1100 = vmatprep.mubr.bf16.mxu0 %v408
        %1101 = vmatmul.mubr.bf16.gmra.mrb[0].mxu0 %v394
        %v1102 = vpop.f32.mrb[0].mxu0
        %v1103 = vadd.f32 %v363, %v1102
        %v1104 = vpop.f32.mrb[0].mxu0
        %v1105 = vadd.f32 %v367, %v1104
        %v1106 = vpop.f32.mrb[0].mxu0
        %v1107 = vpop.f32.mrb[0].mxu0
        %1108 = vdwg.mxu0
        %1109 = vmatprep.subr.bf16.mxu0 %v845
        %1110 = vmatpush1.bf16.msra.mxu0 %v844
        %1111 = vmatprep.subr.bf16.mxu0 %v847
        %1112 = vmatpush1.bf16.msra.mxu0 %v846
        %1113 = vmatprep.subr.bf16.mxu0 %v849
        %1114 = vmatpush1.bf16.msra.mxu0 %v848
        %1115 = vmatprep.subr.bf16.mxu0 %v851
        %1116 = vmatpush1.bf16.msra.mxu0 %v850
        %1117 = vmatprep.subr.bf16.mxu0 %v853
        %1118 = vmatpush1.bf16.msra.mxu0 %v852
        %1119 = vmatprep.subr.bf16.mxu0 %v855
        %1120 = vmatpush1.bf16.msra.mxu0 %v854
        %1121 = vmatprep.subr.bf16.mxu0 %v857
        %1122 = vmatpush1.bf16.msra.mxu0 %v856
        %1123 = vmatprep.subr.bf16.mxu0 %v859
        %1124 = vmatpush1.bf16.msra.mxu0 %v858
        %1125 = vmatprep.subr.bf16.mxu0 %v861
        %1126 = vmatpush1.bf16.msra.mxu0 %v860
        %1127 = vmatprep.subr.bf16.mxu0 %v863
        %1128 = vmatpush1.bf16.msra.mxu0 %v862
        %1129 = vmatprep.subr.bf16.mxu0 %v865
        %1130 = vmatpush1.bf16.msra.mxu0 %v864
        %1131 = vmatprep.subr.bf16.mxu0 %v867
        %1132 = vmatpush1.bf16.msra.mxu0 %v866
        %1133 = vmatprep.subr.bf16.mxu0 %v869
        %1134 = vmatpush1.bf16.msra.mxu0 %v868
        %1135 = vmatprep.subr.bf16.mxu0 %v871
        %1136 = vmatpush1.bf16.msra.mxu0 %v870
        %1137 = vmatprep.subr.bf16.mxu0 %v873
        %1138 = vmatpush1.bf16.msra.mxu0 %v872
        %1139 = vmatprep.subr.bf16.mxu0 %v875
        %1140 = vmatpush1.bf16.msra.mxu0 %v874
        %1141 = vmatprep.mubr.bf16.mxu0 %v418
        %1142 = vmatmul.mubr.bf16.gmra.mrb[0].mxu0 %v416
        %v1143 = vpop.f32.mrb[0].mxu0
        %v1144 = vadd.f32 %v1103, %v1143
        %v1145 = vpop.f32.mrb[0].mxu0
        %v1146 = vadd.f32 %v1105, %v1145
        %v1147 = vpop.f32.mrb[0].mxu0
        %v1148 = vpop.f32.mrb[0].mxu0
        %1149 = vdwg.mxu0
        %1150 = vmatprep.subr.bf16.mxu0 %v877
        %1151 = vmatpush1.bf16.msra.mxu0 %v876
        %1152 = vmatprep.subr.bf16.mxu0 %v879
        %1153 = vmatpush1.bf16.msra.mxu0 %v878
        %1154 = vmatprep.subr.bf16.mxu0 %v881
        %1155 = vmatpush1.bf16.msra.mxu0 %v880
        %1156 = vmatprep.subr.bf16.mxu0 %v883
        %1157 = vmatpush1.bf16.msra.mxu0 %v882
        %1158 = vmatprep.subr.bf16.mxu0 %v885
        %1159 = vmatpush1.bf16.msra.mxu0 %v884
        %1160 = vmatprep.subr.bf16.mxu0 %v887
        %1161 = vmatpush1.bf16.msra.mxu0 %v886
        %1162 = vmatprep.subr.bf16.mxu0 %v889
        %1163 = vmatpush1.bf16.msra.mxu0 %v888
        %1164 = vmatprep.subr.bf16.mxu0 %v891
        %1165 = vmatpush1.bf16.msra.mxu0 %v890
        %1166 = vmatprep.subr.bf16.mxu0 %v893
        %1167 = vmatpush1.bf16.msra.mxu0 %v892
        %1168 = vmatprep.subr.bf16.mxu0 %v895
        %1169 = vmatpush1.bf16.msra.mxu0 %v894
        %1170 = vmatprep.subr.bf16.mxu0 %v897
        %1171 = vmatpush1.bf16.msra.mxu0 %v896
        %1172 = vmatprep.subr.bf16.mxu0 %v899
        %1173 = vmatpush1.bf16.msra.mxu0 %v898
        %1174 = vmatprep.subr.bf16.mxu0 %v901
        %1175 = vmatpush1.bf16.msra.mxu0 %v900
        %1176 = vmatprep.subr.bf16.mxu0 %v903
        %1177 = vmatpush1.bf16.msra.mxu0 %v902
        %1178 = vmatprep.subr.bf16.mxu0 %v905
        %1179 = vmatpush1.bf16.msra.mxu0 %v904
        %1180 = vmatprep.subr.bf16.mxu0 %v907
        %1181 = vmatpush1.bf16.msra.mxu0 %v906
        %1182 = vmatprep.mubr.bf16.mxu0 %v415
        %1183 = vmatmul.mubr.bf16.gmra.mrb[0].mxu0 %v401
        %v1184 = vpop.f32.mrb[0].mxu0
        %v1185 = vadd.f32 %v1144, %v1184
        %v1186 = vpop.f32.mrb[0].mxu0
        %v1187 = vadd.f32 %v1146, %v1186
        %v1188 = vpop.f32.mrb[0].mxu0
        %v1189 = vpop.f32.mrb[0].mxu0
        %1190 = vdwg.mxu0
        %1191 = vmatprep.subr.bf16.mxu0 %v909
        %1192 = vmatpush1.bf16.msra.mxu0 %v908
        %1193 = vmatprep.subr.bf16.mxu0 %v911
        %1194 = vmatpush1.bf16.msra.mxu0 %v910
        %1195 = vmatprep.subr.bf16.mxu0 %v913
        %1196 = vmatpush1.bf16.msra.mxu0 %v912
        %1197 = vmatprep.subr.bf16.mxu0 %v915
        %1198 = vmatpush1.bf16.msra.mxu0 %v914
        %1199 = vmatprep.subr.bf16.mxu0 %v917
        %1200 = vmatpush1.bf16.msra.mxu0 %v916
        %1201 = vmatprep.subr.bf16.mxu0 %v919
        %1202 = vmatpush1.bf16.msra.mxu0 %v918
        %1203 = vmatprep.subr.bf16.mxu0 %v921
        %1204 = vmatpush1.bf16.msra.mxu0 %v920
        %1205 = vmatprep.subr.bf16.mxu0 %v923
        %1206 = vmatpush1.bf16.msra.mxu0 %v922
        %1207 = vmatprep.subr.bf16.mxu0 %v925
        %1208 = vmatpush1.bf16.msra.mxu0 %v924
        %1209 = vmatprep.subr.bf16.mxu0 %v927
        %1210 = vmatpush1.bf16.msra.mxu0 %v926
        %1211 = vmatprep.subr.bf16.mxu0 %v929
        %1212 = vmatpush1.bf16.msra.mxu0 %v928
        %1213 = vmatprep.subr.bf16.mxu0 %v931
        %1214 = vmatpush1.bf16.msra.mxu0 %v930
        %1215 = vmatprep.subr.bf16.mxu0 %v933
        %1216 = vmatpush1.bf16.msra.mxu0 %v932
        %1217 = vmatprep.subr.bf16.mxu0 %v935
        %1218 = vmatpush1.bf16.msra.mxu0 %v934
        %1219 = vmatprep.subr.bf16.mxu0 %v937
        %1220 = vmatpush1.bf16.msra.mxu0 %v936
        %1221 = vmatprep.subr.bf16.mxu0 %v939
        %1222 = vmatpush1.bf16.msra.mxu0 %v938
        %1223 = vmatprep.mubr.bf16.mxu0 %v419
        %1224 = vmatmul.mubr.bf16.gmra.mrb[0].mxu0 %v417
        %v1225 = vpop.f32.mrb[0].mxu0
        %v1226 = vadd.f32 %v1185, %v1225
        %v1227 = vpop.f32.mrb[0].mxu0
        %v1228 = vadd.f32 %v1187, %v1227
        %v1229 = vpop.f32.mrb[0].mxu0
        %v1230 = vpop.f32.mrb[0].mxu0
        %1231 = vdwg.mxu0
        %v1232 = vtanh.pop %v1226
        %v1233 = vtanh.pop %v1228
        %v1236 = vcombine.low %v1232, %v1233
        %v1238 = vunpack.c.l.s4 1983009808
        %v1239 = vunpack.c.0.s8 %v1238
        %v1240 = vlaneseq
        %v1241 = vshrl.u32 %v1240, 7
        %v1242 = vsub.s32 %v1239, %v1241
        %v1243 = vrot.slane %v1236, %v1242
        %1245 = vst [vmem:[%s226] sm:$0xf] %v1243
        %s1246 = sand.u32 %s104, 1
        %s1247 = scalar_lea.sflag [#allocation4], %s1246
        %s1248 = sand.u32 %s104, 1
        %s1249 = smul.addr %s1248, 4
        %s1250 = scalar_lea.vmem [#allocation7], %s1249
        // Predicated region
        $region41: #{point_decoder_forward.3} parent=31 // pred_check
          %p1251 = pneg %p114
        $region42: #{point_decoder_forward.3} parent=31 // pred_check_branch
          %1253 = sbr.rel (%p1251) target = $region44
        $region43: #{point_decoder_forward.3} parent=31 // pred_region
          %s1254 = smul.u32 2, %s23
          %s1256 = ssub.s32 64, 64
          %1257 = vsyncadd %s1247, %s1256
          %s1258 = smul.addr %s1254, 32
          %s1259 = scalar_lea.hbm %s3, %s1258
          %s1261 = sshll.u32 %s1250, 4
          %s1262 = int_to_ptr.vmem [resolvable:$true] %s1261
          %1264 = dma.vmem_to_hbm [thread:$0]  %s1262, 64, %s1259, %s1247
        $region44: #{point_decoder_forward.3} parent=31 // pred_fallthru
          _
      $region32: #{point_decoder_forward.3} parent=5 // pred_fallthru
        _
      %p1265 = scmp.le.s32.totalorder 2, %s18
      // Predicated region
      $region45: #{point_decoder_forward.3} parent=5 // pred_check
        %p1266 = pneg %p1265
      $region46: #{point_decoder_forward.3} parent=5 // pred_check_branch
        %1268 = sbr.rel (%p1266) target = $region48
      $region47: #{point_decoder_forward.3} parent=5 // pred_region
        %s1269 = ssub.s32 %s18, 2
        // Predicated region
        $region49: #{point_decoder_forward.3} parent=47 // pred_check
          %p1270 = pneg %p120
        $region50: #{point_decoder_forward.3} parent=47 // pred_check_branch
          %1272 = sbr.rel (%p1270) target = $region52
        $region51: #{point_decoder_forward.3} parent=47 // pred_region
          %s1273 = sand.u32 %s105, 1
          %s1274 = scalar_lea.sflag [#allocation4], %s1273
          %s1275 = sand.u32 %s105, 1
          %s1276 = smul.addr %s1275, 4
          %s1277 = scalar_lea.vmem [#allocation7], %s1276
          %1278 = dma.done %s1274, 64
        $region52: #{point_decoder_forward.3} parent=47 // pred_fallthru
          _
      $region48: #{point_decoder_forward.3} parent=5 // pred_fallthru
        _
    $region6: #{point_decoder_forward.3} parent=1 // loop_footer
      %s22 = sadd.s32 1, %s18
    $region7: #{point_decoder_forward.3} parent=1 // loop_footer_branch
      %17 = sbr.rel target = $region3
    $region8: #{point_decoder_forward.3} parent=1 // loop_exit
      _
    %1279 = vsyncpa [#allocation3], 1
    %s1280 = scalar_lea.sflag [#allocation3], 1
    %1281 = vsyncpa %s1280, 1
    %1282 = vsyncpa [#allocation6], 1
    %s1283 = scalar_lea.sflag [#allocation6], 1
    %1284 = vsyncpa %s1283, 1
    %1285 = vsyncpa [#allocation4], 1
    %s1286 = scalar_lea.sflag [#allocation4], 1
    %1287 = vsyncpa %s1286, 1

// kernel: point_decoder_forward.2
$region0: #{point_decoder_forward.2}
  #allocation0 [shape = 'u32[]', space=smem, size = 0x4, offset = 0x4, fixed_abs, tag = 'smem constant byte address 0x4 - core index']
  #allocation1 [shape = 'u32[144,128]{1,0:T(1,128)}', space=vmem, size = 0x12000, scoped, tag = 'internal scratch']
  %s0 = inlined_call_operand.hbm [shape: f32[2,100], index: 0, kind: input, shape index: {}]
  %s1 = inlined_call_operand.hbm [shape: bf16[100,128], index: 1, kind: input, shape index: {}]
  %s2 = inlined_call_operand.hbm [shape: f32[1,128], index: 2, kind: input, shape index: {}]
  %s3 = inlined_call_operand.hbm [shape: bf16[128,256], index: 3, kind: input, shape index: {}]
  %s4 = inlined_call_operand.hbm [shape: f32[1,256], index: 4, kind: input, shape index: {}]
  %s5 = inlined_call_operand.hbm [shape: bf16[256,512], index: 5, kind: input, shape index: {}]
  %s6 = inlined_call_operand.hbm [shape: f32[1,512], index: 6, kind: input, shape index: {}]
  %s7 = inlined_call_operand.hbm [shape: bf16[512,1024], index: 7, kind: input, shape index: {}]
  %s8 = inlined_call_operand.hbm [shape: f32[1,1024], index: 8, kind: input, shape index: {}]
  %s9 = inlined_call_operand.vmem [shape: bf16[2,1024], index: 9, kind: output, shape index: {}]
  %s10 = sld [smem:[#allocation0]]
  $region82: #{point_decoder_forward.2} parent=0
    _
  %s12 = ssub.s32 1, %s10
  %s13 = scalar_select 0, %s12, %s10
  $region1: #{point_decoder_forward.2} parent=0
    #allocation2 [shape = 'u8[1024]{0}', space=vmem, size = 0x400, scoped, tag = 'input window, operand 0, single buffered']
    #allocation3 [shape = 's32[1]{0}', space=sflag, size = 0x4, scoped, tag = 'scoped memory for point_decoder_forward.2']
    #allocation4 [shape = 'u8[26624]{0}', space=vmem, size = 0x6800, scoped, tag = 'input window, operand 1, single buffered']
    #allocation5 [shape = 's32[1]{0}', space=sflag, size = 0x4, scoped, tag = 'scoped memory for point_decoder_forward.2']
    #allocation6 [shape = 'u8[512]{0}', space=vmem, size = 0x400, scoped, tag = 'input window, operand 2, single buffered']
    #allocation7 [shape = 'u8[65536]{0}', space=vmem, size = 0x10000, scoped, tag = 'input window, operand 3, single buffered']
    #allocation8 [shape = 's32[1]{0}', space=sflag, size = 0x4, scoped, tag = 'scoped memory for point_decoder_forward.2']
    #allocation9 [shape = 'u8[1024]{0}', space=vmem, size = 0x400, scoped, tag = 'input window, operand 4, single buffered']
    #allocation10 [shape = 'u8[262144]{0}', space=vmem, size = 0x40000, scoped, tag = 'input window, operand 5, single buffered']
    #allocation11 [shape = 's32[1]{0}', space=sflag, size = 0x4, scoped, tag = 'scoped memory for point_decoder_forward.2']
    #allocation12 [shape = 'u8[2048]{0}', space=vmem, size = 0x800, scoped, tag = 'input window, operand 6, single buffered']
    #allocation13 [shape = 'u8[1048576]{0}', space=vmem, size = 0x100000, scoped, tag = 'input window, operand 7, single buffered']
    #allocation14 [shape = 's32[1]{0}', space=sflag, size = 0x4, scoped, tag = 'scoped memory for point_decoder_forward.2']
    #allocation15 [shape = 'u8[4096]{0}', space=vmem, size = 0x1000, scoped, tag = 'input window, operand 8, single buffered']
    %14 = vsyncpa [#allocation3], 0
    %15 = vsyncpa [#allocation5], 0
    %16 = vsyncpa [#allocation8], 0
    %17 = vsyncpa [#allocation11], 0
    %18 = vsyncpa [#allocation14], 0
    // Predicated region
    $region2: #{point_decoder_forward.2} parent=1 // pred_check
      _
    $region3: #{point_decoder_forward.2} parent=1 // pred_check_branch
      %20 = sbr.rel (0) target = $region5
    $region4: #{point_decoder_forward.2} parent=1 // pred_region
      %s22 = ssub.s32 32, 32
      %23 = vsyncadd [#allocation3], %s22
      %s25 = sshll.u32 [#allocation2], 4
      %s26 = int_to_ptr.vmem [resolvable:$true] %s25
      %28 = dma.hbm_to_vmem [thread:$0]  %s0, 32, %s26, [#allocation3]
    $region5: #{point_decoder_forward.2} parent=1 // pred_fallthru
      _
    // Predicated region
    $region6: #{point_decoder_forward.2} parent=1 // pred_check
      _
    $region7: #{point_decoder_forward.2} parent=1 // pred_check_branch
      %30 = sbr.rel (0) target = $region9
    $region8: #{point_decoder_forward.2} parent=1 // pred_region
      %s32 = ssub.s32 832, 832
      %33 = vsyncadd [#allocation5], %s32
      %s34 = sshll.u32 [#allocation4], 4
      %s35 = int_to_ptr.vmem [resolvable:$true] %s34
      %40 = dma.hbm_to_vmem [thread:$0]  %s1, 832, %s35, [#allocation5], 64, 64, 4
    $region9: #{point_decoder_forward.2} parent=1 // pred_fallthru
      _
    // Predicated region
    $region10: #{point_decoder_forward.2} parent=1 // pred_check
      _
    $region11: #{point_decoder_forward.2} parent=1 // pred_check_branch
      %42 = sbr.rel (0) target = $region13
    $region12: #{point_decoder_forward.2} parent=1 // pred_region
      %s44 = ssub.s32 16, 16
      %45 = vsyncadd [#allocation5], %s44
      %s47 = sshll.u32 [#allocation6], 4
      %s48 = int_to_ptr.vmem [resolvable:$true] %s47
      %50 = dma.hbm_to_vmem [thread:$0]  %s2, 16, %s48, [#allocation5]
    $region13: #{point_decoder_forward.2} parent=1 // pred_fallthru
      _
    // Predicated region
    $region14: #{point_decoder_forward.2} parent=1 // pred_check
      _
    $region15: #{point_decoder_forward.2} parent=1 // pred_check_branch
      %52 = sbr.rel (0) target = $region17
    $region16: #{point_decoder_forward.2} parent=1 // pred_region
      %s54 = ssub.s32 2048, 2048
      %55 = vsyncadd [#allocation8], %s54
      %s56 = sshll.u32 [#allocation7], 4
      %s57 = int_to_ptr.vmem [resolvable:$true] %s56
      %62 = dma.hbm_to_vmem [thread:$0]  %s3, 2048, %s57, [#allocation8], 128, 128, 8
    $region17: #{point_decoder_forward.2} parent=1 // pred_fallthru
      _
    // Predicated region
    $region18: #{point_decoder_forward.2} parent=1 // pred_check
      _
    $region19: #{point_decoder_forward.2} parent=1 // pred_check_branch
      %64 = sbr.rel (0) target = $region21
    $region20: #{point_decoder_forward.2} parent=1 // pred_region
      %s66 = ssub.s32 32, 32
      %67 = vsyncadd [#allocation8], %s66
      %s69 = sshll.u32 [#allocation9], 4
      %s70 = int_to_ptr.vmem [resolvable:$true] %s69
      %72 = dma.hbm_to_vmem [thread:$0]  %s4, 32, %s70, [#allocation8]
    $region21: #{point_decoder_forward.2} parent=1 // pred_fallthru
      _
    // Predicated region
    $region22: #{point_decoder_forward.2} parent=1 // pred_check
      _
    $region23: #{point_decoder_forward.2} parent=1 // pred_check_branch
      %74 = sbr.rel (0) target = $region25
    $region24: #{point_decoder_forward.2} parent=1 // pred_region
      %s76 = ssub.s32 8192, 8192
      %77 = vsyncadd [#allocation11], %s76
      %s78 = sshll.u32 [#allocation10], 4
      %s79 = int_to_ptr.vmem [resolvable:$true] %s78
      %84 = dma.hbm_to_vmem [thread:$0]  %s5, 8192, %s79, [#allocation11], 256, 256, 16
    $region25: #{point_decoder_forward.2} parent=1 // pred_fallthru
      _
    // Predicated region
    $region26: #{point_decoder_forward.2} parent=1 // pred_check
      _
    $region27: #{point_decoder_forward.2} parent=1 // pred_check_branch
      %86 = sbr.rel (0) target = $region29
    $region28: #{point_decoder_forward.2} parent=1 // pred_region
      %s88 = ssub.s32 64, 64
      %89 = vsyncadd [#allocation11], %s88
      %s91 = sshll.u32 [#allocation12], 4
      %s92 = int_to_ptr.vmem [resolvable:$true] %s91
      %94 = dma.hbm_to_vmem [thread:$0]  %s6, 64, %s92, [#allocation11]
    $region29: #{point_decoder_forward.2} parent=1 // pred_fallthru
      _
    // Predicated region
    $region30: #{point_decoder_forward.2} parent=1 // pred_check
      _
    $region31: #{point_decoder_forward.2} parent=1 // pred_check_branch
      %96 = sbr.rel (0) target = $region33
    $region32: #{point_decoder_forward.2} parent=1 // pred_region
      %s98 = ssub.s32 32768, 32768
      %99 = vsyncadd [#allocation14], %s98
      %s100 = sshll.u32 [#allocation13], 4
      %s101 = int_to_ptr.vmem [resolvable:$true] %s100
      %106 = dma.hbm_to_vmem [thread:$0]  %s7, 32768, %s101, [#allocation14], 512, 512, 32
    $region33: #{point_decoder_forward.2} parent=1 // pred_fallthru
      _
    // Predicated region
    $region34: #{point_decoder_forward.2} parent=1 // pred_check
      _
    $region35: #{point_decoder_forward.2} parent=1 // pred_check_branch
      %108 = sbr.rel (0) target = $region37
    $region36: #{point_decoder_forward.2} parent=1 // pred_region
      %s110 = ssub.s32 128, 128
      %111 = vsyncadd [#allocation14], %s110
      %s113 = sshll.u32 [#allocation15], 4
      %s114 = int_to_ptr.vmem [resolvable:$true] %s113
      %116 = dma.hbm_to_vmem [thread:$0]  %s8, 128, %s114, [#allocation14]
    $region37: #{point_decoder_forward.2} parent=1 // pred_fallthru
      _
    // Predicated region
    $region38: #{point_decoder_forward.2} parent=1 // pred_check
      _
    $region39: #{point_decoder_forward.2} parent=1 // pred_check_branch
      %118 = sbr.rel (0) target = $region41
    $region40: #{point_decoder_forward.2} parent=1 // pred_region
      %119 = dma.done [#allocation3], 32
    $region41: #{point_decoder_forward.2} parent=1 // pred_fallthru
      _
    // Predicated region
    $region42: #{point_decoder_forward.2} parent=1 // pred_check
      _
    $region43: #{point_decoder_forward.2} parent=1 // pred_check_branch
      %121 = sbr.rel (0) target = $region45
    $region44: #{point_decoder_forward.2} parent=1 // pred_region
      %122 = dma.done [#allocation5], 832
    $region45: #{point_decoder_forward.2} parent=1 // pred_fallthru
      _
    // Predicated region
    $region46: #{point_decoder_forward.2} parent=1 // pred_check
      _
    $region47: #{point_decoder_forward.2} parent=1 // pred_check_branch
      %124 = sbr.rel (0) target = $region49
    $region48: #{point_decoder_forward.2} parent=1 // pred_region
      %125 = dma.done [#allocation5], 16
    $region49: #{point_decoder_forward.2} parent=1 // pred_fallthru
      _
    // Predicated region
    $region50: #{point_decoder_forward.2} parent=1 // pred_check
      _
    $region51: #{point_decoder_forward.2} parent=1 // pred_check_branch
      %127 = sbr.rel (0) target = $region53
    $region52: #{point_decoder_forward.2} parent=1 // pred_region
      %128 = dma.done [#allocation8], 2048
    $region53: #{point_decoder_forward.2} parent=1 // pred_fallthru
      _
    // Predicated region
    $region54: #{point_decoder_forward.2} parent=1 // pred_check
      _
    $region55: #{point_decoder_forward.2} parent=1 // pred_check_branch
      %130 = sbr.rel (0) target = $region57
    $region56: #{point_decoder_forward.2} parent=1 // pred_region
      %131 = dma.done [#allocation8], 32
    $region57: #{point_decoder_forward.2} parent=1 // pred_fallthru
      _
    // Predicated region
    $region58: #{point_decoder_forward.2} parent=1 // pred_check
      _
    $region59: #{point_decoder_forward.2} parent=1 // pred_check_branch
      %133 = sbr.rel (0) target = $region61
    $region60: #{point_decoder_forward.2} parent=1 // pred_region
      %134 = dma.done [#allocation11], 8192
    $region61: #{point_decoder_forward.2} parent=1 // pred_fallthru
      _
    // Predicated region
    $region62: #{point_decoder_forward.2} parent=1 // pred_check
      _
    $region63: #{point_decoder_forward.2} parent=1 // pred_check_branch
      %136 = sbr.rel (0) target = $region65
    $region64: #{point_decoder_forward.2} parent=1 // pred_region
      %137 = dma.done [#allocation11], 64
    $region65: #{point_decoder_forward.2} parent=1 // pred_fallthru
      _
    // Predicated region
    $region66: #{point_decoder_forward.2} parent=1 // pred_check
      _
    $region67: #{point_decoder_forward.2} parent=1 // pred_check_branch
      %139 = sbr.rel (0) target = $region69
    $region68: #{point_decoder_forward.2} parent=1 // pred_region
      %140 = dma.done [#allocation14], 32768
    $region69: #{point_decoder_forward.2} parent=1 // pred_fallthru
      _
    // Predicated region
    $region70: #{point_decoder_forward.2} parent=1 // pred_check
      _
    $region71: #{point_decoder_forward.2} parent=1 // pred_check_branch
      %142 = sbr.rel (0) target = $region73
    $region72: #{point_decoder_forward.2} parent=1 // pred_region
      %143 = dma.done [#allocation14], 128
    $region73: #{point_decoder_forward.2} parent=1 // pred_fallthru
      _
    %v145 = vld [vmem:[#allocation2] sm:$0x3]
    %v146 = vpack.c.bf16 %v145, %v145
    %v147 = vld [vmem:[#allocation4] sm:$0xf]
    %v148 = vld [vmem:[#allocation4 + $0x4] sm:$0xf]
    %v149 = vld [vmem:[#allocation4 + $0x8] sm:$0xf]
    %v150 = vld [vmem:[#allocation4 + $0xc] sm:$0xf]
    %v151 = vld [vmem:[#allocation4 + $0x10] sm:$0xf]
    %v152 = vld [vmem:[#allocation4 + $0x14] sm:$0xf]
    %v153 = vld [vmem:[#allocation4 + $0x18] sm:$0xf]
    %v154 = vld [vmem:[#allocation4 + $0x1c] sm:$0xf]
    %v155 = vld [vmem:[#allocation4 + $0x20] sm:$0xf]
    %v156 = vld [vmem:[#allocation4 + $0x24] sm:$0xf]
    %v157 = vld [vmem:[#allocation4 + $0x28] sm:$0xf]
    %v158 = vld [vmem:[#allocation4 + $0x2c] sm:$0xf]
    %v159 = vld [vmem:[#allocation4 + $0x30] sm:$0x3]
    %v160 = vld [vmem:[#allocation6] sm:$0x1]
    %v162 = vlaneseq
    %v163 = vshrl.u32 %v162, 7
    %v164 = vsub.s32 0, %v163
    %v165 = vrot.slane %v160, %v164
    %v180 = vunpack.c.l.b16 %v147
    %v181 = vunpack.c.l.b16 %v148
    %v182 = vunpack.c.l.b16 %v149
    %v183 = vunpack.c.l.b16 %v150
    %v184 = vunpack.c.l.b16 %v151
    %v185 = vunpack.c.l.b16 %v152
    %v186 = vunpack.c.l.b16 %v153
    %v187 = vunpack.c.l.b16 %v154
    %v188 = vunpack.c.l.b16 %v155
    %v189 = vunpack.c.l.b16 %v156
    %v190 = vunpack.c.l.b16 %v157
    %v191 = vunpack.c.l.b16 %v158
    %v192 = vunpack.c.l.b16 %v159
    %v193 = vpack.c.b16 %v181, %v180
    %v194 = vpack.c.b16 %v183, %v182
    %v195 = vpack.c.b16 %v185, %v184
    %v196 = vpack.c.b16 %v187, %v186
    %v197 = vpack.c.b16 %v189, %v188
    %v198 = vpack.c.b16 %v191, %v190
    %v199 = vpack.c.b16 %v192, %v192
    %vm206 = vcmask 818176
    %v208 = vsel %vm206, %v146, 0
    %vm210 = vcmask 1041408
    %v212 = vsel %vm210, %v199, 0
    %214 = vmatprep.subr.bf16.mxu0 0
    %215 = vmatpush1.bf16.msra.mxu0 %v193
    %216 = vmatprep.subr.bf16.mxu0 0
    %217 = vmatpush1.bf16.msra.mxu0 %v194
    %218 = vmatprep.subr.bf16.mxu0 0
    %219 = vmatpush1.bf16.msra.mxu0 %v195
    %220 = vmatprep.subr.bf16.mxu0 0
    %221 = vmatpush1.bf16.msra.mxu0 %v196
    %222 = vmatprep.subr.bf16.mxu0 0
    %223 = vmatpush1.bf16.msra.mxu0 %v197
    %224 = vmatprep.subr.bf16.mxu0 0
    %225 = vmatpush1.bf16.msra.mxu0 %v198
    %226 = vmatprep.subr.bf16.mxu0 0
    %227 = vmatpush1.bf16.msra.mxu0 %v212
    %228 = vmatprep.subr.bf16.mxu0 0
    %229 = vmatpush1.bf16.msra.mxu0 0
    %230 = vmatprep.subr.bf16.mxu0 0
    %231 = vmatpush1.bf16.msra.mxu0 0
    %232 = vmatprep.subr.bf16.mxu0 0
    %233 = vmatpush1.bf16.msra.mxu0 0
    %234 = vmatprep.subr.bf16.mxu0 0
    %235 = vmatpush1.bf16.msra.mxu0 0
    %236 = vmatprep.subr.bf16.mxu0 0
    %237 = vmatpush1.bf16.msra.mxu0 0
    %238 = vmatprep.subr.bf16.mxu0 0
    %239 = vmatpush1.bf16.msra.mxu0 0
    %240 = vmatprep.subr.bf16.mxu0 0
    %241 = vmatpush1.bf16.msra.mxu0 0
    %242 = vmatprep.subr.bf16.mxu0 0
    %243 = vmatpush1.bf16.msra.mxu0 0
    %244 = vmatprep.subr.bf16.mxu0 0
    %245 = vmatpush1.bf16.msra.mxu0 0
    %246 = vmatprep.mubr.bf16.mxu0 0
    %247 = vmatmul.mubr.bf16.gmra.mrb[0].mxu0 %v208
    %v248 = vpop.f32.mrb[0].mxu0
    %v249 = vadd.f32 %v165, %v248
    %v250 = vpop.f32.mrb[0].mxu0
    %v251 = vpop.f32.mrb[0].mxu0
    %v252 = vpop.f32.mrb[0].mxu0
    %253 = vdwg.mxu0
    %v254 = vmax.f32 %v249, 0.0
    %v255 = vpack.c.bf16 %v254, %v254
    %v256 = vld [vmem:[#allocation7] sm:$0xff]
    %v257 = vld [vmem:[#allocation7 + $0x8] sm:$0xff]
    %v258 = vld [vmem:[#allocation7 + $0x10] sm:$0xff]
    %v259 = vld [vmem:[#allocation7 + $0x18] sm:$0xff]
    %v260 = vld [vmem:[#allocation7 + $0x20] sm:$0xff]
    %v261 = vld [vmem:[#allocation7 + $0x28] sm:$0xff]
    %v262 = vld [vmem:[#allocation7 + $0x30] sm:$0xff]
    %v263 = vld [vmem:[#allocation7 + $0x38] sm:$0xff]
    %v264 = vld [vmem:[#allocation7 + $0x40] sm:$0xff]
    %v265 = vld [vmem:[#allocation7 + $0x48] sm:$0xff]
    %v266 = vld [vmem:[#allocation7 + $0x50] sm:$0xff]
    %v267 = vld [vmem:[#allocation7 + $0x58] sm:$0xff]
    %v268 = vld [vmem:[#allocation7 + $0x60] sm:$0xff]
    %v269 = vld [vmem:[#allocation7 + $0x68] sm:$0xff]
    %v270 = vld [vmem:[#allocation7 + $0x70] sm:$0xff]
    %v271 = vld [vmem:[#allocation7 + $0x78] sm:$0xff]
    %v272 = vld [vmem:[#allocation9] sm:$0x3]
    %v274 = vlaneseq
    %v275 = vshrl.u32 %v274, 7
    %v276 = vsub.s32 0, %v275
    %v277 = vrot.slane %v272, %v276
    %v278 = vlaneseq
    %v279 = vshrl.u32 %v278, 7
    %v280 = vsub.s32 1, %v279
    %v281 = vrot.slane %v272, %v280
    %v300 = vunpack.c.l.b16 %v256
    %v301 = vunpack.c.h.b16 %v256
    %v302 = vunpack.c.l.b16 %v257
    %v303 = vunpack.c.h.b16 %v257
    %v304 = vunpack.c.l.b16 %v258
    %v305 = vunpack.c.h.b16 %v258
    %v306 = vunpack.c.l.b16 %v259
    %v307 = vunpack.c.h.b16 %v259
    %v308 = vunpack.c.l.b16 %v260
    %v309 = vunpack.c.h.b16 %v260
    %v310 = vunpack.c.l.b16 %v261
    %v311 = vunpack.c.h.b16 %v261
    %v312 = vunpack.c.l.b16 %v262
    %v313 = vunpack.c.h.b16 %v262
    %v314 = vunpack.c.l.b16 %v263
    %v315 = vunpack.c.h.b16 %v263
    %v316 = vunpack.c.l.b16 %v264
    %v317 = vunpack.c.h.b16 %v264
    %v318 = vunpack.c.l.b16 %v265
    %v319 = vunpack.c.h.b16 %v265
    %v320 = vunpack.c.l.b16 %v266
    %v321 = vunpack.c.h.b16 %v266
    %v322 = vunpack.c.l.b16 %v267
    %v323 = vunpack.c.h.b16 %v267
    %v324 = vunpack.c.l.b16 %v268
    %v325 = vunpack.c.h.b16 %v268
    %v326 = vunpack.c.l.b16 %v269
    %v327 = vunpack.c.h.b16 %v269
    %v328 = vunpack.c.l.b16 %v270
    %v329 = vunpack.c.h.b16 %v270
    %v330 = vunpack.c.l.b16 %v271
    %v331 = vunpack.c.h.b16 %v271
    %v332 = vpack.c.b16 %v302, %v300
    %v333 = vpack.c.b16 %v303, %v301
    %v334 = vpack.c.b16 %v306, %v304
    %v335 = vpack.c.b16 %v307, %v305
    %v336 = vpack.c.b16 %v310, %v308
    %v337 = vpack.c.b16 %v311, %v309
    %v338 = vpack.c.b16 %v314, %v312
    %v339 = vpack.c.b16 %v315, %v313
    %v340 = vpack.c.b16 %v318, %v316
    %v341 = vpack.c.b16 %v319, %v317
    %v342 = vpack.c.b16 %v322, %v320
    %v343 = vpack.c.b16 %v323, %v321
    %v344 = vpack.c.b16 %v326, %v324
    %v345 = vpack.c.b16 %v327, %v325
    %v346 = vpack.c.b16 %v330, %v328
    %v347 = vpack.c.b16 %v331, %v329
    %364 = vmatprep.subr.bf16.mxu0 %v333
    %365 = vmatpush1.bf16.msra.mxu0 %v332
    %366 = vmatprep.subr.bf16.mxu0 %v335
    %367 = vmatpush1.bf16.msra.mxu0 %v334
    %368 = vmatprep.subr.bf16.mxu0 %v337
    %369 = vmatpush1.bf16.msra.mxu0 %v336
    %370 = vmatprep.subr.bf16.mxu0 %v339
    %371 = vmatpush1.bf16.msra.mxu0 %v338
    %372 = vmatprep.subr.bf16.mxu0 %v341
    %373 = vmatpush1.bf16.msra.mxu0 %v340
    %374 = vmatprep.subr.bf16.mxu0 %v343
    %375 = vmatpush1.bf16.msra.mxu0 %v342
    %376 = vmatprep.subr.bf16.mxu0 %v345
    %377 = vmatpush1.bf16.msra.mxu0 %v344
    %378 = vmatprep.subr.bf16.mxu0 %v347
    %379 = vmatpush1.bf16.msra.mxu0 %v346
    %380 = vmatprep.subr.bf16.mxu0 0
    %381 = vmatpush1.bf16.msra.mxu0 0
    %382 = vmatprep.subr.bf16.mxu0 0
    %383 = vmatpush1.bf16.msra.mxu0 0
    %384 = vmatprep.subr.bf16.mxu0 0
    %385 = vmatpush1.bf16.msra.mxu0 0
    %386 = vmatprep.subr.bf16.mxu0 0
    %387 = vmatpush1.bf16.msra.mxu0 0
    %388 = vmatprep.subr.bf16.mxu0 0
    %389 = vmatpush1.bf16.msra.mxu0 0
    %390 = vmatprep.subr.bf16.mxu0 0
    %391 = vmatpush1.bf16.msra.mxu0 0
    %392 = vmatprep.subr.bf16.mxu0 0
    %393 = vmatpush1.bf16.msra.mxu0 0
    %394 = vmatprep.subr.bf16.mxu0 0
    %395 = vmatpush1.bf16.msra.mxu0 0
    %396 = vmatprep.mubr.bf16.mxu0 0
    %397 = vmatmul.mubr.bf16.gmra.mrb[0].mxu0 %v255
    %v398 = vpop.f32.mrb[0].mxu0
    %v399 = vadd.f32 %v277, %v398
    %v400 = vpop.f32.mrb[0].mxu0
    %v401 = vadd.f32 %v281, %v400
    %v402 = vpop.f32.mrb[0].mxu0
    %v403 = vpop.f32.mrb[0].mxu0
    %404 = vdwg.mxu0
    %v405 = vmax.f32 %v399, 0.0
    %v406 = vmax.f32 %v401, 0.0
    %v407 = vpack.c.bf16 %v405, %v405
    %v408 = vpack.c.bf16 %v406, %v406
    %v409 = vld [vmem:[#allocation10] sm:$0xff]
    %v410 = vld [vmem:[#allocation10 + $0x8] sm:$0xff]
    %v411 = vld [vmem:[#allocation10 + $0x10] sm:$0xff]
    %v412 = vld [vmem:[#allocation10 + $0x18] sm:$0xff]
    %v413 = vld [vmem:[#allocation10 + $0x20] sm:$0xff]
    %v414 = vld [vmem:[#allocation10 + $0x28] sm:$0xff]
    %v415 = vld [vmem:[#allocation10 + $0x30] sm:$0xff]
    %v416 = vld [vmem:[#allocation10 + $0x38] sm:$0xff]
    %v417 = vld [vmem:[#allocation10 + $0x40] sm:$0xff]
    %v418 = vld [vmem:[#allocation10 + $0x48] sm:$0xff]
    %v419 = vld [vmem:[#allocation10 + $0x50] sm:$0xff]
    %v420 = vld [vmem:[#allocation10 + $0x58] sm:$0xff]
    %v421 = vld [vmem:[#allocation10 + $0x60] sm:$0xff]
    %v422 = vld [vmem:[#allocation10 + $0x68] sm:$0xff]
    %v423 = vld [vmem:[#allocation10 + $0x70] sm:$0xff]
    %v424 = vld [vmem:[#allocation10 + $0x78] sm:$0xff]
    %v425 = vld [vmem:[#allocation10 + $0x80] sm:$0xff]
    %v426 = vld [vmem:[#allocation10 + $0x88] sm:$0xff]
    %v427 = vld [vmem:[#allocation10 + $0x90] sm:$0xff]
    %v428 = vld [vmem:[#allocation10 + $0x98] sm:$0xff]
    %v429 = vld [vmem:[#allocation10 + $0xa0] sm:$0xff]
    %v430 = vld [vmem:[#allocation10 + $0xa8] sm:$0xff]
    %v431 = vld [vmem:[#allocation10 + $0xb0] sm:$0xff]
    %v432 = vld [vmem:[#allocation10 + $0xb8] sm:$0xff]
    %v433 = vld [vmem:[#allocation10 + $0xc0] sm:$0xff]
    %v434 = vld [vmem:[#allocation10 + $0xc8] sm:$0xff]
    %v435 = vld [vmem:[#allocation10 + $0xd0] sm:$0xff]
    %v436 = vld [vmem:[#allocation10 + $0xd8] sm:$0xff]
    %v437 = vld [vmem:[#allocation10 + $0xe0] sm:$0xff]
    %v438 = vld [vmem:[#allocation10 + $0xe8] sm:$0xff]
    %v439 = vld [vmem:[#allocation10 + $0xf0] sm:$0xff]
    %v440 = vld [vmem:[#allocation10 + $0xf8] sm:$0xff]
    %v441 = vld [vmem:[#allocation10 + $0x100] sm:$0xff]
    %v442 = vld [vmem:[#allocation10 + $0x108] sm:$0xff]
    %v443 = vld [vmem:[#allocation10 + $0x110] sm:$0xff]
    %v444 = vld [vmem:[#allocation10 + $0x118] sm:$0xff]
    %v445 = vld [vmem:[#allocation10 + $0x120] sm:$0xff]
    %v446 = vld [vmem:[#allocation10 + $0x128] sm:$0xff]
    %v447 = vld [vmem:[#allocation10 + $0x130] sm:$0xff]
    %v448 = vld [vmem:[#allocation10 + $0x138] sm:$0xff]
    %v449 = vld [vmem:[#allocation10 + $0x140] sm:$0xff]
    %v450 = vld [vmem:[#allocation10 + $0x148] sm:$0xff]
    %v451 = vld [vmem:[#allocation10 + $0x150] sm:$0xff]
    %v452 = vld [vmem:[#allocation10 + $0x158] sm:$0xff]
    %v453 = vld [vmem:[#allocation10 + $0x160] sm:$0xff]
    %v454 = vld [vmem:[#allocation10 + $0x168] sm:$0xff]
    %v455 = vld [vmem:[#allocation10 + $0x170] sm:$0xff]
    %v456 = vld [vmem:[#allocation10 + $0x178] sm:$0xff]
    %v457 = vld [vmem:[#allocation10 + $0x180] sm:$0xff]
    %v458 = vld [vmem:[#allocation10 + $0x188] sm:$0xff]
    %v459 = vld [vmem:[#allocation10 + $0x190] sm:$0xff]
    %v460 = vld [vmem:[#allocation10 + $0x198] sm:$0xff]
    %v461 = vld [vmem:[#allocation10 + $0x1a0] sm:$0xff]
    %v462 = vld [vmem:[#allocation10 + $0x1a8] sm:$0xff]
    %v463 = vld [vmem:[#allocation10 + $0x1b0] sm:$0xff]
    %v464 = vld [vmem:[#allocation10 + $0x1b8] sm:$0xff]
    %v465 = vld [vmem:[#allocation10 + $0x1c0] sm:$0xff]
    %v466 = vld [vmem:[#allocation10 + $0x1c8] sm:$0xff]
    %v467 = vld [vmem:[#allocation10 + $0x1d0] sm:$0xff]
    %v468 = vld [vmem:[#allocation10 + $0x1d8] sm:$0xff]
    %v469 = vld [vmem:[#allocation10 + $0x1e0] sm:$0xff]
    %v470 = vld [vmem:[#allocation10 + $0x1e8] sm:$0xff]
    %v471 = vld [vmem:[#allocation10 + $0x1f0] sm:$0xff]
    %v472 = vld [vmem:[#allocation10 + $0x1f8] sm:$0xff]
    %v473 = vld [vmem:[#allocation12] sm:$0xf]
    %v475 = vlaneseq
    %v476 = vshrl.u32 %v475, 7
    %v477 = vsub.s32 0, %v476
    %v478 = vrot.slane %v473, %v477
    %v479 = vlaneseq
    %v480 = vshrl.u32 %v479, 7
    %v481 = vsub.s32 1, %v480
    %v482 = vrot.slane %v473, %v481
    %v483 = vlaneseq
    %v484 = vshrl.u32 %v483, 7
    %v485 = vsub.s32 2, %v484
    %v486 = vrot.slane %v473, %v485
    %v487 = vlaneseq
    %v488 = vshrl.u32 %v487, 7
    %v489 = vsub.s32 3, %v488
    %v490 = vrot.slane %v473, %v489
    %v559 = vunpack.c.l.b16 %v409
    %v560 = vunpack.c.h.b16 %v409
    %v561 = vunpack.c.l.b16 %v410
    %v562 = vunpack.c.h.b16 %v410
    %v563 = vunpack.c.l.b16 %v411
    %v564 = vunpack.c.h.b16 %v411
    %v565 = vunpack.c.l.b16 %v412
    %v566 = vunpack.c.h.b16 %v412
    %v567 = vunpack.c.l.b16 %v413
    %v568 = vunpack.c.h.b16 %v413
    %v569 = vunpack.c.l.b16 %v414
    %v570 = vunpack.c.h.b16 %v414
    %v571 = vunpack.c.l.b16 %v415
    %v572 = vunpack.c.h.b16 %v415
    %v573 = vunpack.c.l.b16 %v416
    %v574 = vunpack.c.h.b16 %v416
    %v575 = vunpack.c.l.b16 %v417
    %v576 = vunpack.c.h.b16 %v417
    %v577 = vunpack.c.l.b16 %v418
    %v578 = vunpack.c.h.b16 %v418
    %v579 = vunpack.c.l.b16 %v419
    %v580 = vunpack.c.h.b16 %v419
    %v581 = vunpack.c.l.b16 %v420
    %v582 = vunpack.c.h.b16 %v420
    %v583 = vunpack.c.l.b16 %v421
    %v584 = vunpack.c.h.b16 %v421
    %v585 = vunpack.c.l.b16 %v422
    %v586 = vunpack.c.h.b16 %v422
    %v587 = vunpack.c.l.b16 %v423
    %v588 = vunpack.c.h.b16 %v423
    %v589 = vunpack.c.l.b16 %v424
    %v590 = vunpack.c.h.b16 %v424
    %v591 = vunpack.c.l.b16 %v425
    %v592 = vunpack.c.h.b16 %v425
    %v593 = vunpack.c.l.b16 %v426
    %v594 = vunpack.c.h.b16 %v426
    %v595 = vunpack.c.l.b16 %v427
    %v596 = vunpack.c.h.b16 %v427
    %v597 = vunpack.c.l.b16 %v428
    %v598 = vunpack.c.h.b16 %v428
    %v599 = vunpack.c.l.b16 %v429
    %v600 = vunpack.c.h.b16 %v429
    %v601 = vunpack.c.l.b16 %v430
    %v602 = vunpack.c.h.b16 %v430
    %v603 = vunpack.c.l.b16 %v431
    %v604 = vunpack.c.h.b16 %v431
    %v605 = vunpack.c.l.b16 %v432
    %v606 = vunpack.c.h.b16 %v432
    %v607 = vunpack.c.l.b16 %v433
    %v608 = vunpack.c.h.b16 %v433
    %v609 = vunpack.c.l.b16 %v434
    %v610 = vunpack.c.h.b16 %v434
    %v611 = vunpack.c.l.b16 %v435
    %v612 = vunpack.c.h.b16 %v435
    %v613 = vunpack.c.l.b16 %v436
    %v614 = vunpack.c.h.b16 %v436
    %v615 = vunpack.c.l.b16 %v437
    %v616 = vunpack.c.h.b16 %v437
    %v617 = vunpack.c.l.b16 %v438
    %v618 = vunpack.c.h.b16 %v438
    %v619 = vunpack.c.l.b16 %v439
    %v620 = vunpack.c.h.b16 %v439
    %v621 = vunpack.c.l.b16 %v440
    %v622 = vunpack.c.h.b16 %v440
    %v623 = vunpack.c.l.b16 %v441
    %v624 = vunpack.c.h.b16 %v441
    %v625 = vunpack.c.l.b16 %v442
    %v626 = vunpack.c.h.b16 %v442
    %v627 = vunpack.c.l.b16 %v443
    %v628 = vunpack.c.h.b16 %v443
    %v629 = vunpack.c.l.b16 %v444
    %v630 = vunpack.c.h.b16 %v444
    %v631 = vunpack.c.l.b16 %v445
    %v632 = vunpack.c.h.b16 %v445
    %v633 = vunpack.c.l.b16 %v446
    %v634 = vunpack.c.h.b16 %v446
    %v635 = vunpack.c.l.b16 %v447
    %v636 = vunpack.c.h.b16 %v447
    %v637 = vunpack.c.l.b16 %v448
    %v638 = vunpack.c.h.b16 %v448
    %v639 = vunpack.c.l.b16 %v449
    %v640 = vunpack.c.h.b16 %v449
    %v641 = vunpack.c.l.b16 %v450
    %v642 = vunpack.c.h.b16 %v450
    %v643 = vunpack.c.l.b16 %v451
    %v644 = vunpack.c.h.b16 %v451
    %v645 = vunpack.c.l.b16 %v452
    %v646 = vunpack.c.h.b16 %v452
    %v647 = vunpack.c.l.b16 %v453
    %v648 = vunpack.c.h.b16 %v453
    %v649 = vunpack.c.l.b16 %v454
    %v650 = vunpack.c.h.b16 %v454
    %v651 = vunpack.c.l.b16 %v455
    %v652 = vunpack.c.h.b16 %v455
    %v653 = vunpack.c.l.b16 %v456
    %v654 = vunpack.c.h.b16 %v456
    %v655 = vunpack.c.l.b16 %v457
    %v656 = vunpack.c.h.b16 %v457
    %v657 = vunpack.c.l.b16 %v458
    %v658 = vunpack.c.h.b16 %v458
    %v659 = vunpack.c.l.b16 %v459
    %v660 = vunpack.c.h.b16 %v459
    %v661 = vunpack.c.l.b16 %v460
    %v662 = vunpack.c.h.b16 %v460
    %v663 = vunpack.c.l.b16 %v461
    %v664 = vunpack.c.h.b16 %v461
    %v665 = vunpack.c.l.b16 %v462
    %v666 = vunpack.c.h.b16 %v462
    %v667 = vunpack.c.l.b16 %v463
    %v668 = vunpack.c.h.b16 %v463
    %v669 = vunpack.c.l.b16 %v464
    %v670 = vunpack.c.h.b16 %v464
    %v671 = vunpack.c.l.b16 %v465
    %v672 = vunpack.c.h.b16 %v465
    %v673 = vunpack.c.l.b16 %v466
    %v674 = vunpack.c.h.b16 %v466
    %v675 = vunpack.c.l.b16 %v467
    %v676 = vunpack.c.h.b16 %v467
    %v677 = vunpack.c.l.b16 %v468
    %v678 = vunpack.c.h.b16 %v468
    %v679 = vunpack.c.l.b16 %v469
    %v680 = vunpack.c.h.b16 %v469
    %v681 = vunpack.c.l.b16 %v470
    %v682 = vunpack.c.h.b16 %v470
    %v683 = vunpack.c.l.b16 %v471
    %v684 = vunpack.c.h.b16 %v471
    %v685 = vunpack.c.l.b16 %v472
    %v686 = vunpack.c.h.b16 %v472
    %v687 = vpack.c.b16 %v563, %v559
    %v688 = vpack.c.b16 %v564, %v560
    %v689 = vpack.c.b16 %v565, %v561
    %v690 = vpack.c.b16 %v566, %v562
    %v691 = vpack.c.b16 %v571, %v567
    %v692 = vpack.c.b16 %v572, %v568
    %v693 = vpack.c.b16 %v573, %v569
    %v694 = vpack.c.b16 %v574, %v570
    %v695 = vpack.c.b16 %v579, %v575
    %v696 = vpack.c.b16 %v580, %v576
    %v697 = vpack.c.b16 %v581, %v577
    %v698 = vpack.c.b16 %v582, %v578
    %v699 = vpack.c.b16 %v587, %v583
    %v700 = vpack.c.b16 %v588, %v584
    %v701 = vpack.c.b16 %v589, %v585
    %v702 = vpack.c.b16 %v590, %v586
    %v703 = vpack.c.b16 %v595, %v591
    %v704 = vpack.c.b16 %v596, %v592
    %v705 = vpack.c.b16 %v597, %v593
    %v706 = vpack.c.b16 %v598, %v594
    %v707 = vpack.c.b16 %v603, %v599
    %v708 = vpack.c.b16 %v604, %v600
    %v709 = vpack.c.b16 %v605, %v601
    %v710 = vpack.c.b16 %v606, %v602
    %v711 = vpack.c.b16 %v611, %v607
    %v712 = vpack.c.b16 %v612, %v608
    %v713 = vpack.c.b16 %v613, %v609
    %v714 = vpack.c.b16 %v614, %v610
    %v715 = vpack.c.b16 %v619, %v615
    %v716 = vpack.c.b16 %v620, %v616
    %v717 = vpack.c.b16 %v621, %v617
    %v718 = vpack.c.b16 %v622, %v618
    %v719 = vpack.c.b16 %v627, %v623
    %v720 = vpack.c.b16 %v628, %v624
    %v721 = vpack.c.b16 %v629, %v625
    %v722 = vpack.c.b16 %v630, %v626
    %v723 = vpack.c.b16 %v635, %v631
    %v724 = vpack.c.b16 %v636, %v632
    %v725 = vpack.c.b16 %v637, %v633
    %v726 = vpack.c.b16 %v638, %v634
    %v727 = vpack.c.b16 %v643, %v639
    %v728 = vpack.c.b16 %v644, %v640
    %v729 = vpack.c.b16 %v645, %v641
    %v730 = vpack.c.b16 %v646, %v642
    %v731 = vpack.c.b16 %v651, %v647
    %v732 = vpack.c.b16 %v652, %v648
    %v733 = vpack.c.b16 %v653, %v649
    %v734 = vpack.c.b16 %v654, %v650
    %v735 = vpack.c.b16 %v659, %v655
    %v736 = vpack.c.b16 %v660, %v656
    %v737 = vpack.c.b16 %v661, %v657
    %v738 = vpack.c.b16 %v662, %v658
    %v739 = vpack.c.b16 %v667, %v663
    %v740 = vpack.c.b16 %v668, %v664
    %v741 = vpack.c.b16 %v669, %v665
    %v742 = vpack.c.b16 %v670, %v666
    %v743 = vpack.c.b16 %v675, %v671
    %v744 = vpack.c.b16 %v676, %v672
    %v745 = vpack.c.b16 %v677, %v673
    %v746 = vpack.c.b16 %v678, %v674
    %v747 = vpack.c.b16 %v683, %v679
    %v748 = vpack.c.b16 %v684, %v680
    %v749 = vpack.c.b16 %v685, %v681
    %v750 = vpack.c.b16 %v686, %v682
    %815 = vmatprep.subr.bf16.mxu0 %v688
    %816 = vmatpush1.bf16.msra.mxu0 %v687
    %817 = vmatprep.subr.bf16.mxu0 %v692
    %818 = vmatpush1.bf16.msra.mxu0 %v691
    %819 = vmatprep.subr.bf16.mxu0 %v696
    %820 = vmatpush1.bf16.msra.mxu0 %v695
    %821 = vmatprep.subr.bf16.mxu0 %v700
    %822 = vmatpush1.bf16.msra.mxu0 %v699
    %823 = vmatprep.subr.bf16.mxu0 %v704
    %824 = vmatpush1.bf16.msra.mxu0 %v703
    %825 = vmatprep.subr.bf16.mxu0 %v708
    %826 = vmatpush1.bf16.msra.mxu0 %v707
    %827 = vmatprep.subr.bf16.mxu0 %v712
    %828 = vmatpush1.bf16.msra.mxu0 %v711
    %829 = vmatprep.subr.bf16.mxu0 %v716
    %830 = vmatpush1.bf16.msra.mxu0 %v715
    %831 = vmatprep.subr.bf16.mxu0 %v720
    %832 = vmatpush1.bf16.msra.mxu0 %v719
    %833 = vmatprep.subr.bf16.mxu0 %v724
    %834 = vmatpush1.bf16.msra.mxu0 %v723
    %835 = vmatprep.subr.bf16.mxu0 %v728
    %836 = vmatpush1.bf16.msra.mxu0 %v727
    %837 = vmatprep.subr.bf16.mxu0 %v732
    %838 = vmatpush1.bf16.msra.mxu0 %v731
    %839 = vmatprep.subr.bf16.mxu0 %v736
    %840 = vmatpush1.bf16.msra.mxu0 %v735
    %841 = vmatprep.subr.bf16.mxu0 %v740
    %842 = vmatpush1.bf16.msra.mxu0 %v739
    %843 = vmatprep.subr.bf16.mxu0 %v744
    %844 = vmatpush1.bf16.msra.mxu0 %v743
    %845 = vmatprep.subr.bf16.mxu0 %v748
    %846 = vmatpush1.bf16.msra.mxu0 %v747
    %847 = vmatprep.mubr.bf16.mxu0 %v408
    %848 = vmatmul.mubr.bf16.gmra.mrb[0].mxu0 %v407
    %v849 = vpop.f32.mrb[0].mxu0
    %v850 = vadd.f32 %v478, %v849
    %v851 = vpop.f32.mrb[0].mxu0
    %v852 = vadd.f32 %v482, %v851
    %v853 = vpop.f32.mrb[0].mxu0
    %v854 = vpop.f32.mrb[0].mxu0
    %855 = vdwg.mxu0
    %856 = vmatprep.subr.bf16.mxu0 %v690
    %857 = vmatpush1.bf16.msra.mxu0 %v689
    %858 = vmatprep.subr.bf16.mxu0 %v694
    %859 = vmatpush1.bf16.msra.mxu0 %v693
    %860 = vmatprep.subr.bf16.mxu0 %v698
    %861 = vmatpush1.bf16.msra.mxu0 %v697
    %862 = vmatprep.subr.bf16.mxu0 %v702
    %863 = vmatpush1.bf16.msra.mxu0 %v701
    %864 = vmatprep.subr.bf16.mxu0 %v706
    %865 = vmatpush1.bf16.msra.mxu0 %v705
    %866 = vmatprep.subr.bf16.mxu0 %v710
    %867 = vmatpush1.bf16.msra.mxu0 %v709
    %868 = vmatprep.subr.bf16.mxu0 %v714
    %869 = vmatpush1.bf16.msra.mxu0 %v713
    %870 = vmatprep.subr.bf16.mxu0 %v718
    %871 = vmatpush1.bf16.msra.mxu0 %v717
    %872 = vmatprep.subr.bf16.mxu0 %v722
    %873 = vmatpush1.bf16.msra.mxu0 %v721
    %874 = vmatprep.subr.bf16.mxu0 %v726
    %875 = vmatpush1.bf16.msra.mxu0 %v725
    %876 = vmatprep.subr.bf16.mxu0 %v730
    %877 = vmatpush1.bf16.msra.mxu0 %v729
    %878 = vmatprep.subr.bf16.mxu0 %v734
    %879 = vmatpush1.bf16.msra.mxu0 %v733
    %880 = vmatprep.subr.bf16.mxu0 %v738
    %881 = vmatpush1.bf16.msra.mxu0 %v737
    %882 = vmatprep.subr.bf16.mxu0 %v742
    %883 = vmatpush1.bf16.msra.mxu0 %v741
    %884 = vmatprep.subr.bf16.mxu0 %v746
    %885 = vmatpush1.bf16.msra.mxu0 %v745
    %886 = vmatprep.subr.bf16.mxu0 %v750
    %887 = vmatpush1.bf16.msra.mxu0 %v749
    %888 = vmatprep.mubr.bf16.mxu0 %v408
    %889 = vmatmul.mubr.bf16.gmra.mrb[0].mxu0 %v407
    %v890 = vpop.f32.mrb[0].mxu0
    %v891 = vadd.f32 %v486, %v890
    %v892 = vpop.f32.mrb[0].mxu0
    %v893 = vadd.f32 %v490, %v892
    %v894 = vpop.f32.mrb[0].mxu0
    %v895 = vpop.f32.mrb[0].mxu0
    %896 = vdwg.mxu0
    %v897 = vmax.f32 %v850, 0.0
    %v898 = vmax.f32 %v852, 0.0
    %v899 = vmax.f32 %v891, 0.0
    %v900 = vmax.f32 %v893, 0.0
    %v901 = vpack.c.bf16 %v897, %v897
    %v902 = vpack.c.bf16 %v898, %v898
    %v903 = vpack.c.bf16 %v899, %v899
    %v904 = vpack.c.bf16 %v900, %v900
    %v905 = vld [vmem:[#allocation13] sm:$0xff]
    %v906 = vld [vmem:[#allocation13 + $0x8] sm:$0xff]
    %v907 = vld [vmem:[#allocation13 + $0x10] sm:$0xff]
    %v908 = vld [vmem:[#allocation13 + $0x18] sm:$0xff]
    %v909 = vld [vmem:[#allocation13 + $0x20] sm:$0xff]
    %v910 = vld [vmem:[#allocation13 + $0x28] sm:$0xff]
    %v911 = vld [vmem:[#allocation13 + $0x30] sm:$0xff]
    %v912 = vld [vmem:[#allocation13 + $0x38] sm:$0xff]
    %v913 = vld [vmem:[#allocation13 + $0x40] sm:$0xff]
    %v914 = vld [vmem:[#allocation13 + $0x48] sm:$0xff]
    %v915 = vld [vmem:[#allocation13 + $0x50] sm:$0xff]
    %v916 = vld [vmem:[#allocation13 + $0x58] sm:$0xff]
    %v917 = vld [vmem:[#allocation13 + $0x60] sm:$0xff]
    %v918 = vld [vmem:[#allocation13 + $0x68] sm:$0xff]
    %v919 = vld [vmem:[#allocation13 + $0x70] sm:$0xff]
    %v920 = vld [vmem:[#allocation13 + $0x78] sm:$0xff]
    %v921 = vld [vmem:[#allocation13 + $0x80] sm:$0xff]
    %v922 = vld [vmem:[#allocation13 + $0x88] sm:$0xff]
    %v923 = vld [vmem:[#allocation13 + $0x90] sm:$0xff]
    %v924 = vld [vmem:[#allocation13 + $0x98] sm:$0xff]
    %v925 = vld [vmem:[#allocation13 + $0xa0] sm:$0xff]
    %v926 = vld [vmem:[#allocation13 + $0xa8] sm:$0xff]
    %v927 = vld [vmem:[#allocation13 + $0xb0] sm:$0xff]
    %v928 = vld [vmem:[#allocation13 + $0xb8] sm:$0xff]
    %v929 = vld [vmem:[#allocation13 + $0xc0] sm:$0xff]
    %v930 = vld [vmem:[#allocation13 + $0xc8] sm:$0xff]
    %v931 = vld [vmem:[#allocation13 + $0xd0] sm:$0xff]
    %v932 = vld [vmem:[#allocation13 + $0xd8] sm:$0xff]
    %v933 = vld [vmem:[#allocation13 + $0xe0] sm:$0xff]
    %v934 = vld [vmem:[#allocation13 + $0xe8] sm:$0xff]
    %v935 = vld [vmem:[#allocation13 + $0xf0] sm:$0xff]
    %v936 = vld [vmem:[#allocation13 + $0xf8] sm:$0xff]
    %v937 = vld [vmem:[#allocation13 + $0x100] sm:$0xff]
    %v938 = vld [vmem:[#allocation13 + $0x108] sm:$0xff]
    %v939 = vld [vmem:[#allocation13 + $0x110] sm:$0xff]
    %v940 = vld [vmem:[#allocation13 + $0x118] sm:$0xff]
    %v941 = vld [vmem:[#allocation13 + $0x120] sm:$0xff]
    %v942 = vld [vmem:[#allocation13 + $0x128] sm:$0xff]
    %v943 = vld [vmem:[#allocation13 + $0x130] sm:$0xff]
    %v944 = vld [vmem:[#allocation13 + $0x138] sm:$0xff]
    %v945 = vld [vmem:[#allocation13 + $0x140] sm:$0xff]
    %v946 = vld [vmem:[#allocation13 + $0x148] sm:$0xff]
    %v947 = vld [vmem:[#allocation13 + $0x150] sm:$0xff]
    %v948 = vld [vmem:[#allocation13 + $0x158] sm:$0xff]
    %v949 = vld [vmem:[#allocation13 + $0x160] sm:$0xff]
    %v950 = vld [vmem:[#allocation13 + $0x168] sm:$0xff]
    %v951 = vld [vmem:[#allocation13 + $0x170] sm:$0xff]
    %v952 = vld [vmem:[#allocation13 + $0x178] sm:$0xff]
    %v953 = vld [vmem:[#allocation13 + $0x180] sm:$0xff]
    %v954 = vld [vmem:[#allocation13 + $0x188] sm:$0xff]
    %v955 = vld [vmem:[#allocation13 + $0x190] sm:$0xff]
    %v956 = vld [vmem:[#allocation13 + $0x198] sm:$0xff]
    %v957 = vld [vmem:[#allocation13 + $0x1a0] sm:$0xff]
    %v958 = vld [vmem:[#allocation13 + $0x1a8] sm:$0xff]
    %v959 = vld [vmem:[#allocation13 + $0x1b0] sm:$0xff]
    %v960 = vld [vmem:[#allocation13 + $0x1b8] sm:$0xff]
    %v961 = vld [vmem:[#allocation13 + $0x1c0] sm:$0xff]
    %v962 = vld [vmem:[#allocation13 + $0x1c8] sm:$0xff]
    %v963 = vld [vmem:[#allocation13 + $0x1d0] sm:$0xff]
    %v964 = vld [vmem:[#allocation13 + $0x1d8] sm:$0xff]
    %v965 = vld [vmem:[#allocation13 + $0x1e0] sm:$0xff]
    %v966 = vld [vmem:[#allocation13 + $0x1e8] sm:$0xff]
    %v967 = vld [vmem:[#allocation13 + $0x1f0] sm:$0xff]
    %v968 = vld [vmem:[#allocation13 + $0x1f8] sm:$0xff]
    %v969 = vld [vmem:[#allocation13 + $0x200] sm:$0xff]
    %v970 = vld [vmem:[#allocation13 + $0x208] sm:$0xff]
    %v971 = vld [vmem:[#allocation13 + $0x210] sm:$0xff]
    %v972 = vld [vmem:[#allocation13 + $0x218] sm:$0xff]
    %v973 = vld [vmem:[#allocation13 + $0x220] sm:$0xff]
    %v974 = vld [vmem:[#allocation13 + $0x228] sm:$0xff]
    %v975 = vld [vmem:[#allocation13 + $0x230] sm:$0xff]
    %v976 = vld [vmem:[#allocation13 + $0x238] sm:$0xff]
    %v977 = vld [vmem:[#allocation13 + $0x240] sm:$0xff]
    %v978 = vld [vmem:[#allocation13 + $0x248] sm:$0xff]
    %v979 = vld [vmem:[#allocation13 + $0x250] sm:$0xff]
    %v980 = vld [vmem:[#allocation13 + $0x258] sm:$0xff]
    %v981 = vld [vmem:[#allocation13 + $0x260] sm:$0xff]
    %v982 = vld [vmem:[#allocation13 + $0x268] sm:$0xff]
    %v983 = vld [vmem:[#allocation13 + $0x270] sm:$0xff]
    %v984 = vld [vmem:[#allocation13 + $0x278] sm:$0xff]
    %v985 = vld [vmem:[#allocation13 + $0x280] sm:$0xff]
    %v986 = vld [vmem:[#allocation13 + $0x288] sm:$0xff]
    %v987 = vld [vmem:[#allocation13 + $0x290] sm:$0xff]
    %v988 = vld [vmem:[#allocation13 + $0x298] sm:$0xff]
    %v989 = vld [vmem:[#allocation13 + $0x2a0] sm:$0xff]
    %v990 = vld [vmem:[#allocation13 + $0x2a8] sm:$0xff]
    %v991 = vld [vmem:[#allocation13 + $0x2b0] sm:$0xff]
    %v992 = vld [vmem:[#allocation13 + $0x2b8] sm:$0xff]
    %v993 = vld [vmem:[#allocation13 + $0x2c0] sm:$0xff]
    %v994 = vld [vmem:[#allocation13 + $0x2c8] sm:$0xff]
    %v995 = vld [vmem:[#allocation13 + $0x2d0] sm:$0xff]
    %v996 = vld [vmem:[#allocation13 + $0x2d8] sm:$0xff]
    %v997 = vld [vmem:[#allocation13 + $0x2e0] sm:$0xff]
    %v998 = vld [vmem:[#allocation13 + $0x2e8] sm:$0xff]
    %v999 = vld [vmem:[#allocation13 + $0x2f0] sm:$0xff]
    %v1000 = vld [vmem:[#allocation13 + $0x2f8] sm:$0xff]
    %v1001 = vld [vmem:[#allocation13 + $0x300] sm:$0xff]
    %v1002 = vld [vmem:[#allocation13 + $0x308] sm:$0xff]
    %v1003 = vld [vmem:[#allocation13 + $0x310] sm:$0xff]
    %v1004 = vld [vmem:[#allocation13 + $0x318] sm:$0xff]
    %v1005 = vld [vmem:[#allocation13 + $0x320] sm:$0xff]
    %v1006 = vld [vmem:[#allocation13 + $0x328] sm:$0xff]
    %v1007 = vld [vmem:[#allocation13 + $0x330] sm:$0xff]
    %v1008 = vld [vmem:[#allocation13 + $0x338] sm:$0xff]
    %v1009 = vld [vmem:[#allocation13 + $0x340] sm:$0xff]
    %v1010 = vld [vmem:[#allocation13 + $0x348] sm:$0xff]
    %v1011 = vld [vmem:[#allocation13 + $0x350] sm:$0xff]
    %v1012 = vld [vmem:[#allocation13 + $0x358] sm:$0xff]
    %v1013 = vld [vmem:[#allocation13 + $0x360] sm:$0xff]
    %v1014 = vld [vmem:[#allocation13 + $0x368] sm:$0xff]
    %v1015 = vld [vmem:[#allocation13 + $0x370] sm:$0xff]
    %v1016 = vld [vmem:[#allocation13 + $0x378] sm:$0xff]
    %v1017 = vld [vmem:[#allocation13 + $0x380] sm:$0xff]
    %v1018 = vld [vmem:[#allocation13 + $0x388] sm:$0xff]
    %v1019 = vld [vmem:[#allocation13 + $0x390] sm:$0xff]
    %v1020 = vld [vmem:[#allocation13 + $0x398] sm:$0xff]
    %v1021 = vld [vmem:[#allocation13 + $0x3a0] sm:$0xff]
    %v1022 = vld [vmem:[#allocation13 + $0x3a8] sm:$0xff]
    %v1023 = vld [vmem:[#allocation13 + $0x3b0] sm:$0xff]
    %v1024 = vld [vmem:[#allocation13 + $0x3b8] sm:$0xff]
    %v1025 = vld [vmem:[#allocation13 + $0x3c0] sm:$0xff]
    %v1026 = vld [vmem:[#allocation13 + $0x3c8] sm:$0xff]
    %v1027 = vld [vmem:[#allocation13 + $0x3d0] sm:$0xff]
    %v1028 = vld [vmem:[#allocation13 + $0x3d8] sm:$0xff]
    %v1029 = vld [vmem:[#allocation13 + $0x3e0] sm:$0xff]
    %v1030 = vld [vmem:[#allocation13 + $0x3e8] sm:$0xff]
    %v1031 = vld [vmem:[#allocation13 + $0x3f0] sm:$0xff]
    %v1032 = vld [vmem:[#allocation13 + $0x3f8] sm:$0xff]
    %v1033 = vld [vmem:[#allocation13 + $0x400] sm:$0xff]
    %v1034 = vld [vmem:[#allocation13 + $0x408] sm:$0xff]
    %v1035 = vld [vmem:[#allocation13 + $0x410] sm:$0xff]
    %v1036 = vld [vmem:[#allocation13 + $0x418] sm:$0xff]
    %v1037 = vld [vmem:[#allocation13 + $0x420] sm:$0xff]
    %v1038 = vld [vmem:[#allocation13 + $0x428] sm:$0xff]
    %v1039 = vld [vmem:[#allocation13 + $0x430] sm:$0xff]
    %v1040 = vld [vmem:[#allocation13 + $0x438] sm:$0xff]
    %v1041 = vld [vmem:[#allocation13 + $0x440] sm:$0xff]
    %v1042 = vld [vmem:[#allocation13 + $0x448] sm:$0xff]
    %v1043 = vld [vmem:[#allocation13 + $0x450] sm:$0xff]
    %v1044 = vld [vmem:[#allocation13 + $0x458] sm:$0xff]
    %v1045 = vld [vmem:[#allocation13 + $0x460] sm:$0xff]
    %v1046 = vld [vmem:[#allocation13 + $0x468] sm:$0xff]
    %v1047 = vld [vmem:[#allocation13 + $0x470] sm:$0xff]
    %v1048 = vld [vmem:[#allocation13 + $0x478] sm:$0xff]
    %v1049 = vld [vmem:[#allocation13 + $0x480] sm:$0xff]
    %v1050 = vld [vmem:[#allocation13 + $0x488] sm:$0xff]
    %v1051 = vld [vmem:[#allocation13 + $0x490] sm:$0xff]
    %v1052 = vld [vmem:[#allocation13 + $0x498] sm:$0xff]
    %v1053 = vld [vmem:[#allocation13 + $0x4a0] sm:$0xff]
    %v1054 = vld [vmem:[#allocation13 + $0x4a8] sm:$0xff]
    %v1055 = vld [vmem:[#allocation13 + $0x4b0] sm:$0xff]
    %v1056 = vld [vmem:[#allocation13 + $0x4b8] sm:$0xff]
    %v1057 = vld [vmem:[#allocation13 + $0x4c0] sm:$0xff]
    %v1058 = vld [vmem:[#allocation13 + $0x4c8] sm:$0xff]
    %v1059 = vld [vmem:[#allocation13 + $0x4d0] sm:$0xff]
    %v1060 = vld [vmem:[#allocation13 + $0x4d8] sm:$0xff]
    %v1061 = vld [vmem:[#allocation13 + $0x4e0] sm:$0xff]
    %v1062 = vld [vmem:[#allocation13 + $0x4e8] sm:$0xff]
    %v1063 = vld [vmem:[#allocation13 + $0x4f0] sm:$0xff]
    %v1064 = vld [vmem:[#allocation13 + $0x4f8] sm:$0xff]
    %v1065 = vld [vmem:[#allocation13 + $0x500] sm:$0xff]
    %v1066 = vld [vmem:[#allocation13 + $0x508] sm:$0xff]
    %v1067 = vld [vmem:[#allocation13 + $0x510] sm:$0xff]
    %v1068 = vld [vmem:[#allocation13 + $0x518] sm:$0xff]
    %v1069 = vld [vmem:[#allocation13 + $0x520] sm:$0xff]
    %v1070 = vld [vmem:[#allocation13 + $0x528] sm:$0xff]
    %v1071 = vld [vmem:[#allocation13 + $0x530] sm:$0xff]
    %v1072 = vld [vmem:[#allocation13 + $0x538] sm:$0xff]
    %v1073 = vld [vmem:[#allocation13 + $0x540] sm:$0xff]
    %v1074 = vld [vmem:[#allocation13 + $0x548] sm:$0xff]
    %v1075 = vld [vmem:[#allocation13 + $0x550] sm:$0xff]
    %v1076 = vld [vmem:[#allocation13 + $0x558] sm:$0xff]
    %v1077 = vld [vmem:[#allocation13 + $0x560] sm:$0xff]
    %v1078 = vld [vmem:[#allocation13 + $0x568] sm:$0xff]
    %v1079 = vld [vmem:[#allocation13 + $0x570] sm:$0xff]
    %v1080 = vld [vmem:[#allocation13 + $0x578] sm:$0xff]
    %v1081 = vld [vmem:[#allocation13 + $0x580] sm:$0xff]
    %v1082 = vld [vmem:[#allocation13 + $0x588] sm:$0xff]
    %v1083 = vld [vmem:[#allocation13 + $0x590] sm:$0xff]
    %v1084 = vld [vmem:[#allocation13 + $0x598] sm:$0xff]
    %v1085 = vld [vmem:[#allocation13 + $0x5a0] sm:$0xff]
    %v1086 = vld [vmem:[#allocation13 + $0x5a8] sm:$0xff]
    %v1087 = vld [vmem:[#allocation13 + $0x5b0] sm:$0xff]
    %v1088 = vld [vmem:[#allocation13 + $0x5b8] sm:$0xff]
    %v1089 = vld [vmem:[#allocation13 + $0x5c0] sm:$0xff]
    %v1090 = vld [vmem:[#allocation13 + $0x5c8] sm:$0xff]
    %v1091 = vld [vmem:[#allocation13 + $0x5d0] sm:$0xff]
    %v1092 = vld [vmem:[#allocation13 + $0x5d8] sm:$0xff]
    %v1093 = vld [vmem:[#allocation13 + $0x5e0] sm:$0xff]
    %v1094 = vld [vmem:[#allocation13 + $0x5e8] sm:$0xff]
    %v1095 = vld [vmem:[#allocation13 + $0x5f0] sm:$0xff]
    %v1096 = vld [vmem:[#allocation13 + $0x5f8] sm:$0xff]
    %v1097 = vld [vmem:[#allocation13 + $0x600] sm:$0xff]
    %v1098 = vld [vmem:[#allocation13 + $0x608] sm:$0xff]
    %v1099 = vld [vmem:[#allocation13 + $0x610] sm:$0xff]
    %v1100 = vld [vmem:[#allocation13 + $0x618] sm:$0xff]
    %v1101 = vld [vmem:[#allocation13 + $0x620] sm:$0xff]
    %v1102 = vld [vmem:[#allocation13 + $0x628] sm:$0xff]
    %v1103 = vld [vmem:[#allocation13 + $0x630] sm:$0xff]
    %v1104 = vld [vmem:[#allocation13 + $0x638] sm:$0xff]
    %v1105 = vld [vmem:[#allocation13 + $0x640] sm:$0xff]
    %v1106 = vld [vmem:[#allocation13 + $0x648] sm:$0xff]
    %v1107 = vld [vmem:[#allocation13 + $0x650] sm:$0xff]
    %v1108 = vld [vmem:[#allocation13 + $0x658] sm:$0xff]
    %v1109 = vld [vmem:[#allocation13 + $0x660] sm:$0xff]
    %v1110 = vld [vmem:[#allocation13 + $0x668] sm:$0xff]
    %v1111 = vld [vmem:[#allocation13 + $0x670] sm:$0xff]
    %v1112 = vld [vmem:[#allocation13 + $0x678] sm:$0xff]
    %v1113 = vld [vmem:[#allocation13 + $0x680] sm:$0xff]
    %v1114 = vld [vmem:[#allocation13 + $0x688] sm:$0xff]
    %v1115 = vld [vmem:[#allocation13 + $0x690] sm:$0xff]
    %v1116 = vld [vmem:[#allocation13 + $0x698] sm:$0xff]
    %v1117 = vld [vmem:[#allocation13 + $0x6a0] sm:$0xff]
    %v1118 = vld [vmem:[#allocation13 + $0x6a8] sm:$0xff]
    %v1119 = vld [vmem:[#allocation13 + $0x6b0] sm:$0xff]
    %v1120 = vld [vmem:[#allocation13 + $0x6b8] sm:$0xff]
    %v1121 = vld [vmem:[#allocation13 + $0x6c0] sm:$0xff]
    %v1122 = vld [vmem:[#allocation13 + $0x6c8] sm:$0xff]
    %v1123 = vld [vmem:[#allocation13 + $0x6d0] sm:$0xff]
    %v1124 = vld [vmem:[#allocation13 + $0x6d8] sm:$0xff]
    %v1125 = vld [vmem:[#allocation13 + $0x6e0] sm:$0xff]
    %v1126 = vld [vmem:[#allocation13 + $0x6e8] sm:$0xff]
    %v1127 = vld [vmem:[#allocation13 + $0x6f0] sm:$0xff]
    %v1128 = vld [vmem:[#allocation13 + $0x6f8] sm:$0xff]
    %v1129 = vld [vmem:[#allocation13 + $0x700] sm:$0xff]
    %v1130 = vld [vmem:[#allocation13 + $0x708] sm:$0xff]
    %v1131 = vld [vmem:[#allocation13 + $0x710] sm:$0xff]
    %v1132 = vld [vmem:[#allocation13 + $0x718] sm:$0xff]
    %v1133 = vld [vmem:[#allocation13 + $0x720] sm:$0xff]
    %v1134 = vld [vmem:[#allocation13 + $0x728] sm:$0xff]
    %v1135 = vld [vmem:[#allocation13 + $0x730] sm:$0xff]
    %v1136 = vld [vmem:[#allocation13 + $0x738] sm:$0xff]
    %v1137 = vld [vmem:[#allocation13 + $0x740] sm:$0xff]
    %v1138 = vld [vmem:[#allocation13 + $0x748] sm:$0xff]
    %v1139 = vld [vmem:[#allocation13 + $0x750] sm:$0xff]
    %v1140 = vld [vmem:[#allocation13 + $0x758] sm:$0xff]
    %v1141 = vld [vmem:[#allocation13 + $0x760] sm:$0xff]
    %v1142 = vld [vmem:[#allocation13 + $0x768] sm:$0xff]
    %v1143 = vld [vmem:[#allocation13 + $0x770] sm:$0xff]
    %v1144 = vld [vmem:[#allocation13 + $0x778] sm:$0xff]
    %v1145 = vld [vmem:[#allocation13 + $0x780] sm:$0xff]
    %v1146 = vld [vmem:[#allocation13 + $0x788] sm:$0xff]
    %v1147 = vld [vmem:[#allocation13 + $0x790] sm:$0xff]
    %v1148 = vld [vmem:[#allocation13 + $0x798] sm:$0xff]
    %v1149 = vld [vmem:[#allocation13 + $0x7a0] sm:$0xff]
    %v1150 = vld [vmem:[#allocation13 + $0x7a8] sm:$0xff]
    %v1151 = vld [vmem:[#allocation13 + $0x7b0] sm:$0xff]
    %v1152 = vld [vmem:[#allocation13 + $0x7b8] sm:$0xff]
    %v1153 = vld [vmem:[#allocation13 + $0x7c0] sm:$0xff]
    %v1154 = vld [vmem:[#allocation13 + $0x7c8] sm:$0xff]
    %v1155 = vld [vmem:[#allocation13 + $0x7d0] sm:$0xff]
    %v1156 = vld [vmem:[#allocation13 + $0x7d8] sm:$0xff]
    %v1157 = vld [vmem:[#allocation13 + $0x7e0] sm:$0xff]
    %v1158 = vld [vmem:[#allocation13 + $0x7e8] sm:$0xff]
    %v1159 = vld [vmem:[#allocation13 + $0x7f0] sm:$0xff]
    %v1160 = vld [vmem:[#allocation13 + $0x7f8] sm:$0xff]
    %v1161 = vld [vmem:[#allocation15] sm:$0xff]
    %v1163 = vlaneseq
    %v1164 = vshrl.u32 %v1163, 7
    %v1165 = vsub.s32 0, %v1164
    %v1166 = vrot.slane %v1161, %v1165
    %v1167 = vlaneseq
    %v1168 = vshrl.u32 %v1167, 7
    %v1169 = vsub.s32 1, %v1168
    %v1170 = vrot.slane %v1161, %v1169
    %v1171 = vlaneseq
    %v1172 = vshrl.u32 %v1171, 7
    %v1173 = vsub.s32 2, %v1172
    %v1174 = vrot.slane %v1161, %v1173
    %v1175 = vlaneseq
    %v1176 = vshrl.u32 %v1175, 7
    %v1177 = vsub.s32 3, %v1176
    %v1178 = vrot.slane %v1161, %v1177
    %v1179 = vlaneseq
    %v1180 = vshrl.u32 %v1179, 7
    %v1181 = vsub.s32 4, %v1180
    %v1182 = vrot.slane %v1161, %v1181
    %v1183 = vlaneseq
    %v1184 = vshrl.u32 %v1183, 7
    %v1185 = vsub.s32 5, %v1184
    %v1186 = vrot.slane %v1161, %v1185
    %v1187 = vlaneseq
    %v1188 = vshrl.u32 %v1187, 7
    %v1189 = vsub.s32 6, %v1188
    %v1190 = vrot.slane %v1161, %v1189
    %v1191 = vlaneseq
    %v1192 = vshrl.u32 %v1191, 7
    %v1193 = vsub.s32 7, %v1192
    %v1194 = vrot.slane %v1161, %v1193
    %v1459 = vunpack.c.l.b16 %v905
    %v1460 = vunpack.c.h.b16 %v905
    %v1461 = vunpack.c.l.b16 %v906
    %v1462 = vunpack.c.h.b16 %v906
    %v1463 = vunpack.c.l.b16 %v907
    %v1464 = vunpack.c.h.b16 %v907
    %v1465 = vunpack.c.l.b16 %v908
    %v1466 = vunpack.c.h.b16 %v908
    %v1467 = vunpack.c.l.b16 %v909
    %v1468 = vunpack.c.h.b16 %v909
    %v1469 = vunpack.c.l.b16 %v910
    %v1470 = vunpack.c.h.b16 %v910
    %v1471 = vunpack.c.l.b16 %v911
    %v1472 = vunpack.c.h.b16 %v911
    %v1473 = vunpack.c.l.b16 %v912
    %v1474 = vunpack.c.h.b16 %v912
    %v1475 = vunpack.c.l.b16 %v913
    %v1476 = vunpack.c.h.b16 %v913
    %v1477 = vunpack.c.l.b16 %v914
    %v1478 = vunpack.c.h.b16 %v914
    %v1479 = vunpack.c.l.b16 %v915
    %v1480 = vunpack.c.h.b16 %v915
    %v1481 = vunpack.c.l.b16 %v916
    %v1482 = vunpack.c.h.b16 %v916
    %v1483 = vunpack.c.l.b16 %v917
    %v1484 = vunpack.c.h.b16 %v917
    %v1485 = vunpack.c.l.b16 %v918
    %v1486 = vunpack.c.h.b16 %v918
    %v1487 = vunpack.c.l.b16 %v919
    %v1488 = vunpack.c.h.b16 %v919
    %v1489 = vunpack.c.l.b16 %v920
    %v1490 = vunpack.c.h.b16 %v920
    %v1491 = vunpack.c.l.b16 %v921
    %v1492 = vunpack.c.h.b16 %v921
    %v1493 = vunpack.c.l.b16 %v922
    %v1494 = vunpack.c.h.b16 %v922
    %v1495 = vunpack.c.l.b16 %v923
    %v1496 = vunpack.c.h.b16 %v923
    %v1497 = vunpack.c.l.b16 %v924
    %v1498 = vunpack.c.h.b16 %v924
    %v1499 = vunpack.c.l.b16 %v925
    %v1500 = vunpack.c.h.b16 %v925
    %v1501 = vunpack.c.l.b16 %v926
    %v1502 = vunpack.c.h.b16 %v926
    %v1503 = vunpack.c.l.b16 %v927
    %v1504 = vunpack.c.h.b16 %v927
    %v1505 = vunpack.c.l.b16 %v928
    %v1506 = vunpack.c.h.b16 %v928
    %v1507 = vunpack.c.l.b16 %v929
    %v1508 = vunpack.c.h.b16 %v929
    %v1509 = vunpack.c.l.b16 %v930
    %v1510 = vunpack.c.h.b16 %v930
    %v1511 = vunpack.c.l.b16 %v931
    %v1512 = vunpack.c.h.b16 %v931
    %v1513 = vunpack.c.l.b16 %v932
    %v1514 = vunpack.c.h.b16 %v932
    %v1515 = vunpack.c.l.b16 %v933
    %v1516 = vunpack.c.h.b16 %v933
    %v1517 = vunpack.c.l.b16 %v934
    %v1518 = vunpack.c.h.b16 %v934
    %v1519 = vunpack.c.l.b16 %v935
    %v1520 = vunpack.c.h.b16 %v935
    %v1521 = vunpack.c.l.b16 %v936
    %v1522 = vunpack.c.h.b16 %v936
    %v1523 = vunpack.c.l.b16 %v937
    %v1524 = vunpack.c.h.b16 %v937
    %v1525 = vunpack.c.l.b16 %v938
    %v1526 = vunpack.c.h.b16 %v938
    %v1527 = vunpack.c.l.b16 %v939
    %v1528 = vunpack.c.h.b16 %v939
    %v1529 = vunpack.c.l.b16 %v940
    %v1530 = vunpack.c.h.b16 %v940
    %v1531 = vunpack.c.l.b16 %v941
    %v1532 = vunpack.c.h.b16 %v941
    %v1533 = vunpack.c.l.b16 %v942
    %v1534 = vunpack.c.h.b16 %v942
    %v1535 = vunpack.c.l.b16 %v943
    %v1536 = vunpack.c.h.b16 %v943
    %v1537 = vunpack.c.l.b16 %v944
    %v1538 = vunpack.c.h.b16 %v944
    %v1539 = vunpack.c.l.b16 %v945
    %v1540 = vunpack.c.h.b16 %v945
    %v1541 = vunpack.c.l.b16 %v946
    %v1542 = vunpack.c.h.b16 %v946
    %v1543 = vunpack.c.l.b16 %v947
    %v1544 = vunpack.c.h.b16 %v947
    %v1545 = vunpack.c.l.b16 %v948
    %v1546 = vunpack.c.h.b16 %v948
    %v1547 = vunpack.c.l.b16 %v949
    %v1548 = vunpack.c.h.b16 %v949
    %v1549 = vunpack.c.l.b16 %v950
    %v1550 = vunpack.c.h.b16 %v950
    %v1551 = vunpack.c.l.b16 %v951
    %v1552 = vunpack.c.h.b16 %v951
    %v1553 = vunpack.c.l.b16 %v952
    %v1554 = vunpack.c.h.b16 %v952
    %v1555 = vunpack.c.l.b16 %v953
    %v1556 = vunpack.c.h.b16 %v953
    %v1557 = vunpack.c.l.b16 %v954
    %v1558 = vunpack.c.h.b16 %v954
    %v1559 = vunpack.c.l.b16 %v955
    %v1560 = vunpack.c.h.b16 %v955
    %v1561 = vunpack.c.l.b16 %v956
    %v1562 = vunpack.c.h.b16 %v956
    %v1563 = vunpack.c.l.b16 %v957
    %v1564 = vunpack.c.h.b16 %v957
    %v1565 = vunpack.c.l.b16 %v958
    %v1566 = vunpack.c.h.b16 %v958
    %v1567 = vunpack.c.l.b16 %v959
    %v1568 = vunpack.c.h.b16 %v959
    %v1569 = vunpack.c.l.b16 %v960
    %v1570 = vunpack.c.h.b16 %v960
    %v1571 = vunpack.c.l.b16 %v961
    %v1572 = vunpack.c.h.b16 %v961
    %v1573 = vunpack.c.l.b16 %v962
    %v1574 = vunpack.c.h.b16 %v962
    %v1575 = vunpack.c.l.b16 %v963
    %v1576 = vunpack.c.h.b16 %v963
    %v1577 = vunpack.c.l.b16 %v964
    %v1578 = vunpack.c.h.b16 %v964
    %v1579 = vunpack.c.l.b16 %v965
    %v1580 = vunpack.c.h.b16 %v965
    %v1581 = vunpack.c.l.b16 %v966
    %v1582 = vunpack.c.h.b16 %v966
    %v1583 = vunpack.c.l.b16 %v967
    %v1584 = vunpack.c.h.b16 %v967
    %v1585 = vunpack.c.l.b16 %v968
    %v1586 = vunpack.c.h.b16 %v968
    %v1587 = vunpack.c.l.b16 %v969
    %v1588 = vunpack.c.h.b16 %v969
    %v1589 = vunpack.c.l.b16 %v970
    %v1590 = vunpack.c.h.b16 %v970
    %v1591 = vunpack.c.l.b16 %v971
    %v1592 = vunpack.c.h.b16 %v971
    %v1593 = vunpack.c.l.b16 %v972
    %v1594 = vunpack.c.h.b16 %v972
    %v1595 = vunpack.c.l.b16 %v973
    %v1596 = vunpack.c.h.b16 %v973
    %v1597 = vunpack.c.l.b16 %v974
    %v1598 = vunpack.c.h.b16 %v974
    %v1599 = vunpack.c.l.b16 %v975
    %v1600 = vunpack.c.h.b16 %v975
    %v1601 = vunpack.c.l.b16 %v976
    %v1602 = vunpack.c.h.b16 %v976
    %v1603 = vunpack.c.l.b16 %v977
    %v1604 = vunpack.c.h.b16 %v977
    %v1605 = vunpack.c.l.b16 %v978
    %v1606 = vunpack.c.h.b16 %v978
    %v1607 = vunpack.c.l.b16 %v979
    %v1608 = vunpack.c.h.b16 %v979
    %v1609 = vunpack.c.l.b16 %v980
    %v1610 = vunpack.c.h.b16 %v980
    %v1611 = vunpack.c.l.b16 %v981
    %v1612 = vunpack.c.h.b16 %v981
    %v1613 = vunpack.c.l.b16 %v982
    %v1614 = vunpack.c.h.b16 %v982
    %v1615 = vunpack.c.l.b16 %v983
    %v1616 = vunpack.c.h.b16 %v983
    %v1617 = vunpack.c.l.b16 %v984
    %v1618 = vunpack.c.h.b16 %v984
    %v1619 = vunpack.c.l.b16 %v985
    %v1620 = vunpack.c.h.b16 %v985
    %v1621 = vunpack.c.l.b16 %v986
    %v1622 = vunpack.c.h.b16 %v986
    %v1623 = vunpack.c.l.b16 %v987
    %v1624 = vunpack.c.h.b16 %v987
    %v1625 = vunpack.c.l.b16 %v988
    %v1626 = vunpack.c.h.b16 %v988
    %v1627 = vunpack.c.l.b16 %v989
    %v1628 = vunpack.c.h.b16 %v989
    %v1629 = vunpack.c.l.b16 %v990
    %v1630 = vunpack.c.h.b16 %v990
    %v1631 = vunpack.c.l.b16 %v991
    %v1632 = vunpack.c.h.b16 %v991
    %v1633 = vunpack.c.l.b16 %v992
    %v1634 = vunpack.c.h.b16 %v992
    %v1635 = vunpack.c.l.b16 %v993
    %v1636 = vunpack.c.h.b16 %v993
    %v1637 = vunpack.c.l.b16 %v994
    %v1638 = vunpack.c.h.b16 %v994
    %v1639 = vunpack.c.l.b16 %v995
    %v1640 = vunpack.c.h.b16 %v995
    %v1641 = vunpack.c.l.b16 %v996
    %v1642 = vunpack.c.h.b16 %v996
    %v1643 = vunpack.c.l.b16 %v997
    %v1644 = vunpack.c.h.b16 %v997
    %v1645 = vunpack.c.l.b16 %v998
    %v1646 = vunpack.c.h.b16 %v998
    %v1647 = vunpack.c.l.b16 %v999
    %v1648 = vunpack.c.h.b16 %v999
    %v1649 = vunpack.c.l.b16 %v1000
    %v1650 = vunpack.c.h.b16 %v1000
    %v1651 = vunpack.c.l.b16 %v1001
    %v1652 = vunpack.c.h.b16 %v1001
    %v1653 = vunpack.c.l.b16 %v1002
    %v1654 = vunpack.c.h.b16 %v1002
    %v1655 = vunpack.c.l.b16 %v1003
    %v1656 = vunpack.c.h.b16 %v1003
    %v1657 = vunpack.c.l.b16 %v1004
    %v1658 = vunpack.c.h.b16 %v1004
    %v1659 = vunpack.c.l.b16 %v1005
    %v1660 = vunpack.c.h.b16 %v1005
    %v1661 = vunpack.c.l.b16 %v1006
    %v1662 = vunpack.c.h.b16 %v1006
    %v1663 = vunpack.c.l.b16 %v1007
    %v1664 = vunpack.c.h.b16 %v1007
    %v1665 = vunpack.c.l.b16 %v1008
    %v1666 = vunpack.c.h.b16 %v1008
    %v1667 = vunpack.c.l.b16 %v1009
    %v1668 = vunpack.c.h.b16 %v1009
    %v1669 = vunpack.c.l.b16 %v1010
    %v1670 = vunpack.c.h.b16 %v1010
    %v1671 = vunpack.c.l.b16 %v1011
    %v1672 = vunpack.c.h.b16 %v1011
    %v1673 = vunpack.c.l.b16 %v1012
    %v1674 = vunpack.c.h.b16 %v1012
    %v1675 = vunpack.c.l.b16 %v1013
    %v1676 = vunpack.c.h.b16 %v1013
    %v1677 = vunpack.c.l.b16 %v1014
    %v1678 = vunpack.c.h.b16 %v1014
    %v1679 = vunpack.c.l.b16 %v1015
    %v1680 = vunpack.c.h.b16 %v1015
    %v1681 = vunpack.c.l.b16 %v1016
    %v1682 = vunpack.c.h.b16 %v1016
    %v1683 = vunpack.c.l.b16 %v1017
    %v1684 = vunpack.c.h.b16 %v1017
    %v1685 = vunpack.c.l.b16 %v1018
    %v1686 = vunpack.c.h.b16 %v1018
    %v1687 = vunpack.c.l.b16 %v1019
    %v1688 = vunpack.c.h.b16 %v1019
    %v1689 = vunpack.c.l.b16 %v1020
    %v1690 = vunpack.c.h.b16 %v1020
    %v1691 = vunpack.c.l.b16 %v1021
    %v1692 = vunpack.c.h.b16 %v1021
    %v1693 = vunpack.c.l.b16 %v1022
    %v1694 = vunpack.c.h.b16 %v1022
    %v1695 = vunpack.c.l.b16 %v1023
    %v1696 = vunpack.c.h.b16 %v1023
    %v1697 = vunpack.c.l.b16 %v1024
    %v1698 = vunpack.c.h.b16 %v1024
    %v1699 = vunpack.c.l.b16 %v1025
    %v1700 = vunpack.c.h.b16 %v1025
    %v1701 = vunpack.c.l.b16 %v1026
    %v1702 = vunpack.c.h.b16 %v1026
    %v1703 = vunpack.c.l.b16 %v1027
    %v1704 = vunpack.c.h.b16 %v1027
    %v1705 = vunpack.c.l.b16 %v1028
    %v1706 = vunpack.c.h.b16 %v1028
    %v1707 = vunpack.c.l.b16 %v1029
    %v1708 = vunpack.c.h.b16 %v1029
    %v1709 = vunpack.c.l.b16 %v1030
    %v1710 = vunpack.c.h.b16 %v1030
    %v1711 = vunpack.c.l.b16 %v1031
    %v1712 = vunpack.c.h.b16 %v1031
    %v1713 = vunpack.c.l.b16 %v1032
    %v1714 = vunpack.c.h.b16 %v1032
    %v1715 = vunpack.c.l.b16 %v1033
    %v1716 = vunpack.c.h.b16 %v1033
    %v1717 = vunpack.c.l.b16 %v1034
    %v1718 = vunpack.c.h.b16 %v1034
    %v1719 = vunpack.c.l.b16 %v1035
    %v1720 = vunpack.c.h.b16 %v1035
    %v1721 = vunpack.c.l.b16 %v1036
    %v1722 = vunpack.c.h.b16 %v1036
    %v1723 = vunpack.c.l.b16 %v1037
    %v1724 = vunpack.c.h.b16 %v1037
    %v1725 = vunpack.c.l.b16 %v1038
    %v1726 = vunpack.c.h.b16 %v1038
    %v1727 = vunpack.c.l.b16 %v1039
    %v1728 = vunpack.c.h.b16 %v1039
    %v1729 = vunpack.c.l.b16 %v1040
    %v1730 = vunpack.c.h.b16 %v1040
    %v1731 = vunpack.c.l.b16 %v1041
    %v1732 = vunpack.c.h.b16 %v1041
    %v1733 = vunpack.c.l.b16 %v1042
    %v1734 = vunpack.c.h.b16 %v1042
    %v1735 = vunpack.c.l.b16 %v1043
    %v1736 = vunpack.c.h.b16 %v1043
    %v1737 = vunpack.c.l.b16 %v1044
    %v1738 = vunpack.c.h.b16 %v1044
    %v1739 = vunpack.c.l.b16 %v1045
    %v1740 = vunpack.c.h.b16 %v1045
    %v1741 = vunpack.c.l.b16 %v1046
    %v1742 = vunpack.c.h.b16 %v1046
    %v1743 = vunpack.c.l.b16 %v1047
    %v1744 = vunpack.c.h.b16 %v1047
    %v1745 = vunpack.c.l.b16 %v1048
    %v1746 = vunpack.c.h.b16 %v1048
    %v1747 = vunpack.c.l.b16 %v1049
    %v1748 = vunpack.c.h.b16 %v1049
    %v1749 = vunpack.c.l.b16 %v1050
    %v1750 = vunpack.c.h.b16 %v1050
    %v1751 = vunpack.c.l.b16 %v1051
    %v1752 = vunpack.c.h.b16 %v1051
    %v1753 = vunpack.c.l.b16 %v1052
    %v1754 = vunpack.c.h.b16 %v1052
    %v1755 = vunpack.c.l.b16 %v1053
    %v1756 = vunpack.c.h.b16 %v1053
    %v1757 = vunpack.c.l.b16 %v1054
    %v1758 = vunpack.c.h.b16 %v1054
    %v1759 = vunpack.c.l.b16 %v1055
    %v1760 = vunpack.c.h.b16 %v1055
    %v1761 = vunpack.c.l.b16 %v1056
    %v1762 = vunpack.c.h.b16 %v1056
    %v1763 = vunpack.c.l.b16 %v1057
    %v1764 = vunpack.c.h.b16 %v1057
    %v1765 = vunpack.c.l.b16 %v1058
    %v1766 = vunpack.c.h.b16 %v1058
    %v1767 = vunpack.c.l.b16 %v1059
    %v1768 = vunpack.c.h.b16 %v1059
    %v1769 = vunpack.c.l.b16 %v1060
    %v1770 = vunpack.c.h.b16 %v1060
    %v1771 = vunpack.c.l.b16 %v1061
    %v1772 = vunpack.c.h.b16 %v1061
    %v1773 = vunpack.c.l.b16 %v1062
    %v1774 = vunpack.c.h.b16 %v1062
    %v1775 = vunpack.c.l.b16 %v1063
    %v1776 = vunpack.c.h.b16 %v1063
    %v1777 = vunpack.c.l.b16 %v1064
    %v1778 = vunpack.c.h.b16 %v1064
    %v1779 = vunpack.c.l.b16 %v1065
    %v1780 = vunpack.c.h.b16 %v1065
    %v1781 = vunpack.c.l.b16 %v1066
    %v1782 = vunpack.c.h.b16 %v1066
    %v1783 = vunpack.c.l.b16 %v1067
    %v1784 = vunpack.c.h.b16 %v1067
    %v1785 = vunpack.c.l.b16 %v1068
    %v1786 = vunpack.c.h.b16 %v1068
    %v1787 = vunpack.c.l.b16 %v1069
    %v1788 = vunpack.c.h.b16 %v1069
    %v1789 = vunpack.c.l.b16 %v1070
    %v1790 = vunpack.c.h.b16 %v1070
    %v1791 = vunpack.c.l.b16 %v1071
    %v1792 = vunpack.c.h.b16 %v1071
    %v1793 = vunpack.c.l.b16 %v1072
    %v1794 = vunpack.c.h.b16 %v1072
    %v1795 = vunpack.c.l.b16 %v1073
    %v1796 = vunpack.c.h.b16 %v1073
    %v1797 = vunpack.c.l.b16 %v1074
    %v1798 = vunpack.c.h.b16 %v1074
    %v1799 = vunpack.c.l.b16 %v1075
    %v1800 = vunpack.c.h.b16 %v1075
    %v1801 = vunpack.c.l.b16 %v1076
    %v1802 = vunpack.c.h.b16 %v1076
    %v1803 = vunpack.c.l.b16 %v1077
    %v1804 = vunpack.c.h.b16 %v1077
    %v1805 = vunpack.c.l.b16 %v1078
    %v1806 = vunpack.c.h.b16 %v1078
    %v1807 = vunpack.c.l.b16 %v1079
    %v1808 = vunpack.c.h.b16 %v1079
    %v1809 = vunpack.c.l.b16 %v1080
    %v1810 = vunpack.c.h.b16 %v1080
    %v1811 = vunpack.c.l.b16 %v1081
    %v1812 = vunpack.c.h.b16 %v1081
    %v1813 = vunpack.c.l.b16 %v1082
    %v1814 = vunpack.c.h.b16 %v1082
    %v1815 = vunpack.c.l.b16 %v1083
    %v1816 = vunpack.c.h.b16 %v1083
    %v1817 = vunpack.c.l.b16 %v1084
    %v1818 = vunpack.c.h.b16 %v1084
    %v1819 = vunpack.c.l.b16 %v1085
    %v1820 = vunpack.c.h.b16 %v1085
    %v1821 = vunpack.c.l.b16 %v1086
    %v1822 = vunpack.c.h.b16 %v1086
    %v1823 = vunpack.c.l.b16 %v1087
    %v1824 = vunpack.c.h.b16 %v1087
    %v1825 = vunpack.c.l.b16 %v1088
    %v1826 = vunpack.c.h.b16 %v1088
    %v1827 = vunpack.c.l.b16 %v1089
    %v1828 = vunpack.c.h.b16 %v1089
    %v1829 = vunpack.c.l.b16 %v1090
    %v1830 = vunpack.c.h.b16 %v1090
    %v1831 = vunpack.c.l.b16 %v1091
    %v1832 = vunpack.c.h.b16 %v1091
    %v1833 = vunpack.c.l.b16 %v1092
    %v1834 = vunpack.c.h.b16 %v1092
    %v1835 = vunpack.c.l.b16 %v1093
    %v1836 = vunpack.c.h.b16 %v1093
    %v1837 = vunpack.c.l.b16 %v1094
    %v1838 = vunpack.c.h.b16 %v1094
    %v1839 = vunpack.c.l.b16 %v1095
    %v1840 = vunpack.c.h.b16 %v1095
    %v1841 = vunpack.c.l.b16 %v1096
    %v1842 = vunpack.c.h.b16 %v1096
    %v1843 = vunpack.c.l.b16 %v1097
    %v1844 = vunpack.c.h.b16 %v1097
    %v1845 = vunpack.c.l.b16 %v1098
    %v1846 = vunpack.c.h.b16 %v1098
    %v1847 = vunpack.c.l.b16 %v1099
    %v1848 = vunpack.c.h.b16 %v1099
    %v1849 = vunpack.c.l.b16 %v1100
    %v1850 = vunpack.c.h.b16 %v1100
    %v1851 = vunpack.c.l.b16 %v1101
    %v1852 = vunpack.c.h.b16 %v1101
    %v1853 = vunpack.c.l.b16 %v1102
    %v1854 = vunpack.c.h.b16 %v1102
    %v1855 = vunpack.c.l.b16 %v1103
    %v1856 = vunpack.c.h.b16 %v1103
    %v1857 = vunpack.c.l.b16 %v1104
    %v1858 = vunpack.c.h.b16 %v1104
    %v1859 = vunpack.c.l.b16 %v1105
    %v1860 = vunpack.c.h.b16 %v1105
    %v1861 = vunpack.c.l.b16 %v1106
    %v1862 = vunpack.c.h.b16 %v1106
    %v1863 = vunpack.c.l.b16 %v1107
    %v1864 = vunpack.c.h.b16 %v1107
    %v1865 = vunpack.c.l.b16 %v1108
    %v1866 = vunpack.c.h.b16 %v1108
    %v1867 = vunpack.c.l.b16 %v1109
    %v1868 = vunpack.c.h.b16 %v1109
    %v1869 = vunpack.c.l.b16 %v1110
    %v1870 = vunpack.c.h.b16 %v1110
    %v1871 = vunpack.c.l.b16 %v1111
    %v1872 = vunpack.c.h.b16 %v1111
    %v1873 = vunpack.c.l.b16 %v1112
    %v1874 = vunpack.c.h.b16 %v1112
    %v1875 = vunpack.c.l.b16 %v1113
    %v1876 = vunpack.c.h.b16 %v1113
    %v1877 = vunpack.c.l.b16 %v1114
    %v1878 = vunpack.c.h.b16 %v1114
    %v1879 = vunpack.c.l.b16 %v1115
    %v1880 = vunpack.c.h.b16 %v1115
    %v1881 = vunpack.c.l.b16 %v1116
    %v1882 = vunpack.c.h.b16 %v1116
    %v1883 = vunpack.c.l.b16 %v1117
    %v1884 = vunpack.c.h.b16 %v1117
    %v1885 = vunpack.c.l.b16 %v1118
    %v1886 = vunpack.c.h.b16 %v1118
    %v1887 = vunpack.c.l.b16 %v1119
    %v1888 = vunpack.c.h.b16 %v1119
    %v1889 = vunpack.c.l.b16 %v1120
    %v1890 = vunpack.c.h.b16 %v1120
    %v1891 = vunpack.c.l.b16 %v1121
    %v1892 = vunpack.c.h.b16 %v1121
    %v1893 = vunpack.c.l.b16 %v1122
    %v1894 = vunpack.c.h.b16 %v1122
    %v1895 = vunpack.c.l.b16 %v1123
    %v1896 = vunpack.c.h.b16 %v1123
    %v1897 = vunpack.c.l.b16 %v1124
    %v1898 = vunpack.c.h.b16 %v1124
    %v1899 = vunpack.c.l.b16 %v1125
    %v1900 = vunpack.c.h.b16 %v1125
    %v1901 = vunpack.c.l.b16 %v1126
    %v1902 = vunpack.c.h.b16 %v1126
    %v1903 = vunpack.c.l.b16 %v1127
    %v1904 = vunpack.c.h.b16 %v1127
    %v1905 = vunpack.c.l.b16 %v1128
    %v1906 = vunpack.c.h.b16 %v1128
    %v1907 = vunpack.c.l.b16 %v1129
    %v1908 = vunpack.c.h.b16 %v1129
    %v1909 = vunpack.c.l.b16 %v1130
    %v1910 = vunpack.c.h.b16 %v1130
    %v1911 = vunpack.c.l.b16 %v1131
    %v1912 = vunpack.c.h.b16 %v1131
    %v1913 = vunpack.c.l.b16 %v1132
    %v1914 = vunpack.c.h.b16 %v1132
    %v1915 = vunpack.c.l.b16 %v1133
    %v1916 = vunpack.c.h.b16 %v1133
    %v1917 = vunpack.c.l.b16 %v1134
    %v1918 = vunpack.c.h.b16 %v1134
    %v1919 = vunpack.c.l.b16 %v1135
    %v1920 = vunpack.c.h.b16 %v1135
    %v1921 = vunpack.c.l.b16 %v1136
    %v1922 = vunpack.c.h.b16 %v1136
    %v1923 = vunpack.c.l.b16 %v1137
    %v1924 = vunpack.c.h.b16 %v1137
    %v1925 = vunpack.c.l.b16 %v1138
    %v1926 = vunpack.c.h.b16 %v1138
    %v1927 = vunpack.c.l.b16 %v1139
    %v1928 = vunpack.c.h.b16 %v1139
    %v1929 = vunpack.c.l.b16 %v1140
    %v1930 = vunpack.c.h.b16 %v1140
    %v1931 = vunpack.c.l.b16 %v1141
    %v1932 = vunpack.c.h.b16 %v1141
    %v1933 = vunpack.c.l.b16 %v1142
    %v1934 = vunpack.c.h.b16 %v1142
    %v1935 = vunpack.c.l.b16 %v1143
    %v1936 = vunpack.c.h.b16 %v1143
    %v1937 = vunpack.c.l.b16 %v1144
    %v1938 = vunpack.c.h.b16 %v1144
    %v1939 = vunpack.c.l.b16 %v1145
    %v1940 = vunpack.c.h.b16 %v1145
    %v1941 = vunpack.c.l.b16 %v1146
    %v1942 = vunpack.c.h.b16 %v1146
    %v1943 = vunpack.c.l.b16 %v1147
    %v1944 = vunpack.c.h.b16 %v1147
    %v1945 = vunpack.c.l.b16 %v1148
    %v1946 = vunpack.c.h.b16 %v1148
    %v1947 = vunpack.c.l.b16 %v1149
    %v1948 = vunpack.c.h.b16 %v1149
    %v1949 = vunpack.c.l.b16 %v1150
    %v1950 = vunpack.c.h.b16 %v1150
    %v1951 = vunpack.c.l.b16 %v1151
    %v1952 = vunpack.c.h.b16 %v1151
    %v1953 = vunpack.c.l.b16 %v1152
    %v1954 = vunpack.c.h.b16 %v1152
    %v1955 = vunpack.c.l.b16 %v1153
    %v1956 = vunpack.c.h.b16 %v1153
    %v1957 = vunpack.c.l.b16 %v1154
    %v1958 = vunpack.c.h.b16 %v1154
    %v1959 = vunpack.c.l.b16 %v1155
    %v1960 = vunpack.c.h.b16 %v1155
    %v1961 = vunpack.c.l.b16 %v1156
    %v1962 = vunpack.c.h.b16 %v1156
    %v1963 = vunpack.c.l.b16 %v1157
    %v1964 = vunpack.c.h.b16 %v1157
    %v1965 = vunpack.c.l.b16 %v1158
    %v1966 = vunpack.c.h.b16 %v1158
    %v1967 = vunpack.c.l.b16 %v1159
    %v1968 = vunpack.c.h.b16 %v1159
    %v1969 = vunpack.c.l.b16 %v1160
    %v1970 = vunpack.c.h.b16 %v1160
    %v1971 = vpack.c.b16 %v1467, %v1459
    %v1972 = vpack.c.b16 %v1468, %v1460
    %v1973 = vpack.c.b16 %v1469, %v1461
    %v1974 = vpack.c.b16 %v1470, %v1462
    %v1975 = vpack.c.b16 %v1471, %v1463
    %v1976 = vpack.c.b16 %v1472, %v1464
    %v1977 = vpack.c.b16 %v1473, %v1465
    %v1978 = vpack.c.b16 %v1474, %v1466
    %v1979 = vpack.c.b16 %v1483, %v1475
    %v1980 = vpack.c.b16 %v1484, %v1476
    %v1981 = vpack.c.b16 %v1485, %v1477
    %v1982 = vpack.c.b16 %v1486, %v1478
    %v1983 = vpack.c.b16 %v1487, %v1479
    %v1984 = vpack.c.b16 %v1488, %v1480
    %v1985 = vpack.c.b16 %v1489, %v1481
    %v1986 = vpack.c.b16 %v1490, %v1482
    %v1987 = vpack.c.b16 %v1499, %v1491
    %v1988 = vpack.c.b16 %v1500, %v1492
    %v1989 = vpack.c.b16 %v1501, %v1493
    %v1990 = vpack.c.b16 %v1502, %v1494
    %v1991 = vpack.c.b16 %v1503, %v1495
    %v1992 = vpack.c.b16 %v1504, %v1496
    %v1993 = vpack.c.b16 %v1505, %v1497
    %v1994 = vpack.c.b16 %v1506, %v1498
    %v1995 = vpack.c.b16 %v1515, %v1507
    %v1996 = vpack.c.b16 %v1516, %v1508
    %v1997 = vpack.c.b16 %v1517, %v1509
    %v1998 = vpack.c.b16 %v1518, %v1510
    %v1999 = vpack.c.b16 %v1519, %v1511
    %v2000 = vpack.c.b16 %v1520, %v1512
    %v2001 = vpack.c.b16 %v1521, %v1513
    %v2002 = vpack.c.b16 %v1522, %v1514
    %v2003 = vpack.c.b16 %v1531, %v1523
    %v2004 = vpack.c.b16 %v1532, %v1524
    %v2005 = vpack.c.b16 %v1533, %v1525
    %v2006 = vpack.c.b16 %v1534, %v1526
    %v2007 = vpack.c.b16 %v1535, %v1527
    %v2008 = vpack.c.b16 %v1536, %v1528
    %v2009 = vpack.c.b16 %v1537, %v1529
    %v2010 = vpack.c.b16 %v1538, %v1530
    %v2011 = vpack.c.b16 %v1547, %v1539
    %v2012 = vpack.c.b16 %v1548, %v1540
    %v2013 = vpack.c.b16 %v1549, %v1541
    %v2014 = vpack.c.b16 %v1550, %v1542
    %v2015 = vpack.c.b16 %v1551, %v1543
    %v2016 = vpack.c.b16 %v1552, %v1544
    %v2017 = vpack.c.b16 %v1553, %v1545
    %v2018 = vpack.c.b16 %v1554, %v1546
    %v2019 = vpack.c.b16 %v1563, %v1555
    %v2020 = vpack.c.b16 %v1564, %v1556
    %v2021 = vpack.c.b16 %v1565, %v1557
    %v2022 = vpack.c.b16 %v1566, %v1558
    %v2023 = vpack.c.b16 %v1567, %v1559
    %v2024 = vpack.c.b16 %v1568, %v1560
    %v2025 = vpack.c.b16 %v1569, %v1561
    %v2026 = vpack.c.b16 %v1570, %v1562
    %v2027 = vpack.c.b16 %v1579, %v1571
    %v2028 = vpack.c.b16 %v1580, %v1572
    %v2029 = vpack.c.b16 %v1581, %v1573
    %v2030 = vpack.c.b16 %v1582, %v1574
    %v2031 = vpack.c.b16 %v1583, %v1575
    %v2032 = vpack.c.b16 %v1584, %v1576
    %v2033 = vpack.c.b16 %v1585, %v1577
    %v2034 = vpack.c.b16 %v1586, %v1578
    %v2035 = vpack.c.b16 %v1595, %v1587
    %v2036 = vpack.c.b16 %v1596, %v1588
    %v2037 = vpack.c.b16 %v1597, %v1589
    %v2038 = vpack.c.b16 %v1598, %v1590
    %v2039 = vpack.c.b16 %v1599, %v1591
    %v2040 = vpack.c.b16 %v1600, %v1592
    %v2041 = vpack.c.b16 %v1601, %v1593
    %v2042 = vpack.c.b16 %v1602, %v1594
    %v2043 = vpack.c.b16 %v1611, %v1603
    %v2044 = vpack.c.b16 %v1612, %v1604
    %v2045 = vpack.c.b16 %v1613, %v1605
    %v2046 = vpack.c.b16 %v1614, %v1606
    %v2047 = vpack.c.b16 %v1615, %v1607
    %v2048 = vpack.c.b16 %v1616, %v1608
    %v2049 = vpack.c.b16 %v1617, %v1609
    %v2050 = vpack.c.b16 %v1618, %v1610
    %v2051 = vpack.c.b16 %v1627, %v1619
    %v2052 = vpack.c.b16 %v1628, %v1620
    %v2053 = vpack.c.b16 %v1629, %v1621
    %v2054 = vpack.c.b16 %v1630, %v1622
    %v2055 = vpack.c.b16 %v1631, %v1623
    %v2056 = vpack.c.b16 %v1632, %v1624
    %v2057 = vpack.c.b16 %v1633, %v1625
    %v2058 = vpack.c.b16 %v1634, %v1626
    %v2059 = vpack.c.b16 %v1643, %v1635
    %v2060 = vpack.c.b16 %v1644, %v1636
    %v2061 = vpack.c.b16 %v1645, %v1637
    %v2062 = vpack.c.b16 %v1646, %v1638
    %v2063 = vpack.c.b16 %v1647, %v1639
    %v2064 = vpack.c.b16 %v1648, %v1640
    %v2065 = vpack.c.b16 %v1649, %v1641
    %v2066 = vpack.c.b16 %v1650, %v1642
    %v2067 = vpack.c.b16 %v1659, %v1651
    %v2068 = vpack.c.b16 %v1660, %v1652
    %v2069 = vpack.c.b16 %v1661, %v1653
    %v2070 = vpack.c.b16 %v1662, %v1654
    %v2071 = vpack.c.b16 %v1663, %v1655
    %v2072 = vpack.c.b16 %v1664, %v1656
    %v2073 = vpack.c.b16 %v1665, %v1657
    %v2074 = vpack.c.b16 %v1666, %v1658
    %v2075 = vpack.c.b16 %v1675, %v1667
    %v2076 = vpack.c.b16 %v1676, %v1668
    %v2077 = vpack.c.b16 %v1677, %v1669
    %v2078 = vpack.c.b16 %v1678, %v1670
    %v2079 = vpack.c.b16 %v1679, %v1671
    %v2080 = vpack.c.b16 %v1680, %v1672
    %v2081 = vpack.c.b16 %v1681, %v1673
    %v2082 = vpack.c.b16 %v1682, %v1674
    %v2083 = vpack.c.b16 %v1691, %v1683
    %v2084 = vpack.c.b16 %v1692, %v1684
    %v2085 = vpack.c.b16 %v1693, %v1685
    %v2086 = vpack.c.b16 %v1694, %v1686
    %v2087 = vpack.c.b16 %v1695, %v1687
    %v2088 = vpack.c.b16 %v1696, %v1688
    %v2089 = vpack.c.b16 %v1697, %v1689
    %v2090 = vpack.c.b16 %v1698, %v1690
    %v2091 = vpack.c.b16 %v1707, %v1699
    %v2092 = vpack.c.b16 %v1708, %v1700
    %v2093 = vpack.c.b16 %v1709, %v1701
    %v2094 = vpack.c.b16 %v1710, %v1702
    %v2095 = vpack.c.b16 %v1711, %v1703
    %v2096 = vpack.c.b16 %v1712, %v1704
    %v2097 = vpack.c.b16 %v1713, %v1705
    %v2098 = vpack.c.b16 %v1714, %v1706
    %v2099 = vpack.c.b16 %v1723, %v1715
    %v2100 = vpack.c.b16 %v1724, %v1716
    %v2101 = vpack.c.b16 %v1725, %v1717
    %v2102 = vpack.c.b16 %v1726, %v1718
    %v2103 = vpack.c.b16 %v1727, %v1719
    %v2104 = vpack.c.b16 %v1728, %v1720
    %v2105 = vpack.c.b16 %v1729, %v1721
    %v2106 = vpack.c.b16 %v1730, %v1722
    %v2107 = vpack.c.b16 %v1739, %v1731
    %v2108 = vpack.c.b16 %v1740, %v1732
    %v2109 = vpack.c.b16 %v1741, %v1733
    %v2110 = vpack.c.b16 %v1742, %v1734
    %v2111 = vpack.c.b16 %v1743, %v1735
    %v2112 = vpack.c.b16 %v1744, %v1736
    %v2113 = vpack.c.b16 %v1745, %v1737
    %v2114 = vpack.c.b16 %v1746, %v1738
    %v2115 = vpack.c.b16 %v1755, %v1747
    %v2116 = vpack.c.b16 %v1756, %v1748
    %v2117 = vpack.c.b16 %v1757, %v1749
    %v2118 = vpack.c.b16 %v1758, %v1750
    %v2119 = vpack.c.b16 %v1759, %v1751
    %v2120 = vpack.c.b16 %v1760, %v1752
    %v2121 = vpack.c.b16 %v1761, %v1753
    %v2122 = vpack.c.b16 %v1762, %v1754
    %v2123 = vpack.c.b16 %v1771, %v1763
    %v2124 = vpack.c.b16 %v1772, %v1764
    %v2125 = vpack.c.b16 %v1773, %v1765
    %v2126 = vpack.c.b16 %v1774, %v1766
    %v2127 = vpack.c.b16 %v1775, %v1767
    %v2128 = vpack.c.b16 %v1776, %v1768
    %v2129 = vpack.c.b16 %v1777, %v1769
    %v2130 = vpack.c.b16 %v1778, %v1770
    %v2131 = vpack.c.b16 %v1787, %v1779
    %v2132 = vpack.c.b16 %v1788, %v1780
    %v2133 = vpack.c.b16 %v1789, %v1781
    %v2134 = vpack.c.b16 %v1790, %v1782
    %v2135 = vpack.c.b16 %v1791, %v1783
    %v2136 = vpack.c.b16 %v1792, %v1784
    %v2137 = vpack.c.b16 %v1793, %v1785
    %v2138 = vpack.c.b16 %v1794, %v1786
    %v2139 = vpack.c.b16 %v1803, %v1795
    %v2140 = vpack.c.b16 %v1804, %v1796
    %v2141 = vpack.c.b16 %v1805, %v1797
    %v2142 = vpack.c.b16 %v1806, %v1798
    %v2143 = vpack.c.b16 %v1807, %v1799
    %v2144 = vpack.c.b16 %v1808, %v1800
    %v2145 = vpack.c.b16 %v1809, %v1801
    %v2146 = vpack.c.b16 %v1810, %v1802
    %v2147 = vpack.c.b16 %v1819, %v1811
    %v2148 = vpack.c.b16 %v1820, %v1812
    %v2149 = vpack.c.b16 %v1821, %v1813
    %v2150 = vpack.c.b16 %v1822, %v1814
    %v2151 = vpack.c.b16 %v1823, %v1815
    %v2152 = vpack.c.b16 %v1824, %v1816
    %v2153 = vpack.c.b16 %v1825, %v1817
    %v2154 = vpack.c.b16 %v1826, %v1818
    %v2155 = vpack.c.b16 %v1835, %v1827
    %v2156 = vpack.c.b16 %v1836, %v1828
    %v2157 = vpack.c.b16 %v1837, %v1829
    %v2158 = vpack.c.b16 %v1838, %v1830
    %v2159 = vpack.c.b16 %v1839, %v1831
    %v2160 = vpack.c.b16 %v1840, %v1832
    %v2161 = vpack.c.b16 %v1841, %v1833
    %v2162 = vpack.c.b16 %v1842, %v1834
    %v2163 = vpack.c.b16 %v1851, %v1843
    %v2164 = vpack.c.b16 %v1852, %v1844
    %v2165 = vpack.c.b16 %v1853, %v1845
    %v2166 = vpack.c.b16 %v1854, %v1846
    %v2167 = vpack.c.b16 %v1855, %v1847
    %v2168 = vpack.c.b16 %v1856, %v1848
    %v2169 = vpack.c.b16 %v1857, %v1849
    %v2170 = vpack.c.b16 %v1858, %v1850
    %v2171 = vpack.c.b16 %v1867, %v1859
    %v2172 = vpack.c.b16 %v1868, %v1860
    %v2173 = vpack.c.b16 %v1869, %v1861
    %v2174 = vpack.c.b16 %v1870, %v1862
    %v2175 = vpack.c.b16 %v1871, %v1863
    %v2176 = vpack.c.b16 %v1872, %v1864
    %v2177 = vpack.c.b16 %v1873, %v1865
    %v2178 = vpack.c.b16 %v1874, %v1866
    %v2179 = vpack.c.b16 %v1883, %v1875
    %v2180 = vpack.c.b16 %v1884, %v1876
    %v2181 = vpack.c.b16 %v1885, %v1877
    %v2182 = vpack.c.b16 %v1886, %v1878
    %v2183 = vpack.c.b16 %v1887, %v1879
    %v2184 = vpack.c.b16 %v1888, %v1880
    %v2185 = vpack.c.b16 %v1889, %v1881
    %v2186 = vpack.c.b16 %v1890, %v1882
    %v2187 = vpack.c.b16 %v1899, %v1891
    %v2188 = vpack.c.b16 %v1900, %v1892
    %v2189 = vpack.c.b16 %v1901, %v1893
    %v2190 = vpack.c.b16 %v1902, %v1894
    %v2191 = vpack.c.b16 %v1903, %v1895
    %v2192 = vpack.c.b16 %v1904, %v1896
    %v2193 = vpack.c.b16 %v1905, %v1897
    %v2194 = vpack.c.b16 %v1906, %v1898
    %v2195 = vpack.c.b16 %v1915, %v1907
    %v2196 = vpack.c.b16 %v1916, %v1908
    %v2197 = vpack.c.b16 %v1917, %v1909
    %v2198 = vpack.c.b16 %v1918, %v1910
    %v2199 = vpack.c.b16 %v1919, %v1911
    %v2200 = vpack.c.b16 %v1920, %v1912
    %v2201 = vpack.c.b16 %v1921, %v1913
    %v2202 = vpack.c.b16 %v1922, %v1914
    %v2203 = vpack.c.b16 %v1931, %v1923
    %v2204 = vpack.c.b16 %v1932, %v1924
    %v2205 = vpack.c.b16 %v1933, %v1925
    %v2206 = vpack.c.b16 %v1934, %v1926
    %v2207 = vpack.c.b16 %v1935, %v1927
    %v2208 = vpack.c.b16 %v1936, %v1928
    %v2209 = vpack.c.b16 %v1937, %v1929
    %v2210 = vpack.c.b16 %v1938, %v1930
    %v2211 = vpack.c.b16 %v1947, %v1939
    %v2212 = vpack.c.b16 %v1948, %v1940
    %v2213 = vpack.c.b16 %v1949, %v1941
    %v2214 = vpack.c.b16 %v1950, %v1942
    %v2215 = vpack.c.b16 %v1951, %v1943
    %v2216 = vpack.c.b16 %v1952, %v1944
    %v2217 = vpack.c.b16 %v1953, %v1945
    %v2218 = vpack.c.b16 %v1954, %v1946
    %v2219 = vpack.c.b16 %v1963, %v1955
    %v2220 = vpack.c.b16 %v1964, %v1956
    %v2221 = vpack.c.b16 %v1965, %v1957
    %v2222 = vpack.c.b16 %v1966, %v1958
    %v2223 = vpack.c.b16 %v1967, %v1959
    %v2224 = vpack.c.b16 %v1968, %v1960
    %v2225 = vpack.c.b16 %v1969, %v1961
    %v2226 = vpack.c.b16 %v1970, %v1962
    %2483 = vmatprep.subr.bf16.mxu0 %v1972
    %2484 = vmatpush1.bf16.msra.mxu0 %v1971
    %2485 = vmatprep.subr.bf16.mxu0 %v1980
    %2486 = vmatpush1.bf16.msra.mxu0 %v1979
    %2487 = vmatprep.subr.bf16.mxu0 %v1988
    %2488 = vmatpush1.bf16.msra.mxu0 %v1987
    %2489 = vmatprep.subr.bf16.mxu0 %v1996
    %2490 = vmatpush1.bf16.msra.mxu0 %v1995
    %2491 = vmatprep.subr.bf16.mxu0 %v2004
    %2492 = vmatpush1.bf16.msra.mxu0 %v2003
    %2493 = vmatprep.subr.bf16.mxu0 %v2012
    %2494 = vmatpush1.bf16.msra.mxu0 %v2011
    %2495 = vmatprep.subr.bf16.mxu0 %v2020
    %2496 = vmatpush1.bf16.msra.mxu0 %v2019
    %2497 = vmatprep.subr.bf16.mxu0 %v2028
    %2498 = vmatpush1.bf16.msra.mxu0 %v2027
    %2499 = vmatprep.subr.bf16.mxu0 %v2036
    %2500 = vmatpush1.bf16.msra.mxu0 %v2035
    %2501 = vmatprep.subr.bf16.mxu0 %v2044
    %2502 = vmatpush1.bf16.msra.mxu0 %v2043
    %2503 = vmatprep.subr.bf16.mxu0 %v2052
    %2504 = vmatpush1.bf16.msra.mxu0 %v2051
    %2505 = vmatprep.subr.bf16.mxu0 %v2060
    %2506 = vmatpush1.bf16.msra.mxu0 %v2059
    %2507 = vmatprep.subr.bf16.mxu0 %v2068
    %2508 = vmatpush1.bf16.msra.mxu0 %v2067
    %2509 = vmatprep.subr.bf16.mxu0 %v2076
    %2510 = vmatpush1.bf16.msra.mxu0 %v2075
    %2511 = vmatprep.subr.bf16.mxu0 %v2084
    %2512 = vmatpush1.bf16.msra.mxu0 %v2083
    %2513 = vmatprep.subr.bf16.mxu0 %v2092
    %2514 = vmatpush1.bf16.msra.mxu0 %v2091
    %2515 = vmatprep.mubr.bf16.mxu0 %v902
    %2516 = vmatmul.mubr.bf16.gmra.mrb[0].mxu0 %v901
    %v2517 = vpop.f32.mrb[0].mxu0
    %v2518 = vadd.f32 %v1166, %v2517
    %v2519 = vpop.f32.mrb[0].mxu0
    %v2520 = vadd.f32 %v1170, %v2519
    %v2521 = vpop.f32.mrb[0].mxu0
    %v2522 = vpop.f32.mrb[0].mxu0
    %2523 = vdwg.mxu0
    %2524 = vmatprep.subr.bf16.mxu0 %v2100
    %2525 = vmatpush1.bf16.msra.mxu0 %v2099
    %2526 = vmatprep.subr.bf16.mxu0 %v2108
    %2527 = vmatpush1.bf16.msra.mxu0 %v2107
    %2528 = vmatprep.subr.bf16.mxu0 %v2116
    %2529 = vmatpush1.bf16.msra.mxu0 %v2115
    %2530 = vmatprep.subr.bf16.mxu0 %v2124
    %2531 = vmatpush1.bf16.msra.mxu0 %v2123
    %2532 = vmatprep.subr.bf16.mxu0 %v2132
    %2533 = vmatpush1.bf16.msra.mxu0 %v2131
    %2534 = vmatprep.subr.bf16.mxu0 %v2140
    %2535 = vmatpush1.bf16.msra.mxu0 %v2139
    %2536 = vmatprep.subr.bf16.mxu0 %v2148
    %2537 = vmatpush1.bf16.msra.mxu0 %v2147
    %2538 = vmatprep.subr.bf16.mxu0 %v2156
    %2539 = vmatpush1.bf16.msra.mxu0 %v2155
    %2540 = vmatprep.subr.bf16.mxu0 %v2164
    %2541 = vmatpush1.bf16.msra.mxu0 %v2163
    %2542 = vmatprep.subr.bf16.mxu0 %v2172
    %2543 = vmatpush1.bf16.msra.mxu0 %v2171
    %2544 = vmatprep.subr.bf16.mxu0 %v2180
    %2545 = vmatpush1.bf16.msra.mxu0 %v2179
    %2546 = vmatprep.subr.bf16.mxu0 %v2188
    %2547 = vmatpush1.bf16.msra.mxu0 %v2187
    %2548 = vmatprep.subr.bf16.mxu0 %v2196
    %2549 = vmatpush1.bf16.msra.mxu0 %v2195
    %2550 = vmatprep.subr.bf16.mxu0 %v2204
    %2551 = vmatpush1.bf16.msra.mxu0 %v2203
    %2552 = vmatprep.subr.bf16.mxu0 %v2212
    %2553 = vmatpush1.bf16.msra.mxu0 %v2211
    %2554 = vmatprep.subr.bf16.mxu0 %v2220
    %2555 = vmatpush1.bf16.msra.mxu0 %v2219
    %2556 = vmatprep.mubr.bf16.mxu0 %v904
    %2557 = vmatmul.mubr.bf16.gmra.mrb[0].mxu0 %v903
    %v2558 = vpop.f32.mrb[0].mxu0
    %v2559 = vadd.f32 %v2518, %v2558
    %v2560 = vpop.f32.mrb[0].mxu0
    %v2561 = vadd.f32 %v2520, %v2560
    %v2562 = vpop.f32.mrb[0].mxu0
    %v2563 = vpop.f32.mrb[0].mxu0
    %2564 = vdwg.mxu0
    %2565 = vmatprep.subr.bf16.mxu0 %v1974
    %2566 = vmatpush1.bf16.msra.mxu0 %v1973
    %2567 = vmatprep.subr.bf16.mxu0 %v1982
    %2568 = vmatpush1.bf16.msra.mxu0 %v1981
    %2569 = vmatprep.subr.bf16.mxu0 %v1990
    %2570 = vmatpush1.bf16.msra.mxu0 %v1989
    %2571 = vmatprep.subr.bf16.mxu0 %v1998
    %2572 = vmatpush1.bf16.msra.mxu0 %v1997
    %2573 = vmatprep.subr.bf16.mxu0 %v2006
    %2574 = vmatpush1.bf16.msra.mxu0 %v2005
    %2575 = vmatprep.subr.bf16.mxu0 %v2014
    %2576 = vmatpush1.bf16.msra.mxu0 %v2013
    %2577 = vmatprep.subr.bf16.mxu0 %v2022
    %2578 = vmatpush1.bf16.msra.mxu0 %v2021
    %2579 = vmatprep.subr.bf16.mxu0 %v2030
    %2580 = vmatpush1.bf16.msra.mxu0 %v2029
    %2581 = vmatprep.subr.bf16.mxu0 %v2038
    %2582 = vmatpush1.bf16.msra.mxu0 %v2037
    %2583 = vmatprep.subr.bf16.mxu0 %v2046
    %2584 = vmatpush1.bf16.msra.mxu0 %v2045
    %2585 = vmatprep.subr.bf16.mxu0 %v2054
    %2586 = vmatpush1.bf16.msra.mxu0 %v2053
    %2587 = vmatprep.subr.bf16.mxu0 %v2062
    %2588 = vmatpush1.bf16.msra.mxu0 %v2061
    %2589 = vmatprep.subr.bf16.mxu0 %v2070
    %2590 = vmatpush1.bf16.msra.mxu0 %v2069
    %2591 = vmatprep.subr.bf16.mxu0 %v2078
    %2592 = vmatpush1.bf16.msra.mxu0 %v2077
    %2593 = vmatprep.subr.bf16.mxu0 %v2086
    %2594 = vmatpush1.bf16.msra.mxu0 %v2085
    %2595 = vmatprep.subr.bf16.mxu0 %v2094
    %2596 = vmatpush1.bf16.msra.mxu0 %v2093
    %2597 = vmatprep.mubr.bf16.mxu0 %v902
    %2598 = vmatmul.mubr.bf16.gmra.mrb[0].mxu0 %v901
    %v2599 = vpop.f32.mrb[0].mxu0
    %v2600 = vadd.f32 %v1174, %v2599
    %v2601 = vpop.f32.mrb[0].mxu0
    %v2602 = vadd.f32 %v1178, %v2601
    %v2603 = vpop.f32.mrb[0].mxu0
    %v2604 = vpop.f32.mrb[0].mxu0
    %2605 = vdwg.mxu0
    %2606 = vmatprep.subr.bf16.mxu0 %v2102
    %2607 = vmatpush1.bf16.msra.mxu0 %v2101
    %2608 = vmatprep.subr.bf16.mxu0 %v2110
    %2609 = vmatpush1.bf16.msra.mxu0 %v2109
    %2610 = vmatprep.subr.bf16.mxu0 %v2118
    %2611 = vmatpush1.bf16.msra.mxu0 %v2117
    %2612 = vmatprep.subr.bf16.mxu0 %v2126
    %2613 = vmatpush1.bf16.msra.mxu0 %v2125
    %2614 = vmatprep.subr.bf16.mxu0 %v2134
    %2615 = vmatpush1.bf16.msra.mxu0 %v2133
    %2616 = vmatprep.subr.bf16.mxu0 %v2142
    %2617 = vmatpush1.bf16.msra.mxu0 %v2141
    %2618 = vmatprep.subr.bf16.mxu0 %v2150
    %2619 = vmatpush1.bf16.msra.mxu0 %v2149
    %2620 = vmatprep.subr.bf16.mxu0 %v2158
    %2621 = vmatpush1.bf16.msra.mxu0 %v2157
    %2622 = vmatprep.subr.bf16.mxu0 %v2166
    %2623 = vmatpush1.bf16.msra.mxu0 %v2165
    %2624 = vmatprep.subr.bf16.mxu0 %v2174
    %2625 = vmatpush1.bf16.msra.mxu0 %v2173
    %2626 = vmatprep.subr.bf16.mxu0 %v2182
    %2627 = vmatpush1.bf16.msra.mxu0 %v2181
    %2628 = vmatprep.subr.bf16.mxu0 %v2190
    %2629 = vmatpush1.bf16.msra.mxu0 %v2189
    %2630 = vmatprep.subr.bf16.mxu0 %v2198
    %2631 = vmatpush1.bf16.msra.mxu0 %v2197
    %2632 = vmatprep.subr.bf16.mxu0 %v2206
    %2633 = vmatpush1.bf16.msra.mxu0 %v2205
    %2634 = vmatprep.subr.bf16.mxu0 %v2214
    %2635 = vmatpush1.bf16.msra.mxu0 %v2213
    %2636 = vmatprep.subr.bf16.mxu0 %v2222
    %2637 = vmatpush1.bf16.msra.mxu0 %v2221
    %2638 = vmatprep.mubr.bf16.mxu0 %v904
    %2639 = vmatmul.mubr.bf16.gmra.mrb[0].mxu0 %v903
    %v2640 = vpop.f32.mrb[0].mxu0
    %v2641 = vadd.f32 %v2600, %v2640
    %v2642 = vpop.f32.mrb[0].mxu0
    %v2643 = vadd.f32 %v2602, %v2642
    %v2644 = vpop.f32.mrb[0].mxu0
    %v2645 = vpop.f32.mrb[0].mxu0
    %2646 = vdwg.mxu0
    %2647 = vmatprep.subr.bf16.mxu0 %v1976
    %2648 = vmatpush1.bf16.msra.mxu0 %v1975
    %2649 = vmatprep.subr.bf16.mxu0 %v1984
    %2650 = vmatpush1.bf16.msra.mxu0 %v1983
    %2651 = vmatprep.subr.bf16.mxu0 %v1992
    %2652 = vmatpush1.bf16.msra.mxu0 %v1991
    %2653 = vmatprep.subr.bf16.mxu0 %v2000
    %2654 = vmatpush1.bf16.msra.mxu0 %v1999
    %2655 = vmatprep.subr.bf16.mxu0 %v2008
    %2656 = vmatpush1.bf16.msra.mxu0 %v2007
    %2657 = vmatprep.subr.bf16.mxu0 %v2016
    %2658 = vmatpush1.bf16.msra.mxu0 %v2015
    %2659 = vmatprep.subr.bf16.mxu0 %v2024
    %2660 = vmatpush1.bf16.msra.mxu0 %v2023
    %2661 = vmatprep.subr.bf16.mxu0 %v2032
    %2662 = vmatpush1.bf16.msra.mxu0 %v2031
    %2663 = vmatprep.subr.bf16.mxu0 %v2040
    %2664 = vmatpush1.bf16.msra.mxu0 %v2039
    %2665 = vmatprep.subr.bf16.mxu0 %v2048
    %2666 = vmatpush1.bf16.msra.mxu0 %v2047
    %2667 = vmatprep.subr.bf16.mxu0 %v2056
    %2668 = vmatpush1.bf16.msra.mxu0 %v2055
    %2669 = vmatprep.subr.bf16.mxu0 %v2064
    %2670 = vmatpush1.bf16.msra.mxu0 %v2063
    %2671 = vmatprep.subr.bf16.mxu0 %v2072
    %2672 = vmatpush1.bf16.msra.mxu0 %v2071
    %2673 = vmatprep.subr.bf16.mxu0 %v2080
    %2674 = vmatpush1.bf16.msra.mxu0 %v2079
    %2675 = vmatprep.subr.bf16.mxu0 %v2088
    %2676 = vmatpush1.bf16.msra.mxu0 %v2087
    %2677 = vmatprep.subr.bf16.mxu0 %v2096
    %2678 = vmatpush1.bf16.msra.mxu0 %v2095
    %2679 = vmatprep.mubr.bf16.mxu0 %v902
    %2680 = vmatmul.mubr.bf16.gmra.mrb[0].mxu0 %v901
    %v2681 = vpop.f32.mrb[0].mxu0
    %v2682 = vadd.f32 %v1182, %v2681
    %v2683 = vpop.f32.mrb[0].mxu0
    %v2684 = vadd.f32 %v1186, %v2683
    %v2685 = vpop.f32.mrb[0].mxu0
    %v2686 = vpop.f32.mrb[0].mxu0
    %2687 = vdwg.mxu0
    %2688 = vmatprep.subr.bf16.mxu0 %v2104
    %2689 = vmatpush1.bf16.msra.mxu0 %v2103
    %2690 = vmatprep.subr.bf16.mxu0 %v2112
    %2691 = vmatpush1.bf16.msra.mxu0 %v2111
    %2692 = vmatprep.subr.bf16.mxu0 %v2120
    %2693 = vmatpush1.bf16.msra.mxu0 %v2119
    %2694 = vmatprep.subr.bf16.mxu0 %v2128
    %2695 = vmatpush1.bf16.msra.mxu0 %v2127
    %2696 = vmatprep.subr.bf16.mxu0 %v2136
    %2697 = vmatpush1.bf16.msra.mxu0 %v2135
    %2698 = vmatprep.subr.bf16.mxu0 %v2144
    %2699 = vmatpush1.bf16.msra.mxu0 %v2143
    %2700 = vmatprep.subr.bf16.mxu0 %v2152
    %2701 = vmatpush1.bf16.msra.mxu0 %v2151
    %2702 = vmatprep.subr.bf16.mxu0 %v2160
    %2703 = vmatpush1.bf16.msra.mxu0 %v2159
    %2704 = vmatprep.subr.bf16.mxu0 %v2168
    %2705 = vmatpush1.bf16.msra.mxu0 %v2167
    %2706 = vmatprep.subr.bf16.mxu0 %v2176
    %2707 = vmatpush1.bf16.msra.mxu0 %v2175
    %2708 = vmatprep.subr.bf16.mxu0 %v2184
    %2709 = vmatpush1.bf16.msra.mxu0 %v2183
    %2710 = vmatprep.subr.bf16.mxu0 %v2192
    %2711 = vmatpush1.bf16.msra.mxu0 %v2191
    %2712 = vmatprep.subr.bf16.mxu0 %v2200
    %2713 = vmatpush1.bf16.msra.mxu0 %v2199
    %2714 = vmatprep.subr.bf16.mxu0 %v2208
    %2715 = vmatpush1.bf16.msra.mxu0 %v2207
    %2716 = vmatprep.subr.bf16.mxu0 %v2216
    %2717 = vmatpush1.bf16.msra.mxu0 %v2215
    %2718 = vmatprep.subr.bf16.mxu0 %v2224
    %2719 = vmatpush1.bf16.msra.mxu0 %v2223
    %2720 = vmatprep.mubr.bf16.mxu0 %v904
    %2721 = vmatmul.mubr.bf16.gmra.mrb[0].mxu0 %v903
    %v2722 = vpop.f32.mrb[0].mxu0
    %v2723 = vadd.f32 %v2682, %v2722
    %v2724 = vpop.f32.mrb[0].mxu0
    %v2725 = vadd.f32 %v2684, %v2724
    %v2726 = vpop.f32.mrb[0].mxu0
    %v2727 = vpop.f32.mrb[0].mxu0
    %2728 = vdwg.mxu0
    %2729 = vmatprep.subr.bf16.mxu0 %v1978
    %2730 = vmatpush1.bf16.msra.mxu0 %v1977
    %2731 = vmatprep.subr.bf16.mxu0 %v1986
    %2732 = vmatpush1.bf16.msra.mxu0 %v1985
    %2733 = vmatprep.subr.bf16.mxu0 %v1994
    %2734 = vmatpush1.bf16.msra.mxu0 %v1993
    %2735 = vmatprep.subr.bf16.mxu0 %v2002
    %2736 = vmatpush1.bf16.msra.mxu0 %v2001
    %2737 = vmatprep.subr.bf16.mxu0 %v2010
    %2738 = vmatpush1.bf16.msra.mxu0 %v2009
    %2739 = vmatprep.subr.bf16.mxu0 %v2018
    %2740 = vmatpush1.bf16.msra.mxu0 %v2017
    %2741 = vmatprep.subr.bf16.mxu0 %v2026
    %2742 = vmatpush1.bf16.msra.mxu0 %v2025
    %2743 = vmatprep.subr.bf16.mxu0 %v2034
    %2744 = vmatpush1.bf16.msra.mxu0 %v2033
    %2745 = vmatprep.subr.bf16.mxu0 %v2042
    %2746 = vmatpush1.bf16.msra.mxu0 %v2041
    %2747 = vmatprep.subr.bf16.mxu0 %v2050
    %2748 = vmatpush1.bf16.msra.mxu0 %v2049
    %2749 = vmatprep.subr.bf16.mxu0 %v2058
    %2750 = vmatpush1.bf16.msra.mxu0 %v2057
    %2751 = vmatprep.subr.bf16.mxu0 %v2066
    %2752 = vmatpush1.bf16.msra.mxu0 %v2065
    %2753 = vmatprep.subr.bf16.mxu0 %v2074
    %2754 = vmatpush1.bf16.msra.mxu0 %v2073
    %2755 = vmatprep.subr.bf16.mxu0 %v2082
    %2756 = vmatpush1.bf16.msra.mxu0 %v2081
    %2757 = vmatprep.subr.bf16.mxu0 %v2090
    %2758 = vmatpush1.bf16.msra.mxu0 %v2089
    %2759 = vmatprep.subr.bf16.mxu0 %v2098
    %2760 = vmatpush1.bf16.msra.mxu0 %v2097
    %2761 = vmatprep.mubr.bf16.mxu0 %v902
    %2762 = vmatmul.mubr.bf16.gmra.mrb[0].mxu0 %v901
    %v2763 = vpop.f32.mrb[0].mxu0
    %v2764 = vadd.f32 %v1190, %v2763
    %v2765 = vpop.f32.mrb[0].mxu0
    %v2766 = vadd.f32 %v1194, %v2765
    %v2767 = vpop.f32.mrb[0].mxu0
    %v2768 = vpop.f32.mrb[0].mxu0
    %2769 = vdwg.mxu0
    %2770 = vmatprep.subr.bf16.mxu0 %v2106
    %2771 = vmatpush1.bf16.msra.mxu0 %v2105
    %2772 = vmatprep.subr.bf16.mxu0 %v2114
    %2773 = vmatpush1.bf16.msra.mxu0 %v2113
    %2774 = vmatprep.subr.bf16.mxu0 %v2122
    %2775 = vmatpush1.bf16.msra.mxu0 %v2121
    %2776 = vmatprep.subr.bf16.mxu0 %v2130
    %2777 = vmatpush1.bf16.msra.mxu0 %v2129
    %2778 = vmatprep.subr.bf16.mxu0 %v2138
    %2779 = vmatpush1.bf16.msra.mxu0 %v2137
    %2780 = vmatprep.subr.bf16.mxu0 %v2146
    %2781 = vmatpush1.bf16.msra.mxu0 %v2145
    %2782 = vmatprep.subr.bf16.mxu0 %v2154
    %2783 = vmatpush1.bf16.msra.mxu0 %v2153
    %2784 = vmatprep.subr.bf16.mxu0 %v2162
    %2785 = vmatpush1.bf16.msra.mxu0 %v2161
    %2786 = vmatprep.subr.bf16.mxu0 %v2170
    %2787 = vmatpush1.bf16.msra.mxu0 %v2169
    %2788 = vmatprep.subr.bf16.mxu0 %v2178
    %2789 = vmatpush1.bf16.msra.mxu0 %v2177
    %2790 = vmatprep.subr.bf16.mxu0 %v2186
    %2791 = vmatpush1.bf16.msra.mxu0 %v2185
    %2792 = vmatprep.subr.bf16.mxu0 %v2194
    %2793 = vmatpush1.bf16.msra.mxu0 %v2193
    %2794 = vmatprep.subr.bf16.mxu0 %v2202
    %2795 = vmatpush1.bf16.msra.mxu0 %v2201
    %2796 = vmatprep.subr.bf16.mxu0 %v2210
    %2797 = vmatpush1.bf16.msra.mxu0 %v2209
    %2798 = vmatprep.subr.bf16.mxu0 %v2218
    %2799 = vmatpush1.bf16.msra.mxu0 %v2217
    %2800 = vmatprep.subr.bf16.mxu0 %v2226
    %2801 = vmatpush1.bf16.msra.mxu0 %v2225
    %2802 = vmatprep.mubr.bf16.mxu0 %v904
    %2803 = vmatmul.mubr.bf16.gmra.mrb[0].mxu0 %v903
    %v2804 = vpop.f32.mrb[0].mxu0
    %v2805 = vadd.f32 %v2764, %v2804
    %v2806 = vpop.f32.mrb[0].mxu0
    %v2807 = vadd.f32 %v2766, %v2806
    %v2808 = vpop.f32.mrb[0].mxu0
    %v2809 = vpop.f32.mrb[0].mxu0
    %2810 = vdwg.mxu0
    %v2811 = vmax.f32 %v2559, 0.0
    %v2812 = vmax.f32 %v2561, 0.0
    %v2813 = vmax.f32 %v2641, 0.0
    %v2814 = vmax.f32 %v2643, 0.0
    %v2815 = vmax.f32 %v2723, 0.0
    %v2816 = vmax.f32 %v2725, 0.0
    %v2817 = vmax.f32 %v2805, 0.0
    %v2818 = vmax.f32 %v2807, 0.0
    %v2819 = vpack.c.bf16 %v2811, %v2811
    %v2820 = vpack.c.bf16 %v2812, %v2812
    %v2821 = vpack.c.bf16 %v2813, %v2813
    %v2822 = vpack.c.bf16 %v2814, %v2814
    %v2823 = vpack.c.bf16 %v2815, %v2815
    %v2824 = vpack.c.bf16 %v2816, %v2816
    %v2825 = vpack.c.bf16 %v2817, %v2817
    %v2826 = vpack.c.bf16 %v2818, %v2818
    %v2835 = vcombine.low %v2819, %v2820
    %v2836 = vcombine.low %v2821, %v2822
    %v2837 = vcombine.low %v2823, %v2824
    %v2838 = vcombine.low %v2825, %v2826
    %v2840 = vunpack.c.l.s4 1966171168
    %v2841 = vunpack.c.0.s8 %v2840
    %v2842 = vlaneseq
    %v2843 = vshrl.u32 %v2842, 7
    %v2844 = vsub.s32 %v2841, %v2843
    %v2845 = vrot.slane %v2835, %v2844
    %v2847 = vunpack.c.l.s4 1966171168
    %v2848 = vunpack.c.0.s8 %v2847
    %v2849 = vlaneseq
    %v2850 = vshrl.u32 %v2849, 7
    %v2851 = vsub.s32 %v2848, %v2850
    %v2852 = vrot.slane %v2836, %v2851
    %v2854 = vunpack.c.l.s4 1966171168
    %v2855 = vunpack.c.0.s8 %v2854
    %v2856 = vlaneseq
    %v2857 = vshrl.u32 %v2856, 7
    %v2858 = vsub.s32 %v2855, %v2857
    %v2859 = vrot.slane %v2837, %v2858
    %v2861 = vunpack.c.l.s4 1966171168
    %v2862 = vunpack.c.0.s8 %v2861
    %v2863 = vlaneseq
    %v2864 = vshrl.u32 %v2863, 7
    %v2865 = vsub.s32 %v2862, %v2864
    %v2866 = vrot.slane %v2838, %v2865
    %v2867 = vcombine.low %v2845, %v2852
    %v2868 = vcombine.low %v2859, %v2866
    %v2870 = vunpack.c.l.s4 1966171168
    %v2871 = vunpack.c.0.s8 %v2870
    %v2872 = vlaneseq
    %v2873 = vshrl.u32 %v2872, 7
    %v2874 = vsub.s32 %v2871, %v2873
    %v2875 = vrot.slane %v2867, %v2874
    %v2877 = vunpack.c.l.s4 1966171168
    %v2878 = vunpack.c.0.s8 %v2877
    %v2879 = vlaneseq
    %v2880 = vshrl.u32 %v2879, 7
    %v2881 = vsub.s32 %v2878, %v2880
    %v2882 = vrot.slane %v2868, %v2881
    %v2883 = vcombine.low %v2875, %v2882
    %2885 = vst [vmem:[%s9] sm:$0xff] %v2883
    // Predicated region
    $region74: #{point_decoder_forward.2} parent=1 // pred_check
      _
    $region75: #{point_decoder_forward.2} parent=1 // pred_check_branch
      %2887 = sbr.rel (0) target = $region77
    $region76: #{point_decoder_forward.2} parent=1 // pred_region
      _
    $region77: #{point_decoder_forward.2} parent=1 // pred_fallthru
      _
    // Predicated region
    $region78: #{point_decoder_forward.2} parent=1 // pred_check
      _
    $region79: #{point_decoder_forward.2} parent=1 // pred_check_branch
      %2889 = sbr.rel (0) target = $region81
    $region80: #{point_decoder_forward.2} parent=1 // pred_region
      _
    $region81: #{point_decoder_forward.2} parent=1 // pred_fallthru
      _
    %2890 = vsyncpa [#allocation3], 1
    %2891 = vsyncpa [#allocation5], 1
    %2892 = vsyncpa [#allocation8], 1
    %2893 = vsyncpa [#allocation11], 1
    %2894 = vsyncpa [#allocation14], 1

</llo_original>
